<compile_context>
chip_gen: v7x
topology: tpu7x:2x2x1
jax: 0.10.0
libtpu: 0.0.40
codegen_flags: <defaults>
</compile_context>

<pallas_src>
import functools

import jax
import jax.numpy as jnp
from jax import lax
from jax.experimental import pallas as pl
from jax.experimental.pallas import tpu as pltpu

EPS = 1e-5


# ----------------------------------------------------------------------------
# Fused (MaxPool +) DoubleConv Pallas kernel
# ----------------------------------------------------------------------------
def _double_conv_kernel(x_ref, w1_ref, w2_ref, shift1_ref, scb_ref, out_ref,
                        xpad, tpad, *, H, W, Cin, Cout, bsz, pool):
    P = H + 2                       # per-image padded row stride
    R = bsz * P                     # padded slab rows
    Win = 2 * W if pool else W      # lane-layout pixel width of the stage input
    WCl = Win * Cin                 # input slab lane width
    WCo = W * Cout                  # output slab lane width

    # ---- stage input rows, lane-dense (bsz*H, Win*Cin); fused 2x2 max-pool --
    if pool:
        xe = x_ref[pl.ds(0, bsz * H, stride=2), :]      # even image rows
        xo = x_ref[pl.ds(1, bsz * H, stride=2), :]      # odd image rows
        xv = jnp.maximum(xe, xo)                        # row max
        # column max: shift left by one pixel (Cin lanes) and max; the pooled
        # pixel w now lives at lane block 2w, odd blocks hold junk that the
        # banded weights multiply by zero (so no lane compaction is needed).
        xsh = jnp.concatenate([xv[:, Cin:], xv[:, :Cin]], axis=1)
        xin = jnp.maximum(xv, xsh)
    else:
        xin = x_ref[...]                                # (bsz*H, W*Cin)

    # ---- per-image zero-row-padded slabs (pad rows re-zeroed every step) ----
    for n in range(bsz):
        base = n * P
        xpad[base:base + 1, :] = jnp.zeros((1, WCl), jnp.float32)
        xpad[base + H + 1:base + H + 2, :] = jnp.zeros((1, WCl), jnp.float32)
        tpad[base:base + 1, :] = jnp.zeros((1, WCo), jnp.float32)
        tpad[base + H + 1:base + H + 2, :] = jnp.zeros((1, WCo), jnp.float32)
        xpad[base + 1:base + H + 1, :] = xin[n * H:(n + 1) * H, :]

    # ---- conv1 (+BN1) and shortcut conv fused into ONE matmul per row tap ---
    # TODO(synk): at production resolution cast the slabs/weights to bf16
    # (keeping f32 accumulation) once the 1e-3 tolerance is re-verified.
    y1 = jnp.dot(xpad[0:R - 2, :], w1_ref[0], preferred_element_type=jnp.float32)
    y1 = y1 + jnp.dot(xpad[1:R - 1, :], w1_ref[1],
                      preferred_element_type=jnp.float32)
    y1 = y1 + jnp.dot(xpad[2:R, :], w1_ref[2],
                      preferred_element_type=jnp.float32)

    t = jnp.maximum(y1[:, :WCo] + shift1_ref[...], 0.0)    # conv1 + BN1 + ReLU
    sc = y1[:, WCo:]                                        # shortcut conv

    for n in range(bsz):
        base = n * P
        tpad[base + 1:base + H + 1, :] = t[base:base + H, :]

    # ---- conv2 over t (same padded-slab / banded-matmul scheme) -------------
    y2 = jnp.dot(tpad[0:R - 2, :], w2_ref[0], preferred_element_type=jnp.float32)
    y2 = y2 + jnp.dot(tpad[1:R - 1, :], w2_ref[1],
                      preferred_element_type=jnp.float32)
    y2 = y2 + jnp.dot(tpad[2:R, :], w2_ref[2],
                      preferred_element_type=jnp.float32)

    y = y2 + sc + scb_ref[...]        # + shortcut spatial bias + bs + b2

    # ---- lane-dense output store (interior rows of each image) --------------
    for n in range(bsz):
        out_ref[n * H:(n + 1) * H, :] = y[n * P:n * P + H, :].astype(out_ref.dtype)


# ----------------------------------------------------------------------------
# Wrapper-side weight preparation (plain JAX, traced once per call)
# ----------------------------------------------------------------------------
def _bn_affine(bn):
    g, b, m, v = bn
    scale = g / jnp.sqrt(v + EPS)
    return scale, b - m * scale


def _banded(ker_row, W, in_stride=1):
    """Block-banded conv-as-matmul weights.

    ker_row: (3, Ci, Co) -- the three column taps (dj=-1,0,+1) of one kernel row.
    Returns B of shape (W*in_stride*Ci, W*Co) with
      B[(in_stride*w_in)*Ci + c, w_out*Co + o] = ker_row[w_in - w_out + 1, c, o]
    for |w_in - w_out| <= 1 and zero elsewhere.  Zero entries implement both the
    'SAME' zero column padding and (for in_stride=2) the zero-weighting of the
    junk odd pixel blocks of the fused max-pool layout."""
    Ci, Co = ker_row.shape[1], ker_row.shape[2]
    Wl = W * in_stride
    bi = jnp.arange(Wl)[:, None]                       # input lane-block index
    wo = jnp.arange(W)[None, :]                        # output pixel index
    kw = bi // in_stride - wo + 1                      # candidate column tap
    valid = (bi % in_stride == 0) & (kw >= 0) & (kw <= 2)
    taps = ker_row[jnp.clip(kw, 0, 2)]                 # (Wl, W, Ci, Co), exact gather
    B = jnp.where(valid[:, :, None, None], taps, 0.0)
    return jnp.transpose(B, (0, 2, 1, 3)).reshape(Wl * Ci, W * Co)


def _shortcut_bias_image(ws, shift_in, H, W):
    """conv_{ws}(constant per-channel image shift_in) under zero 'SAME' padding."""
    tap = jnp.einsum('ijco,c->ijo', ws, shift_in,
                     precision=lax.Precision.HIGHEST)          # (3,3,Cout)
    hh = jnp.arange(H)[:, None, None, None]
    ww = jnp.arange(W)[None, :, None, None]
    ii = jnp.arange(3)[None, None, :, None]
    jj = jnp.arange(3)[None, None, None, :]
    inside = ((hh + ii - 1 >= 0) & (hh + ii - 1 < H) &
              (ww + jj - 1 >= 0) & (ww + jj - 1 < W)).astype(jnp.float32)
    return jnp.einsum('hwij,ijo->hwo', inside, tap,
                      precision=lax.Precision.HIGHEST)         # (H,W,Cout)


def double_conv_stage(x, p, *, pool, batch_tiles=1):
    """x: (N, Hin, Win, Cin) NHWC f32 -> (N, H, W, Cout); one fused pallas_call
    for (optional 2x2 max-pool) + DoubleConv.  batch_tiles=1 folds the whole
    batch into the matmul M dim; TODO(synk): on v7x use batch_tiles=2 (needs
    bsz*H % 8 == 0) so both TensorCores get work."""
    N, Hin, Win_sp, Cin = x.shape
    H, W = (Hin // 2, Win_sp // 2) if pool else (Hin, Win_sp)
    Cout = p["w1"].shape[-1]
    assert N % batch_tiles == 0
    bsz = N // batch_tiles
    stride = 2 if pool else 1
    P = H + 2
    R = bsz * P
    WCl = stride * W * Cin          # == Win_sp * Cin
    WCo = W * Cout

    # --- fold BN affines into the conv weights / bias terms ------------------
    s1, t1 = _bn_affine(p["bn1"])                     # BN after conv1
    w1f = p["w1"] * s1                                # scale output channels
    shift1 = p["b1"] * s1 + t1                        # (Cout,)
    ss, ts = _bn_affine(p["bn_s"])                    # BN before shortcut conv
    wsf = p["ws"] * ss[None, None, :, None]           # scale input channels

    # conv-as-banded-matmul weights; conv1 & shortcut fused on the output axis
    w1cat = jnp.stack(
        [jnp.concatenate([_banded(w1f[k], W, stride),
                          _banded(wsf[k], W, stride)], axis=1)
         for k in range(3)], axis=0)                  # (3, WCl, 2*WCo)
    w2b = jnp.stack([_banded(p["w2"][k], W) for k in range(3)], axis=0)

    shift1_row = jnp.tile(shift1, W).reshape(1, WCo)

    # spatial shortcut bias under zero padding + shortcut & conv2 biases,
    # laid out in padded-row coordinates (pad-row entries are never read)
    scb_img = (_shortcut_bias_image(p["ws"], ts, H, W)
               + p["bs"] + p["b2"]).reshape(H, WCo)
    scb_blk = jnp.concatenate([scb_img, jnp.zeros((2, WCo), jnp.float32)], 0)
    scb = jnp.tile(scb_blk, (bsz, 1))[:R - 2]          # (R-2, WCo)

    xs = x.reshape(N * Hin, Win_sp * Cin)              # lane-dense, free reshape

    kern = functools.partial(_double_conv_kernel, H=H, W=W, Cin=Cin, Cout=Cout,
                             bsz=bsz, pool=pool)

    # TODO(synk): at production NowcastNet resolutions tile rows with a 1-row
    # halo (and column-tile / fall back to im2col once W*C outgrows the banded
    # weights), and set vmem_limit_bytes; whole-image banded blocks are only
    # the right shape at these small sizes.
    out = pl.pallas_call(
        kern,
        out_shape=jax.ShapeDtypeStruct((N * H, WCo), jnp.float32),
        grid_spec=pltpu.PrefetchScalarGridSpec(
            num_scalar_prefetch=0,
            grid=(batch_tiles,),
            in_specs=[
                pl.BlockSpec((bsz * Hin, Win_sp * Cin), lambda b: (b, 0)),
                pl.BlockSpec((3, WCl, 2 * WCo), lambda b: (0, 0, 0)),
                pl.BlockSpec((3, WCo, WCo), lambda b: (0, 0, 0)),
                pl.BlockSpec((1, WCo), lambda b: (0, 0)),
                pl.BlockSpec((R - 2, WCo), lambda b: (0, 0)),
            ],
            out_specs=pl.BlockSpec((bsz * H, WCo), lambda b: (b, 0)),
            scratch_shapes=[pltpu.VMEM((R, WCl), jnp.float32),
                            pltpu.VMEM((R, WCo), jnp.float32)],
        ),
        compiler_params=pltpu.CompilerParams(dimension_semantics=("parallel",)),
    )(xs, w1cat, w2b, shift1_row, scb)
    return out.reshape(N, H, W, Cout)


# ----------------------------------------------------------------------------
# Parameter setup (plain-JAX glue)
# ----------------------------------------------------------------------------
def spectral_normalize(w):
    """Approximate torch.nn.utils.spectral_norm: divide by the largest singular
    value of the (Cout, Cin*3*3) matrix."""
    # TODO(synk): PyTorch keeps a persistent random `u` and does 1 power-iter
    # per forward; here a deterministic 20-step power iteration at setup.
    cout = w.shape[-1]
    mat = w.reshape(-1, cout).T
    u = jnp.ones((mat.shape[0],), jnp.float32)
    v = jnp.ones((mat.shape[1],), jnp.float32)
    for _ in range(20):
        v = mat.T @ u
        v = v / (jnp.linalg.norm(v) + 1e-12)
        u = mat @ v
        u = u / (jnp.linalg.norm(u) + 1e-12)
    sigma = u @ (mat @ v)
    return w / sigma


def init_conv(key, cin, cout, k=3):
    kw, kb = jax.random.split(key)
    fan_in = cin * k * k
    bound = 1.0 / jnp.sqrt(jnp.float32(fan_in))
    w = jax.random.uniform(kw, (k, k, cin, cout), jnp.float32, -bound, bound)
    b = jax.random.uniform(kb, (cout,), jnp.float32, -bound, bound)
    return w, b


def init_bn(key, c):
    k1, k2, k3, k4 = jax.random.split(key, 4)
    gamma = 1.0 + 0.1 * jax.random.normal(k1, (c,), jnp.float32)
    beta = 0.1 * jax.random.normal(k2, (c,), jnp.float32)
    mean = 0.1 * jax.random.normal(k3, (c,), jnp.float32)
    var = 0.5 + jnp.abs(jax.random.normal(k4, (c,), jnp.float32)) * 0.5
    return (gamma, beta, mean, var)


def init_double_conv(key, cin, cout):
    ks = jax.random.split(key, 5)
    w1, b1 = init_conv(ks[0], cin, cout)
    bn1 = init_bn(ks[1], cout)
    w2, b2 = init_conv(ks[2], cout, cout)
    w2 = spectral_normalize(w2)
    bn_s = init_bn(ks[3], cin)
    ws, bs = init_conv(ks[4], cin, cout)
    ws = spectral_normalize(ws)
    return dict(w1=w1, b1=b1, bn1=bn1, w2=w2, b2=b2, bn_s=bn_s, ws=ws, bs=bs)


# ----------------------------------------------------------------------------
# Module forward (one fused Pallas kernel per stage)
# ----------------------------------------------------------------------------
def generative_encoder_fwd(x_nchw, params):
    # TODO(synk): at production resolution keep the surrounding model NHWC (and
    # fuse the tiny down2/down3 stages) to avoid these extra HBM transposes.
    x = jnp.transpose(x_nchw, (0, 2, 3, 1)).astype(jnp.float32)  # NCHW -> NHWC
    x = double_conv_stage(x, params["inc"], pool=False)
    x = double_conv_stage(x, params["down1"], pool=True)
    x = double_conv_stage(x, params["down2"], pool=True)
    x = double_conv_stage(x, params["down3"], pool=True)
    return jnp.transpose(x, (0, 3, 1, 2))                        # NHWC -> NCHW


# ----------------------------------------------------------------------------
# Pure-JAX reference (correctness check only)
# ----------------------------------------------------------------------------
def _ref_conv(x, w, b):
    y = lax.conv_general_dilated(x, w, (1, 1), "SAME",
                                 dimension_numbers=("NHWC", "HWIO", "NHWC"),
                                 precision=lax.Precision.HIGHEST)
    return y + b


def _ref_bn(x, bn):
    g, b, m, v = bn
    return (x - m) * (g / jnp.sqrt(v + EPS)) + b


def _ref_double_conv(x, p):
    sc = _ref_conv(_ref_bn(x, p["bn_s"]), p["ws"], p["bs"])
    t = jax.nn.relu(_ref_bn(_ref_conv(x, p["w1"], p["b1"]), p["bn1"]))
    y = _ref_conv(t, p["w2"], p["b2"])
    return y + sc


def _ref_pool(x):
    N, H, W, C = x.shape
    return x.reshape(N, H // 2, 2, W // 2, 2, C).max(axis=(2, 4))


def ref_encoder(x_nchw, params):
    x = jnp.transpose(x_nchw, (0, 2, 3, 1)).astype(jnp.float32)
    x = _ref_double_conv(x, params["inc"])
    for name in ("down1", "down2", "down3"):
        x = _ref_pool(x)
        x = _ref_double_conv(x, params[name])
    return jnp.transpose(x, (0, 3, 1, 2))


# ----------------------------------------------------------------------------
if __name__ == "__main__":
    in_channels = 4
    base_channels = 8
    N, H, W = 2, 16, 16

    key = jax.random.PRNGKey(0)
    k0, k1, k2, k3, kx = jax.random.split(key, 5)
    params = dict(
        inc=init_double_conv(k0, in_channels, base_channels),
        down1=init_double_conv(k1, base_channels * 1, base_channels * 2),
        down2=init_double_conv(k2, base_channels * 2, base_channels * 4),
        down3=init_double_conv(k3, base_channels * 4, base_channels * 8),
    )
    x = jax.random.normal(kx, (N, in_channels, H, W), jnp.float32)

    fwd = jax.jit(generative_encoder_fwd)
    out = jax.block_until_ready(fwd(x, params))

    expected_shape = (N, base_channels * 8, H // 8, W // 8)
    assert out.shape == expected_shape, (out.shape, expected_shape)

    ref = jax.block_until_ready(ref_encoder(x, params))
    max_err = float(jnp.max(jnp.abs(out - ref)))
    assert jnp.allclose(out, ref, atol=1e-3, rtol=1e-3), max_err

    print("KERNEL_OK")
</pallas_src>

<mosaic_0001>
module attributes {stable_mosaic.version = 11 : i64} {
  func.func @_double_conv_kernel(%arg0: i32, %arg1: memref<32x64xf32, #tpu.memory_space<vmem>>, %arg2: memref<3x64x256xf32, #tpu.memory_space<vmem>>, %arg3: memref<3x128x128xf32, #tpu.memory_space<vmem>>, %arg4: memref<1x128xf32, #tpu.memory_space<vmem>>, %arg5: memref<34x128xf32, #tpu.memory_space<vmem>>, %arg6: memref<32x128xf32, #tpu.memory_space<vmem>>, %arg7: memref<36x64xf32, #tpu.memory_space<vmem>>, %arg8: memref<36x128xf32, #tpu.memory_space<vmem>>) attributes {dimension_semantics = [#tpu.dimension_semantics<parallel>], iteration_bounds = array<i64: 1>, scalar_prefetch = 0 : i64, scratch_operands = 2 : i64, tpu.core_type = #tpu.core_type<tc>, window_params = [{transform_indices = @transform_0, window_bounds = array<i64: 32, 64>}, {pipeline_mode = #tpu.pipeline_mode<synchronous>, transform_indices = @transform_1, window_bounds = array<i64: 3, 64, 256>}, {pipeline_mode = #tpu.pipeline_mode<synchronous>, transform_indices = @transform_2, window_bounds = array<i64: 3, 128, 128>}, {pipeline_mode = #tpu.pipeline_mode<synchronous>, transform_indices = @transform_3, window_bounds = array<i64: 1, 128>}, {pipeline_mode = #tpu.pipeline_mode<synchronous>, transform_indices = @transform_4, window_bounds = array<i64: 34, 128>}, {transform_indices = @transform_5, window_bounds = array<i64: 32, 128>}]} {
    %c0 = arith.constant 0 : index
    %c0_0 = arith.constant 0 : index
    %0 = vector.load %arg1[%c0, %c0_0] : memref<32x64xf32, #tpu.memory_space<vmem>>, vector<32x64xf32>
    %cst = arith.constant 0.000000e+00 : f32
    %1 = vector.broadcast %cst : f32 to vector<1x64xf32>
    %c0_1 = arith.constant 0 : index
    %c0_2 = arith.constant 0 : index
    %2 = vector.load %arg7[%c0_1, %c0_2] : memref<36x64xf32, #tpu.memory_space<vmem>>, vector<1x64xf32>
    tpu.vector_store %arg7[%c0_1, %c0_2], %1 {strides = array<i32>} : memref<36x64xf32, #tpu.memory_space<vmem>>, vector<1x64xf32>,
    %cst_3 = arith.constant 0.000000e+00 : f32
    %3 = vector.broadcast %cst_3 : f32 to vector<1x64xf32>
    %c17 = arith.constant 17 : index
    %c0_4 = arith.constant 0 : index
    %4 = vector.load %arg7[%c17, %c0_4] : memref<36x64xf32, #tpu.memory_space<vmem>>, vector<1x64xf32>
    tpu.vector_store %arg7[%c17, %c0_4], %3 {strides = array<i32>} : memref<36x64xf32, #tpu.memory_space<vmem>>, vector<1x64xf32>,
    %cst_5 = arith.constant 0.000000e+00 : f32
    %5 = vector.broadcast %cst_5 : f32 to vector<1x128xf32>
    %c0_6 = arith.constant 0 : index
    %c0_7 = arith.constant 0 : index
    %6 = vector.load %arg8[%c0_6, %c0_7] : memref<36x128xf32, #tpu.memory_space<vmem>>, vector<1x128xf32>
    tpu.vector_store %arg8[%c0_6, %c0_7], %5 {strides = array<i32>} : memref<36x128xf32, #tpu.memory_space<vmem>>, vector<1x128xf32>,
    %cst_8 = arith.constant 0.000000e+00 : f32
    %7 = vector.broadcast %cst_8 : f32 to vector<1x128xf32>
    %c17_9 = arith.constant 17 : index
    %c0_10 = arith.constant 0 : index
    %8 = vector.load %arg8[%c17_9, %c0_10] : memref<36x128xf32, #tpu.memory_space<vmem>>, vector<1x128xf32>
    tpu.vector_store %arg8[%c17_9, %c0_10], %7 {strides = array<i32>} : memref<36x128xf32, #tpu.memory_space<vmem>>, vector<1x128xf32>,
    %9 = vector.extract_strided_slice %0 {offsets = [0, 0], sizes = [16, 64], strides = [1, 1]} : vector<32x64xf32> to vector<16x64xf32>
    %c1 = arith.constant 1 : index
    %c0_11 = arith.constant 0 : index
    %10 = vector.load %arg7[%c1, %c0_11] : memref<36x64xf32, #tpu.memory_space<vmem>>, vector<16x64xf32>
    tpu.vector_store %arg7[%c1, %c0_11], %9 {strides = array<i32>} : memref<36x64xf32, #tpu.memory_space<vmem>>, vector<16x64xf32>,
    %cst_12 = arith.constant 0.000000e+00 : f32
    %11 = vector.broadcast %cst_12 : f32 to vector<1x64xf32>
    %c18 = arith.constant 18 : index
    %c0_13 = arith.constant 0 : index
    %12 = vector.load %arg7[%c18, %c0_13] : memref<36x64xf32, #tpu.memory_space<vmem>>, vector<1x64xf32>
    tpu.vector_store %arg7[%c18, %c0_13], %11 {strides = array<i32>} : memref<36x64xf32, #tpu.memory_space<vmem>>, vector<1x64xf32>,
    %cst_14 = arith.constant 0.000000e+00 : f32
    %13 = vector.broadcast %cst_14 : f32 to vector<1x64xf32>
    %c35 = arith.constant 35 : index
    %c0_15 = arith.constant 0 : index
    %14 = vector.load %arg7[%c35, %c0_15] : memref<36x64xf32, #tpu.memory_space<vmem>>, vector<1x64xf32>
    tpu.vector_store %arg7[%c35, %c0_15], %13 {strides = array<i32>} : memref<36x64xf32, #tpu.memory_space<vmem>>, vector<1x64xf32>,
    %cst_16 = arith.constant 0.000000e+00 : f32
    %15 = vector.broadcast %cst_16 : f32 to vector<1x128xf32>
    %c18_17 = arith.constant 18 : index
    %c0_18 = arith.constant 0 : index
    %16 = vector.load %arg8[%c18_17, %c0_18] : memref<36x128xf32, #tpu.memory_space<vmem>>, vector<1x128xf32>
    tpu.vector_store %arg8[%c18_17, %c0_18], %15 {strides = array<i32>} : memref<36x128xf32, #tpu.memory_space<vmem>>, vector<1x128xf32>,
    %cst_19 = arith.constant 0.000000e+00 : f32
    %17 = vector.broadcast %cst_19 : f32 to vector<1x128xf32>
    %c35_20 = arith.constant 35 : index
    %c0_21 = arith.constant 0 : index
    %18 = vector.load %arg8[%c35_20, %c0_21] : memref<36x128xf32, #tpu.memory_space<vmem>>, vector<1x128xf32>
    tpu.vector_store %arg8[%c35_20, %c0_21], %17 {strides = array<i32>} : memref<36x128xf32, #tpu.memory_space<vmem>>, vector<1x128xf32>,
    %19 = vector.extract_strided_slice %0 {offsets = [16, 0], sizes = [16, 64], strides = [1, 1]} : vector<32x64xf32> to vector<16x64xf32>
    %c19 = arith.constant 19 : index
    %c0_22 = arith.constant 0 : index
    %20 = vector.load %arg7[%c19, %c0_22] : memref<36x64xf32, #tpu.memory_space<vmem>>, vector<16x64xf32>
    tpu.vector_store %arg7[%c19, %c0_22], %19 {strides = array<i32>} : memref<36x64xf32, #tpu.memory_space<vmem>>, vector<16x64xf32>,
    %c0_23 = arith.constant 0 : index
    %c0_24 = arith.constant 0 : index
    %21 = vector.load %arg7[%c0_23, %c0_24] : memref<36x64xf32, #tpu.memory_space<vmem>>, vector<34x64xf32>
    %c0_25 = arith.constant 0 : index
    %c0_26 = arith.constant 0 : index
    %c0_27 = arith.constant 0 : index
    %22 = vector.load %arg2[%c0_25, %c0_26, %c0_27] : memref<3x64x256xf32, #tpu.memory_space<vmem>>, vector<1x64x256xf32>
    %23 = vector.shape_cast %22 : vector<1x64x256xf32> to vector<64x256xf32>
    %cst_28 = arith.constant dense<0.000000e+00> : vector<34x256xf32>
    %24 = tpu.matmul %21, %23, %cst_28 {dimension_numbers = #tpu.dot_dimension_numbers<[1], [0], [0], [1], [0, 0, 1, 1], [], []>} : vector<34x64xf32>, vector<64x256xf32>, vector<34x256xf32> -> vector<34x256xf32>
    %c1_29 = arith.constant 1 : index
    %c0_30 = arith.constant 0 : index
    %25 = vector.load %arg7[%c1_29, %c0_30] : memref<36x64xf32, #tpu.memory_space<vmem>>, vector<34x64xf32>
    %c1_31 = arith.constant 1 : index
    %c0_32 = arith.constant 0 : index
    %c0_33 = arith.constant 0 : index
    %26 = vector.load %arg2[%c1_31, %c0_32, %c0_33] : memref<3x64x256xf32, #tpu.memory_space<vmem>>, vector<1x64x256xf32>
    %27 = vector.shape_cast %26 : vector<1x64x256xf32> to vector<64x256xf32>
    %cst_34 = arith.constant dense<0.000000e+00> : vector<34x256xf32>
    %28 = tpu.matmul %25, %27, %cst_34 {dimension_numbers = #tpu.dot_dimension_numbers<[1], [0], [0], [1], [0, 0, 1, 1], [], []>} : vector<34x64xf32>, vector<64x256xf32>, vector<34x256xf32> -> vector<34x256xf32>
    %29 = arith.addf %24, %28 : vector<34x256xf32>
    %c2 = arith.constant 2 : index
    %c0_35 = arith.constant 0 : index
    %30 = vector.load %arg7[%c2, %c0_35] : memref<36x64xf32, #tpu.memory_space<vmem>>, vector<34x64xf32>
    %c2_36 = arith.constant 2 : index
    %c0_37 = arith.constant 0 : index
    %c0_38 = arith.constant 0 : index
    %31 = vector.load %arg2[%c2_36, %c0_37, %c0_38] : memref<3x64x256xf32, #tpu.memory_space<vmem>>, vector<1x64x256xf32>
    %32 = vector.shape_cast %31 : vector<1x64x256xf32> to vector<64x256xf32>
    %cst_39 = arith.constant dense<0.000000e+00> : vector<34x256xf32>
    %33 = tpu.matmul %30, %32, %cst_39 {dimension_numbers = #tpu.dot_dimension_numbers<[1], [0], [0], [1], [0, 0, 1, 1], [], []>} : vector<34x64xf32>, vector<64x256xf32>, vector<34x256xf32> -> vector<34x256xf32>
    %34 = arith.addf %29, %33 : vector<34x256xf32>
    %35 = vector.extract_strided_slice %34 {offsets = [0, 0], sizes = [34, 128], strides = [1, 1]} : vector<34x256xf32> to vector<34x128xf32>
    %c0_40 = arith.constant 0 : index
    %c0_41 = arith.constant 0 : index
    %36 = vector.load %arg4[%c0_40, %c0_41] : memref<1x128xf32, #tpu.memory_space<vmem>>, vector<1x128xf32>
    %37 = vector.broadcast %36 : vector<1x128xf32> to vector<34x128xf32>
    %38 = arith.addf %35, %37 : vector<34x128xf32>
    %cst_42 = arith.constant 0.000000e+00 : f32
    %39 = vector.broadcast %cst_42 : f32 to vector<34x128xf32>
    %40 = arith.maximumf %38, %39 : vector<34x128xf32>
    %41 = vector.extract_strided_slice %34 {offsets = [0, 128], sizes = [34, 128], strides = [1, 1]} : vector<34x256xf32> to vector<34x128xf32>
    %42 = vector.extract_strided_slice %40 {offsets = [0, 0], sizes = [16, 128], strides = [1, 1]} : vector<34x128xf32> to vector<16x128xf32>
    %c1_43 = arith.constant 1 : index
    %c0_44 = arith.constant 0 : index
    %43 = vector.load %arg8[%c1_43, %c0_44] : memref<36x128xf32, #tpu.memory_space<vmem>>, vector<16x128xf32>
    tpu.vector_store %arg8[%c1_43, %c0_44], %42 {strides = array<i32>} : memref<36x128xf32, #tpu.memory_space<vmem>>, vector<16x128xf32>,
    %44 = vector.extract_strided_slice %40 {offsets = [18, 0], sizes = [16, 128], strides = [1, 1]} : vector<34x128xf32> to vector<16x128xf32>
    %c19_45 = arith.constant 19 : index
    %c0_46 = arith.constant 0 : index
    %45 = vector.load %arg8[%c19_45, %c0_46] : memref<36x128xf32, #tpu.memory_space<vmem>>, vector<16x128xf32>
    tpu.vector_store %arg8[%c19_45, %c0_46], %44 {strides = array<i32>} : memref<36x128xf32, #tpu.memory_space<vmem>>, vector<16x128xf32>,
    %c0_47 = arith.constant 0 : index
    %c0_48 = arith.constant 0 : index
    %46 = vector.load %arg8[%c0_47, %c0_48] : memref<36x128xf32, #tpu.memory_space<vmem>>, vector<34x128xf32>
    %c0_49 = arith.constant 0 : index
    %c0_50 = arith.constant 0 : index
    %c0_51 = arith.constant 0 : index
    %47 = vector.load %arg3[%c0_49, %c0_50, %c0_51] : memref<3x128x128xf32, #tpu.memory_space<vmem>>, vector<1x128x128xf32>
    %48 = vector.shape_cast %47 : vector<1x128x128xf32> to vector<128x128xf32>
    %cst_52 = arith.constant dense<0.000000e+00> : vector<34x128xf32>
    %49 = tpu.matmul %46, %48, %cst_52 {dimension_numbers = #tpu.dot_dimension_numbers<[1], [0], [0], [1], [0, 0, 1, 1], [], []>} : vector<34x128xf32>, vector<128x128xf32>, vector<34x128xf32> -> vector<34x128xf32>
    %c1_53 = arith.constant 1 : index
    %c0_54 = arith.constant 0 : index
    %50 = vector.load %arg8[%c1_53, %c0_54] : memref<36x128xf32, #tpu.memory_space<vmem>>, vector<34x128xf32>
    %c1_55 = arith.constant 1 : index
    %c0_56 = arith.constant 0 : index
    %c0_57 = arith.constant 0 : index
    %51 = vector.load %arg3[%c1_55, %c0_56, %c0_57] : memref<3x128x128xf32, #tpu.memory_space<vmem>>, vector<1x128x128xf32>
    %52 = vector.shape_cast %51 : vector<1x128x128xf32> to vector<128x128xf32>
    %cst_58 = arith.constant dense<0.000000e+00> : vector<34x128xf32>
    %53 = tpu.matmul %50, %52, %cst_58 {dimension_numbers = #tpu.dot_dimension_numbers<[1], [0], [0], [1], [0, 0, 1, 1], [], []>} : vector<34x128xf32>, vector<128x128xf32>, vector<34x128xf32> -> vector<34x128xf32>
    %54 = arith.addf %49, %53 : vector<34x128xf32>
    %c2_59 = arith.constant 2 : index
    %c0_60 = arith.constant 0 : index
    %55 = vector.load %arg8[%c2_59, %c0_60] : memref<36x128xf32, #tpu.memory_space<vmem>>, vector<34x128xf32>
    %c2_61 = arith.constant 2 : index
    %c0_62 = arith.constant 0 : index
    %c0_63 = arith.constant 0 : index
    %56 = vector.load %arg3[%c2_61, %c0_62, %c0_63] : memref<3x128x128xf32, #tpu.memory_space<vmem>>, vector<1x128x128xf32>
    %57 = vector.shape_cast %56 : vector<1x128x128xf32> to vector<128x128xf32>
    %cst_64 = arith.constant dense<0.000000e+00> : vector<34x128xf32>
    %58 = tpu.matmul %55, %57, %cst_64 {dimension_numbers = #tpu.dot_dimension_numbers<[1], [0], [0], [1], [0, 0, 1, 1], [], []>} : vector<34x128xf32>, vector<128x128xf32>, vector<34x128xf32> -> vector<34x128xf32>
    %59 = arith.addf %54, %58 : vector<34x128xf32>
    %60 = arith.addf %59, %41 : vector<34x128xf32>
    %c0_65 = arith.constant 0 : index
    %c0_66 = arith.constant 0 : index
    %61 = vector.load %arg5[%c0_65, %c0_66] : memref<34x128xf32, #tpu.memory_space<vmem>>, vector<34x128xf32>
    %62 = arith.addf %60, %61 : vector<34x128xf32>
    %63 = vector.extract_strided_slice %62 {offsets = [0, 0], sizes = [16, 128], strides = [1, 1]} : vector<34x128xf32> to vector<16x128xf32>
    %c0_67 = arith.constant 0 : index
    %c0_68 = arith.constant 0 : index
    %64 = vector.load %arg6[%c0_67, %c0_68] : memref<32x128xf32, #tpu.memory_space<vmem>>, vector<16x128xf32>
    tpu.vector_store %arg6[%c0_67, %c0_68], %63 {strides = array<i32>} : memref<32x128xf32, #tpu.memory_space<vmem>>, vector<16x128xf32>,
    %65 = vector.extract_strided_slice %62 {offsets = [18, 0], sizes = [16, 128], strides = [1, 1]} : vector<34x128xf32> to vector<16x128xf32>
    %c16 = arith.constant 16 : index
    %c0_69 = arith.constant 0 : index
    %66 = vector.load %arg6[%c16, %c0_69] : memref<32x128xf32, #tpu.memory_space<vmem>>, vector<16x128xf32>
    tpu.vector_store %arg6[%c16, %c0_69], %65 {strides = array<i32>} : memref<32x128xf32, #tpu.memory_space<vmem>>, vector<16x128xf32>,
    return
  }
  func.func @transform_0(%arg0: i32) -> (i32, i32) {
    %c0_i32 = arith.constant 0 : i32
    %c0_i32_0 = arith.constant 0 : i32
    return %arg0, %c0_i32 : i32, i32
  }
  func.func @transform_1(%arg0: i32) -> (i32, i32, i32) {
    %c0_i32 = arith.constant 0 : i32
    %c0_i32_0 = arith.constant 0 : i32
    %c0_i32_1 = arith.constant 0 : i32
    %c0_i32_2 = arith.constant 0 : i32
    return %c0_i32, %c0_i32_0, %c0_i32_1 : i32, i32, i32
  }
  func.func @transform_2(%arg0: i32) -> (i32, i32, i32) {
    %c0_i32 = arith.constant 0 : i32
    %c0_i32_0 = arith.constant 0 : i32
    %c0_i32_1 = arith.constant 0 : i32
    %c0_i32_2 = arith.constant 0 : i32
    return %c0_i32, %c0_i32_0, %c0_i32_1 : i32, i32, i32
  }
  func.func @transform_3(%arg0: i32) -> (i32, i32) {
    %c0_i32 = arith.constant 0 : i32
    %c0_i32_0 = arith.constant 0 : i32
    %c0_i32_1 = arith.constant 0 : i32
    return %c0_i32, %c0_i32_0 : i32, i32
  }
  func.func @transform_4(%arg0: i32) -> (i32, i32) {
    %c0_i32 = arith.constant 0 : i32
    %c0_i32_0 = arith.constant 0 : i32
    %c0_i32_1 = arith.constant 0 : i32
    return %c0_i32, %c0_i32_0 : i32, i32
  }
  func.func @transform_5(%arg0: i32) -> (i32, i32) {
    %c0_i32 = arith.constant 0 : i32
    %c0_i32_0 = arith.constant 0 : i32
    return %arg0, %c0_i32 : i32, i32
  }
}

module attributes {stable_mosaic.version = 11 : i64} {
  func.func @_double_conv_kernel(%arg0: i32, %arg1: memref<32x128xf32, #tpu.memory_space<vmem>>, %arg2: memref<3x128x256xf32, #tpu.memory_space<vmem>>, %arg3: memref<3x128x128xf32, #tpu.memory_space<vmem>>, %arg4: memref<1x128xf32, #tpu.memory_space<vmem>>, %arg5: memref<18x128xf32, #tpu.memory_space<vmem>>, %arg6: memref<16x128xf32, #tpu.memory_space<vmem>>, %arg7: memref<20x128xf32, #tpu.memory_space<vmem>>, %arg8: memref<20x128xf32, #tpu.memory_space<vmem>>) attributes {dimension_semantics = [#tpu.dimension_semantics<parallel>], iteration_bounds = array<i64: 1>, scalar_prefetch = 0 : i64, scratch_operands = 2 : i64, tpu.core_type = #tpu.core_type<tc>, window_params = [{transform_indices = @transform_0, window_bounds = array<i64: 32, 128>}, {pipeline_mode = #tpu.pipeline_mode<synchronous>, transform_indices = @transform_1, window_bounds = array<i64: 3, 128, 256>}, {pipeline_mode = #tpu.pipeline_mode<synchronous>, transform_indices = @transform_2, window_bounds = array<i64: 3, 128, 128>}, {pipeline_mode = #tpu.pipeline_mode<synchronous>, transform_indices = @transform_3, window_bounds = array<i64: 1, 128>}, {pipeline_mode = #tpu.pipeline_mode<synchronous>, transform_indices = @transform_4, window_bounds = array<i64: 18, 128>}, {transform_indices = @transform_5, window_bounds = array<i64: 16, 128>}]} {
    %c0 = arith.constant 0 : index
    %c0_0 = arith.constant 0 : index
    %0 = tpu.strided_load %arg1[%c0, %c0_0] {strides = array<i32: 2, 1>} : memref<32x128xf32, #tpu.memory_space<vmem>>, vector<16x128xf32>
    %c1 = arith.constant 1 : index
    %c0_1 = arith.constant 0 : index
    %1 = tpu.strided_load %arg1[%c1, %c0_1] {strides = array<i32: 2, 1>} : memref<32x128xf32, #tpu.memory_space<vmem>>, vector<16x128xf32>
    %2 = arith.maximumf %0, %1 : vector<16x128xf32>
    %3 = vector.extract_strided_slice %2 {offsets = [0, 8], sizes = [16, 120], strides = [1, 1]} : vector<16x128xf32> to vector<16x120xf32>
    %4 = vector.extract_strided_slice %2 {offsets = [0, 0], sizes = [16, 8], strides = [1, 1]} : vector<16x128xf32> to vector<16x8xf32>
    %5 = tpu.concatenate %3, %4 in 1 : vector<16x120xf32>, vector<16x8xf32> -> vector<16x128xf32>
    %6 = arith.maximumf %2, %5 : vector<16x128xf32>
    %cst = arith.constant 0.000000e+00 : f32
    %7 = vector.broadcast %cst : f32 to vector<1x128xf32>
    %c0_2 = arith.constant 0 : index
    %c0_3 = arith.constant 0 : index
    %8 = vector.load %arg7[%c0_2, %c0_3] : memref<20x128xf32, #tpu.memory_space<vmem>>, vector<1x128xf32>
    tpu.vector_store %arg7[%c0_2, %c0_3], %7 {strides = array<i32>} : memref<20x128xf32, #tpu.memory_space<vmem>>, vector<1x128xf32>,
    %cst_4 = arith.constant 0.000000e+00 : f32
    %9 = vector.broadcast %cst_4 : f32 to vector<1x128xf32>
    %c9 = arith.constant 9 : index
    %c0_5 = arith.constant 0 : index
    %10 = vector.load %arg7[%c9, %c0_5] : memref<20x128xf32, #tpu.memory_space<vmem>>, vector<1x128xf32>
    tpu.vector_store %arg7[%c9, %c0_5], %9 {strides = array<i32>} : memref<20x128xf32, #tpu.memory_space<vmem>>, vector<1x128xf32>,
    %cst_6 = arith.constant 0.000000e+00 : f32
    %11 = vector.broadcast %cst_6 : f32 to vector<1x128xf32>
    %c0_7 = arith.constant 0 : index
    %c0_8 = arith.constant 0 : index
    %12 = vector.load %arg8[%c0_7, %c0_8] : memref<20x128xf32, #tpu.memory_space<vmem>>, vector<1x128xf32>
    tpu.vector_store %arg8[%c0_7, %c0_8], %11 {strides = array<i32>} : memref<20x128xf32, #tpu.memory_space<vmem>>, vector<1x128xf32>,
    %cst_9 = arith.constant 0.000000e+00 : f32
    %13 = vector.broadcast %cst_9 : f32 to vector<1x128xf32>
    %c9_10 = arith.constant 9 : index
    %c0_11 = arith.constant 0 : index
    %14 = vector.load %arg8[%c9_10, %c0_11] : memref<20x128xf32, #tpu.memory_space<vmem>>, vector<1x128xf32>
    tpu.vector_store %arg8[%c9_10, %c0_11], %13 {strides = array<i32>} : memref<20x128xf32, #tpu.memory_space<vmem>>, vector<1x128xf32>,
    %15 = vector.extract_strided_slice %6 {offsets = [0, 0], sizes = [8, 128], strides = [1, 1]} : vector<16x128xf32> to vector<8x128xf32>
    %c1_12 = arith.constant 1 : index
    %c0_13 = arith.constant 0 : index
    %16 = vector.load %arg7[%c1_12, %c0_13] : memref<20x128xf32, #tpu.memory_space<vmem>>, vector<8x128xf32>
    tpu.vector_store %arg7[%c1_12, %c0_13], %15 {strides = array<i32>} : memref<20x128xf32, #tpu.memory_space<vmem>>, vector<8x128xf32>,
    %cst_14 = arith.constant 0.000000e+00 : f32
    %17 = vector.broadcast %cst_14 : f32 to vector<1x128xf32>
    %c10 = arith.constant 10 : index
    %c0_15 = arith.constant 0 : index
    %18 = vector.load %arg7[%c10, %c0_15] : memref<20x128xf32, #tpu.memory_space<vmem>>, vector<1x128xf32>
    tpu.vector_store %arg7[%c10, %c0_15], %17 {strides = array<i32>} : memref<20x128xf32, #tpu.memory_space<vmem>>, vector<1x128xf32>,
    %cst_16 = arith.constant 0.000000e+00 : f32
    %19 = vector.broadcast %cst_16 : f32 to vector<1x128xf32>
    %c19 = arith.constant 19 : index
    %c0_17 = arith.constant 0 : index
    %20 = vector.load %arg7[%c19, %c0_17] : memref<20x128xf32, #tpu.memory_space<vmem>>, vector<1x128xf32>
    tpu.vector_store %arg7[%c19, %c0_17], %19 {strides = array<i32>} : memref<20x128xf32, #tpu.memory_space<vmem>>, vector<1x128xf32>,
    %cst_18 = arith.constant 0.000000e+00 : f32
    %21 = vector.broadcast %cst_18 : f32 to vector<1x128xf32>
    %c10_19 = arith.constant 10 : index
    %c0_20 = arith.constant 0 : index
    %22 = vector.load %arg8[%c10_19, %c0_20] : memref<20x128xf32, #tpu.memory_space<vmem>>, vector<1x128xf32>
    tpu.vector_store %arg8[%c10_19, %c0_20], %21 {strides = array<i32>} : memref<20x128xf32, #tpu.memory_space<vmem>>, vector<1x128xf32>,
    %cst_21 = arith.constant 0.000000e+00 : f32
    %23 = vector.broadcast %cst_21 : f32 to vector<1x128xf32>
    %c19_22 = arith.constant 19 : index
    %c0_23 = arith.constant 0 : index
    %24 = vector.load %arg8[%c19_22, %c0_23] : memref<20x128xf32, #tpu.memory_space<vmem>>, vector<1x128xf32>
    tpu.vector_store %arg8[%c19_22, %c0_23], %23 {strides = array<i32>} : memref<20x128xf32, #tpu.memory_space<vmem>>, vector<1x128xf32>,
    %25 = vector.extract_strided_slice %6 {offsets = [8, 0], sizes = [8, 128], strides = [1, 1]} : vector<16x128xf32> to vector<8x128xf32>
    %c11 = arith.constant 11 : index
    %c0_24 = arith.constant 0 : index
    %26 = vector.load %arg7[%c11, %c0_24] : memref<20x128xf32, #tpu.memory_space<vmem>>, vector<8x128xf32>
    tpu.vector_store %arg7[%c11, %c0_24], %25 {strides = array<i32>} : memref<20x128xf32, #tpu.memory_space<vmem>>, vector<8x128xf32>,
    %c0_25 = arith.constant 0 : index
    %c0_26 = arith.constant 0 : index
    %27 = vector.load %arg7[%c0_25, %c0_26] : memref<20x128xf32, #tpu.memory_space<vmem>>, vector<18x128xf32>
    %c0_27 = arith.constant 0 : index
    %c0_28 = arith.constant 0 : index
    %c0_29 = arith.constant 0 : index
    %28 = vector.load %arg2[%c0_27, %c0_28, %c0_29] : memref<3x128x256xf32, #tpu.memory_space<vmem>>, vector<1x128x256xf32>
    %29 = vector.shape_cast %28 : vector<1x128x256xf32> to vector<128x256xf32>
    %cst_30 = arith.constant dense<0.000000e+00> : vector<18x256xf32>
    %30 = tpu.matmul %27, %29, %cst_30 {dimension_numbers = #tpu.dot_dimension_numbers<[1], [0], [0], [1], [0, 0, 1, 1], [], []>} : vector<18x128xf32>, vector<128x256xf32>, vector<18x256xf32> -> vector<18x256xf32>
    %c1_31 = arith.constant 1 : index
    %c0_32 = arith.constant 0 : index
    %31 = vector.load %arg7[%c1_31, %c0_32] : memref<20x128xf32, #tpu.memory_space<vmem>>, vector<18x128xf32>
    %c1_33 = arith.constant 1 : index
    %c0_34 = arith.constant 0 : index
    %c0_35 = arith.constant 0 : index
    %32 = vector.load %arg2[%c1_33, %c0_34, %c0_35] : memref<3x128x256xf32, #tpu.memory_space<vmem>>, vector<1x128x256xf32>
    %33 = vector.shape_cast %32 : vector<1x128x256xf32> to vector<128x256xf32>
    %cst_36 = arith.constant dense<0.000000e+00> : vector<18x256xf32>
    %34 = tpu.matmul %31, %33, %cst_36 {dimension_numbers = #tpu.dot_dimension_numbers<[1], [0], [0], [1], [0, 0, 1, 1], [], []>} : vector<18x128xf32>, vector<128x256xf32>, vector<18x256xf32> -> vector<18x256xf32>
    %35 = arith.addf %30, %34 : vector<18x256xf32>
    %c2 = arith.constant 2 : index
    %c0_37 = arith.constant 0 : index
    %36 = vector.load %arg7[%c2, %c0_37] : memref<20x128xf32, #tpu.memory_space<vmem>>, vector<18x128xf32>
    %c2_38 = arith.constant 2 : index
    %c0_39 = arith.constant 0 : index
    %c0_40 = arith.constant 0 : index
    %37 = vector.load %arg2[%c2_38, %c0_39, %c0_40] : memref<3x128x256xf32, #tpu.memory_space<vmem>>, vector<1x128x256xf32>
    %38 = vector.shape_cast %37 : vector<1x128x256xf32> to vector<128x256xf32>
    %cst_41 = arith.constant dense<0.000000e+00> : vector<18x256xf32>
    %39 = tpu.matmul %36, %38, %cst_41 {dimension_numbers = #tpu.dot_dimension_numbers<[1], [0], [0], [1], [0, 0, 1, 1], [], []>} : vector<18x128xf32>, vector<128x256xf32>, vector<18x256xf32> -> vector<18x256xf32>
    %40 = arith.addf %35, %39 : vector<18x256xf32>
    %41 = vector.extract_strided_slice %40 {offsets = [0, 0], sizes = [18, 128], strides = [1, 1]} : vector<18x256xf32> to vector<18x128xf32>
    %c0_42 = arith.constant 0 : index
    %c0_43 = arith.constant 0 : index
    %42 = vector.load %arg4[%c0_42, %c0_43] : memref<1x128xf32, #tpu.memory_space<vmem>>, vector<1x128xf32>
    %43 = vector.broadcast %42 : vector<1x128xf32> to vector<18x128xf32>
    %44 = arith.addf %41, %43 : vector<18x128xf32>
    %cst_44 = arith.constant 0.000000e+00 : f32
    %45 = vector.broadcast %cst_44 : f32 to vector<18x128xf32>
    %46 = arith.maximumf %44, %45 : vector<18x128xf32>
    %47 = vector.extract_strided_slice %40 {offsets = [0, 128], sizes = [18, 128], strides = [1, 1]} : vector<18x256xf32> to vector<18x128xf32>
    %48 = vector.extract_strided_slice %46 {offsets = [0, 0], sizes = [8, 128], strides = [1, 1]} : vector<18x128xf32> to vector<8x128xf32>
    %c1_45 = arith.constant 1 : index
    %c0_46 = arith.constant 0 : index
    %49 = vector.load %arg8[%c1_45, %c0_46] : memref<20x128xf32, #tpu.memory_space<vmem>>, vector<8x128xf32>
    tpu.vector_store %arg8[%c1_45, %c0_46], %48 {strides = array<i32>} : memref<20x128xf32, #tpu.memory_space<vmem>>, vector<8x128xf32>,
    %50 = vector.extract_strided_slice %46 {offsets = [10, 0], sizes = [8, 128], strides = [1, 1]} : vector<18x128xf32> to vector<8x128xf32>
    %c11_47 = arith.constant 11 : index
    %c0_48 = arith.constant 0 : index
    %51 = vector.load %arg8[%c11_47, %c0_48] : memref<20x128xf32, #tpu.memory_space<vmem>>, vector<8x128xf32>
    tpu.vector_store %arg8[%c11_47, %c0_48], %50 {strides = array<i32>} : memref<20x128xf32, #tpu.memory_space<vmem>>, vector<8x128xf32>,
    %c0_49 = arith.constant 0 : index
    %c0_50 = arith.constant 0 : index
    %52 = vector.load %arg8[%c0_49, %c0_50] : memref<20x128xf32, #tpu.memory_space<vmem>>, vector<18x128xf32>
    %c0_51 = arith.constant 0 : index
    %c0_52 = arith.constant 0 : index
    %c0_53 = arith.constant 0 : index
    %53 = vector.load %arg3[%c0_51, %c0_52, %c0_53] : memref<3x128x128xf32, #tpu.memory_space<vmem>>, vector<1x128x128xf32>
    %54 = vector.shape_cast %53 : vector<1x128x128xf32> to vector<128x128xf32>
    %cst_54 = arith.constant dense<0.000000e+00> : vector<18x128xf32>
    %55 = tpu.matmul %52, %54, %cst_54 {dimension_numbers = #tpu.dot_dimension_numbers<[1], [0], [0], [1], [0, 0, 1, 1], [], []>} : vector<18x128xf32>, vector<128x128xf32>, vector<18x128xf32> -> vector<18x128xf32>
    %c1_55 = arith.constant 1 : index
    %c0_56 = arith.constant 0 : index
    %56 = vector.load %arg8[%c1_55, %c0_56] : memref<20x128xf32, #tpu.memory_space<vmem>>, vector<18x128xf32>
    %c1_57 = arith.constant 1 : index
    %c0_58 = arith.constant 0 : index
    %c0_59 = arith.constant 0 : index
    %57 = vector.load %arg3[%c1_57, %c0_58, %c0_59] : memref<3x128x128xf32, #tpu.memory_space<vmem>>, vector<1x128x128xf32>
    %58 = vector.shape_cast %57 : vector<1x128x128xf32> to vector<128x128xf32>
    %cst_60 = arith.constant dense<0.000000e+00> : vector<18x128xf32>
    %59 = tpu.matmul %56, %58, %cst_60 {dimension_numbers = #tpu.dot_dimension_numbers<[1], [0], [0], [1], [0, 0, 1, 1], [], []>} : vector<18x128xf32>, vector<128x128xf32>, vector<18x128xf32> -> vector<18x128xf32>
    %60 = arith.addf %55, %59 : vector<18x128xf32>
    %c2_61 = arith.constant 2 : index
    %c0_62 = arith.constant 0 : index
    %61 = vector.load %arg8[%c2_61, %c0_62] : memref<20x128xf32, #tpu.memory_space<vmem>>, vector<18x128xf32>
    %c2_63 = arith.constant 2 : index
    %c0_64 = arith.constant 0 : index
    %c0_65 = arith.constant 0 : index
    %62 = vector.load %arg3[%c2_63, %c0_64, %c0_65] : memref<3x128x128xf32, #tpu.memory_space<vmem>>, vector<1x128x128xf32>
    %63 = vector.shape_cast %62 : vector<1x128x128xf32> to vector<128x128xf32>
    %cst_66 = arith.constant dense<0.000000e+00> : vector<18x128xf32>
    %64 = tpu.matmul %61, %63, %cst_66 {dimension_numbers = #tpu.dot_dimension_numbers<[1], [0], [0], [1], [0, 0, 1, 1], [], []>} : vector<18x128xf32>, vector<128x128xf32>, vector<18x128xf32> -> vector<18x128xf32>
    %65 = arith.addf %60, %64 : vector<18x128xf32>
    %66 = arith.addf %65, %47 : vector<18x128xf32>
    %c0_67 = arith.constant 0 : index
    %c0_68 = arith.constant 0 : index
    %67 = vector.load %arg5[%c0_67, %c0_68] : memref<18x128xf32, #tpu.memory_space<vmem>>, vector<18x128xf32>
    %68 = arith.addf %66, %67 : vector<18x128xf32>
    %69 = vector.extract_strided_slice %68 {offsets = [0, 0], sizes = [8, 128], strides = [1, 1]} : vector<18x128xf32> to vector<8x128xf32>
    %c0_69 = arith.constant 0 : index
    %c0_70 = arith.constant 0 : index
    %70 = vector.load %arg6[%c0_69, %c0_70] : memref<16x128xf32, #tpu.memory_space<vmem>>, vector<8x128xf32>
    tpu.vector_store %arg6[%c0_69, %c0_70], %69 {strides = array<i32>} : memref<16x128xf32, #tpu.memory_space<vmem>>, vector<8x128xf32>,
    %71 = vector.extract_strided_slice %68 {offsets = [10, 0], sizes = [8, 128], strides = [1, 1]} : vector<18x128xf32> to vector<8x128xf32>
    %c8 = arith.constant 8 : index
    %c0_71 = arith.constant 0 : index
    %72 = vector.load %arg6[%c8, %c0_71] : memref<16x128xf32, #tpu.memory_space<vmem>>, vector<8x128xf32>
    tpu.vector_store %arg6[%c8, %c0_71], %71 {strides = array<i32>} : memref<16x128xf32, #tpu.memory_space<vmem>>, vector<8x128xf32>,
    return
  }
  func.func @transform_0(%arg0: i32) -> (i32, i32) {
    %c0_i32 = arith.constant 0 : i32
    %c0_i32_0 = arith.constant 0 : i32
    return %arg0, %c0_i32 : i32, i32
  }
  func.func @transform_1(%arg0: i32) -> (i32, i32, i32) {
    %c0_i32 = arith.constant 0 : i32
    %c0_i32_0 = arith.constant 0 : i32
    %c0_i32_1 = arith.constant 0 : i32
    %c0_i32_2 = arith.constant 0 : i32
    return %c0_i32, %c0_i32_0, %c0_i32_1 : i32, i32, i32
  }
  func.func @transform_2(%arg0: i32) -> (i32, i32, i32) {
    %c0_i32 = arith.constant 0 : i32
    %c0_i32_0 = arith.constant 0 : i32
    %c0_i32_1 = arith.constant 0 : i32
    %c0_i32_2 = arith.constant 0 : i32
    return %c0_i32, %c0_i32_0, %c0_i32_1 : i32, i32, i32
  }
  func.func @transform_3(%arg0: i32) -> (i32, i32) {
    %c0_i32 = arith.constant 0 : i32
    %c0_i32_0 = arith.constant 0 : i32
    %c0_i32_1 = arith.constant 0 : i32
    return %c0_i32, %c0_i32_0 : i32, i32
  }
  func.func @transform_4(%arg0: i32) -> (i32, i32) {
    %c0_i32 = arith.constant 0 : i32
    %c0_i32_0 = arith.constant 0 : i32
    %c0_i32_1 = arith.constant 0 : i32
    return %c0_i32, %c0_i32_0 : i32, i32
  }
  func.func @transform_5(%arg0: i32) -> (i32, i32) {
    %c0_i32 = arith.constant 0 : i32
    %c0_i32_0 = arith.constant 0 : i32
    return %arg0, %c0_i32 : i32, i32
  }
}

module attributes {stable_mosaic.version = 11 : i64} {
  func.func @_double_conv_kernel(%arg0: i32, %arg1: memref<16x128xf32, #tpu.memory_space<vmem>>, %arg2: memref<3x128x256xf32, #tpu.memory_space<vmem>>, %arg3: memref<3x128x128xf32, #tpu.memory_space<vmem>>, %arg4: memref<1x128xf32, #tpu.memory_space<vmem>>, %arg5: memref<10x128xf32, #tpu.memory_space<vmem>>, %arg6: memref<8x128xf32, #tpu.memory_space<vmem>>, %arg7: memref<12x128xf32, #tpu.memory_space<vmem>>, %arg8: memref<12x128xf32, #tpu.memory_space<vmem>>) attributes {dimension_semantics = [#tpu.dimension_semantics<parallel>], iteration_bounds = array<i64: 1>, scalar_prefetch = 0 : i64, scratch_operands = 2 : i64, tpu.core_type = #tpu.core_type<tc>, window_params = [{transform_indices = @transform_0, window_bounds = array<i64: 16, 128>}, {pipeline_mode = #tpu.pipeline_mode<synchronous>, transform_indices = @transform_1, window_bounds = array<i64: 3, 128, 256>}, {pipeline_mode = #tpu.pipeline_mode<synchronous>, transform_indices = @transform_2, window_bounds = array<i64: 3, 128, 128>}, {pipeline_mode = #tpu.pipeline_mode<synchronous>, transform_indices = @transform_3, window_bounds = array<i64: 1, 128>}, {pipeline_mode = #tpu.pipeline_mode<synchronous>, transform_indices = @transform_4, window_bounds = array<i64: 10, 128>}, {transform_indices = @transform_5, window_bounds = array<i64: 8, 128>}]} {
    %c0 = arith.constant 0 : index
    %c0_0 = arith.constant 0 : index
    %0 = tpu.strided_load %arg1[%c0, %c0_0] {strides = array<i32: 2, 1>} : memref<16x128xf32, #tpu.memory_space<vmem>>, vector<8x128xf32>
    %c1 = arith.constant 1 : index
    %c0_1 = arith.constant 0 : index
    %1 = tpu.strided_load %arg1[%c1, %c0_1] {strides = array<i32: 2, 1>} : memref<16x128xf32, #tpu.memory_space<vmem>>, vector<8x128xf32>
    %2 = arith.maximumf %0, %1 : vector<8x128xf32>
    %3 = vector.extract_strided_slice %2 {offsets = [0, 16], sizes = [8, 112], strides = [1, 1]} : vector<8x128xf32> to vector<8x112xf32>
    %4 = vector.extract_strided_slice %2 {offsets = [0, 0], sizes = [8, 16], strides = [1, 1]} : vector<8x128xf32> to vector<8x16xf32>
    %5 = tpu.concatenate %3, %4 in 1 : vector<8x112xf32>, vector<8x16xf32> -> vector<8x128xf32>
    %6 = arith.maximumf %2, %5 : vector<8x128xf32>
    %cst = arith.constant 0.000000e+00 : f32
    %7 = vector.broadcast %cst : f32 to vector<1x128xf32>
    %c0_2 = arith.constant 0 : index
    %c0_3 = arith.constant 0 : index
    %8 = vector.load %arg7[%c0_2, %c0_3] : memref<12x128xf32, #tpu.memory_space<vmem>>, vector<1x128xf32>
    tpu.vector_store %arg7[%c0_2, %c0_3], %7 {strides = array<i32>} : memref<12x128xf32, #tpu.memory_space<vmem>>, vector<1x128xf32>,
    %cst_4 = arith.constant 0.000000e+00 : f32
    %9 = vector.broadcast %cst_4 : f32 to vector<1x128xf32>
    %c5 = arith.constant 5 : index
    %c0_5 = arith.constant 0 : index
    %10 = vector.load %arg7[%c5, %c0_5] : memref<12x128xf32, #tpu.memory_space<vmem>>, vector<1x128xf32>
    tpu.vector_store %arg7[%c5, %c0_5], %9 {strides = array<i32>} : memref<12x128xf32, #tpu.memory_space<vmem>>, vector<1x128xf32>,
    %cst_6 = arith.constant 0.000000e+00 : f32
    %11 = vector.broadcast %cst_6 : f32 to vector<1x128xf32>
    %c0_7 = arith.constant 0 : index
    %c0_8 = arith.constant 0 : index
    %12 = vector.load %arg8[%c0_7, %c0_8] : memref<12x128xf32, #tpu.memory_space<vmem>>, vector<1x128xf32>
    tpu.vector_store %arg8[%c0_7, %c0_8], %11 {strides = array<i32>} : memref<12x128xf32, #tpu.memory_space<vmem>>, vector<1x128xf32>,
    %cst_9 = arith.constant 0.000000e+00 : f32
    %13 = vector.broadcast %cst_9 : f32 to vector<1x128xf32>
    %c5_10 = arith.constant 5 : index
    %c0_11 = arith.constant 0 : index
    %14 = vector.load %arg8[%c5_10, %c0_11] : memref<12x128xf32, #tpu.memory_space<vmem>>, vector<1x128xf32>
    tpu.vector_store %arg8[%c5_10, %c0_11], %13 {strides = array<i32>} : memref<12x128xf32, #tpu.memory_space<vmem>>, vector<1x128xf32>,
    %15 = vector.extract_strided_slice %6 {offsets = [0, 0], sizes = [4, 128], strides = [1, 1]} : vector<8x128xf32> to vector<4x128xf32>
    %c1_12 = arith.constant 1 : index
    %c0_13 = arith.constant 0 : index
    %16 = vector.load %arg7[%c1_12, %c0_13] : memref<12x128xf32, #tpu.memory_space<vmem>>, vector<4x128xf32>
    tpu.vector_store %arg7[%c1_12, %c0_13], %15 {strides = array<i32>} : memref<12x128xf32, #tpu.memory_space<vmem>>, vector<4x128xf32>,
    %cst_14 = arith.constant 0.000000e+00 : f32
    %17 = vector.broadcast %cst_14 : f32 to vector<1x128xf32>
    %c6 = arith.constant 6 : index
    %c0_15 = arith.constant 0 : index
    %18 = vector.load %arg7[%c6, %c0_15] : memref<12x128xf32, #tpu.memory_space<vmem>>, vector<1x128xf32>
    tpu.vector_store %arg7[%c6, %c0_15], %17 {strides = array<i32>} : memref<12x128xf32, #tpu.memory_space<vmem>>, vector<1x128xf32>,
    %cst_16 = arith.constant 0.000000e+00 : f32
    %19 = vector.broadcast %cst_16 : f32 to vector<1x128xf32>
    %c11 = arith.constant 11 : index
    %c0_17 = arith.constant 0 : index
    %20 = vector.load %arg7[%c11, %c0_17] : memref<12x128xf32, #tpu.memory_space<vmem>>, vector<1x128xf32>
    tpu.vector_store %arg7[%c11, %c0_17], %19 {strides = array<i32>} : memref<12x128xf32, #tpu.memory_space<vmem>>, vector<1x128xf32>,
    %cst_18 = arith.constant 0.000000e+00 : f32
    %21 = vector.broadcast %cst_18 : f32 to vector<1x128xf32>
    %c6_19 = arith.constant 6 : index
    %c0_20 = arith.constant 0 : index
    %22 = vector.load %arg8[%c6_19, %c0_20] : memref<12x128xf32, #tpu.memory_space<vmem>>, vector<1x128xf32>
    tpu.vector_store %arg8[%c6_19, %c0_20], %21 {strides = array<i32>} : memref<12x128xf32, #tpu.memory_space<vmem>>, vector<1x128xf32>,
    %cst_21 = arith.constant 0.000000e+00 : f32
    %23 = vector.broadcast %cst_21 : f32 to vector<1x128xf32>
    %c11_22 = arith.constant 11 : index
    %c0_23 = arith.constant 0 : index
    %24 = vector.load %arg8[%c11_22, %c0_23] : memref<12x128xf32, #tpu.memory_space<vmem>>, vector<1x128xf32>
    tpu.vector_store %arg8[%c11_22, %c0_23], %23 {strides = array<i32>} : memref<12x128xf32, #tpu.memory_space<vmem>>, vector<1x128xf32>,
    %25 = vector.extract_strided_slice %6 {offsets = [4, 0], sizes = [4, 128], strides = [1, 1]} : vector<8x128xf32> to vector<4x128xf32>
    %c7 = arith.constant 7 : index
    %c0_24 = arith.constant 0 : index
    %26 = vector.load %arg7[%c7, %c0_24] : memref<12x128xf32, #tpu.memory_space<vmem>>, vector<4x128xf32>
    tpu.vector_store %arg7[%c7, %c0_24], %25 {strides = array<i32>} : memref<12x128xf32, #tpu.memory_space<vmem>>, vector<4x128xf32>,
    %c0_25 = arith.constant 0 : index
    %c0_26 = arith.constant 0 : index
    %27 = vector.load %arg7[%c0_25, %c0_26] : memref<12x128xf32, #tpu.memory_space<vmem>>, vector<10x128xf32>
    %c0_27 = arith.constant 0 : index
    %c0_28 = arith.constant 0 : index
    %c0_29 = arith.constant 0 : index
    %28 = vector.load %arg2[%c0_27, %c0_28, %c0_29] : memref<3x128x256xf32, #tpu.memory_space<vmem>>, vector<1x128x256xf32>
    %29 = vector.shape_cast %28 : vector<1x128x256xf32> to vector<128x256xf32>
    %cst_30 = arith.constant dense<0.000000e+00> : vector<10x256xf32>
    %30 = tpu.matmul %27, %29, %cst_30 {dimension_numbers = #tpu.dot_dimension_numbers<[1], [0], [0], [1], [0, 0, 1, 1], [], []>} : vector<10x128xf32>, vector<128x256xf32>, vector<10x256xf32> -> vector<10x256xf32>
    %c1_31 = arith.constant 1 : index
    %c0_32 = arith.constant 0 : index
    %31 = vector.load %arg7[%c1_31, %c0_32] : memref<12x128xf32, #tpu.memory_space<vmem>>, vector<10x128xf32>
    %c1_33 = arith.constant 1 : index
    %c0_34 = arith.constant 0 : index
    %c0_35 = arith.constant 0 : index
    %32 = vector.load %arg2[%c1_33, %c0_34, %c0_35] : memref<3x128x256xf32, #tpu.memory_space<vmem>>, vector<1x128x256xf32>
    %33 = vector.shape_cast %32 : vector<1x128x256xf32> to vector<128x256xf32>
    %cst_36 = arith.constant dense<0.000000e+00> : vector<10x256xf32>
    %34 = tpu.matmul %31, %33, %cst_36 {dimension_numbers = #tpu.dot_dimension_numbers<[1], [0], [0], [1], [0, 0, 1, 1], [], []>} : vector<10x128xf32>, vector<128x256xf32>, vector<10x256xf32> -> vector<10x256xf32>
    %35 = arith.addf %30, %34 : vector<10x256xf32>
    %c2 = arith.constant 2 : index
    %c0_37 = arith.constant 0 : index
    %36 = vector.load %arg7[%c2, %c0_37] : memref<12x128xf32, #tpu.memory_space<vmem>>, vector<10x128xf32>
    %c2_38 = arith.constant 2 : index
    %c0_39 = arith.constant 0 : index
    %c0_40 = arith.constant 0 : index
    %37 = vector.load %arg2[%c2_38, %c0_39, %c0_40] : memref<3x128x256xf32, #tpu.memory_space<vmem>>, vector<1x128x256xf32>
    %38 = vector.shape_cast %37 : vector<1x128x256xf32> to vector<128x256xf32>
    %cst_41 = arith.constant dense<0.000000e+00> : vector<10x256xf32>
    %39 = tpu.matmul %36, %38, %cst_41 {dimension_numbers = #tpu.dot_dimension_numbers<[1], [0], [0], [1], [0, 0, 1, 1], [], []>} : vector<10x128xf32>, vector<128x256xf32>, vector<10x256xf32> -> vector<10x256xf32>
    %40 = arith.addf %35, %39 : vector<10x256xf32>
    %41 = vector.extract_strided_slice %40 {offsets = [0, 0], sizes = [10, 128], strides = [1, 1]} : vector<10x256xf32> to vector<10x128xf32>
    %c0_42 = arith.constant 0 : index
    %c0_43 = arith.constant 0 : index
    %42 = vector.load %arg4[%c0_42, %c0_43] : memref<1x128xf32, #tpu.memory_space<vmem>>, vector<1x128xf32>
    %43 = vector.broadcast %42 : vector<1x128xf32> to vector<10x128xf32>
    %44 = arith.addf %41, %43 : vector<10x128xf32>
    %cst_44 = arith.constant 0.000000e+00 : f32
    %45 = vector.broadcast %cst_44 : f32 to vector<10x128xf32>
    %46 = arith.maximumf %44, %45 : vector<10x128xf32>
    %47 = vector.extract_strided_slice %40 {offsets = [0, 128], sizes = [10, 128], strides = [1, 1]} : vector<10x256xf32> to vector<10x128xf32>
    %48 = vector.extract_strided_slice %46 {offsets = [0, 0], sizes = [4, 128], strides = [1, 1]} : vector<10x128xf32> to vector<4x128xf32>
    %c1_45 = arith.constant 1 : index
    %c0_46 = arith.constant 0 : index
    %49 = vector.load %arg8[%c1_45, %c0_46] : memref<12x128xf32, #tpu.memory_space<vmem>>, vector<4x128xf32>
    tpu.vector_store %arg8[%c1_45, %c0_46], %48 {strides = array<i32>} : memref<12x128xf32, #tpu.memory_space<vmem>>, vector<4x128xf32>,
    %50 = vector.extract_strided_slice %46 {offsets = [6, 0], sizes = [4, 128], strides = [1, 1]} : vector<10x128xf32> to vector<4x128xf32>
    %c7_47 = arith.constant 7 : index
    %c0_48 = arith.constant 0 : index
    %51 = vector.load %arg8[%c7_47, %c0_48] : memref<12x128xf32, #tpu.memory_space<vmem>>, vector<4x128xf32>
    tpu.vector_store %arg8[%c7_47, %c0_48], %50 {strides = array<i32>} : memref<12x128xf32, #tpu.memory_space<vmem>>, vector<4x128xf32>,
    %c0_49 = arith.constant 0 : index
    %c0_50 = arith.constant 0 : index
    %52 = vector.load %arg8[%c0_49, %c0_50] : memref<12x128xf32, #tpu.memory_space<vmem>>, vector<10x128xf32>
    %c0_51 = arith.constant 0 : index
    %c0_52 = arith.constant 0 : index
    %c0_53 = arith.constant 0 : index
    %53 = vector.load %arg3[%c0_51, %c0_52, %c0_53] : memref<3x128x128xf32, #tpu.memory_space<vmem>>, vector<1x128x128xf32>
    %54 = vector.shape_cast %53 : vector<1x128x128xf32> to vector<128x128xf32>
    %cst_54 = arith.constant dense<0.000000e+00> : vector<10x128xf32>
    %55 = tpu.matmul %52, %54, %cst_54 {dimension_numbers = #tpu.dot_dimension_numbers<[1], [0], [0], [1], [0, 0, 1, 1], [], []>} : vector<10x128xf32>, vector<128x128xf32>, vector<10x128xf32> -> vector<10x128xf32>
    %c1_55 = arith.constant 1 : index
    %c0_56 = arith.constant 0 : index
    %56 = vector.load %arg8[%c1_55, %c0_56] : memref<12x128xf32, #tpu.memory_space<vmem>>, vector<10x128xf32>
    %c1_57 = arith.constant 1 : index
    %c0_58 = arith.constant 0 : index
    %c0_59 = arith.constant 0 : index
    %57 = vector.load %arg3[%c1_57, %c0_58, %c0_59] : memref<3x128x128xf32, #tpu.memory_space<vmem>>, vector<1x128x128xf32>
    %58 = vector.shape_cast %57 : vector<1x128x128xf32> to vector<128x128xf32>
    %cst_60 = arith.constant dense<0.000000e+00> : vector<10x128xf32>
    %59 = tpu.matmul %56, %58, %cst_60 {dimension_numbers = #tpu.dot_dimension_numbers<[1], [0], [0], [1], [0, 0, 1, 1], [], []>} : vector<10x128xf32>, vector<128x128xf32>, vector<10x128xf32> -> vector<10x128xf32>
    %60 = arith.addf %55, %59 : vector<10x128xf32>
    %c2_61 = arith.constant 2 : index
    %c0_62 = arith.constant 0 : index
    %61 = vector.load %arg8[%c2_61, %c0_62] : memref<12x128xf32, #tpu.memory_space<vmem>>, vector<10x128xf32>
    %c2_63 = arith.constant 2 : index
    %c0_64 = arith.constant 0 : index
    %c0_65 = arith.constant 0 : index
    %62 = vector.load %arg3[%c2_63, %c0_64, %c0_65] : memref<3x128x128xf32, #tpu.memory_space<vmem>>, vector<1x128x128xf32>
    %63 = vector.shape_cast %62 : vector<1x128x128xf32> to vector<128x128xf32>
    %cst_66 = arith.constant dense<0.000000e+00> : vector<10x128xf32>
    %64 = tpu.matmul %61, %63, %cst_66 {dimension_numbers = #tpu.dot_dimension_numbers<[1], [0], [0], [1], [0, 0, 1, 1], [], []>} : vector<10x128xf32>, vector<128x128xf32>, vector<10x128xf32> -> vector<10x128xf32>
    %65 = arith.addf %60, %64 : vector<10x128xf32>
    %66 = arith.addf %65, %47 : vector<10x128xf32>
    %c0_67 = arith.constant 0 : index
    %c0_68 = arith.constant 0 : index
    %67 = vector.load %arg5[%c0_67, %c0_68] : memref<10x128xf32, #tpu.memory_space<vmem>>, vector<10x128xf32>
    %68 = arith.addf %66, %67 : vector<10x128xf32>
    %69 = vector.extract_strided_slice %68 {offsets = [0, 0], sizes = [4, 128], strides = [1, 1]} : vector<10x128xf32> to vector<4x128xf32>
    %c0_69 = arith.constant 0 : index
    %c0_70 = arith.constant 0 : index
    %70 = vector.load %arg6[%c0_69, %c0_70] : memref<8x128xf32, #tpu.memory_space<vmem>>, vector<4x128xf32>
    tpu.vector_store %arg6[%c0_69, %c0_70], %69 {strides = array<i32>} : memref<8x128xf32, #tpu.memory_space<vmem>>, vector<4x128xf32>,
    %71 = vector.extract_strided_slice %68 {offsets = [6, 0], sizes = [4, 128], strides = [1, 1]} : vector<10x128xf32> to vector<4x128xf32>
    %c4 = arith.constant 4 : index
    %c0_71 = arith.constant 0 : index
    %72 = vector.load %arg6[%c4, %c0_71] : memref<8x128xf32, #tpu.memory_space<vmem>>, vector<4x128xf32>
    tpu.vector_store %arg6[%c4, %c0_71], %71 {strides = array<i32>} : memref<8x128xf32, #tpu.memory_space<vmem>>, vector<4x128xf32>,
    return
  }
  func.func @transform_0(%arg0: i32) -> (i32, i32) {
    %c0_i32 = arith.constant 0 : i32
    %c0_i32_0 = arith.constant 0 : i32
    return %arg0, %c0_i32 : i32, i32
  }
  func.func @transform_1(%arg0: i32) -> (i32, i32, i32) {
    %c0_i32 = arith.constant 0 : i32
    %c0_i32_0 = arith.constant 0 : i32
    %c0_i32_1 = arith.constant 0 : i32
    %c0_i32_2 = arith.constant 0 : i32
    return %c0_i32, %c0_i32_0, %c0_i32_1 : i32, i32, i32
  }
  func.func @transform_2(%arg0: i32) -> (i32, i32, i32) {
    %c0_i32 = arith.constant 0 : i32
    %c0_i32_0 = arith.constant 0 : i32
    %c0_i32_1 = arith.constant 0 : i32
    %c0_i32_2 = arith.constant 0 : i32
    return %c0_i32, %c0_i32_0, %c0_i32_1 : i32, i32, i32
  }
  func.func @transform_3(%arg0: i32) -> (i32, i32) {
    %c0_i32 = arith.constant 0 : i32
    %c0_i32_0 = arith.constant 0 : i32
    %c0_i32_1 = arith.constant 0 : i32
    return %c0_i32, %c0_i32_0 : i32, i32
  }
  func.func @transform_4(%arg0: i32) -> (i32, i32) {
    %c0_i32 = arith.constant 0 : i32
    %c0_i32_0 = arith.constant 0 : i32
    %c0_i32_1 = arith.constant 0 : i32
    return %c0_i32, %c0_i32_0 : i32, i32
  }
  func.func @transform_5(%arg0: i32) -> (i32, i32) {
    %c0_i32 = arith.constant 0 : i32
    %c0_i32_0 = arith.constant 0 : i32
    return %arg0, %c0_i32 : i32, i32
  }
}

module attributes {stable_mosaic.version = 11 : i64} {
  func.func @_double_conv_kernel(%arg0: i32, %arg1: memref<8x128xf32, #tpu.memory_space<vmem>>, %arg2: memref<3x128x256xf32, #tpu.memory_space<vmem>>, %arg3: memref<3x128x128xf32, #tpu.memory_space<vmem>>, %arg4: memref<1x128xf32, #tpu.memory_space<vmem>>, %arg5: memref<6x128xf32, #tpu.memory_space<vmem>>, %arg6: memref<4x128xf32, #tpu.memory_space<vmem>>, %arg7: memref<8x128xf32, #tpu.memory_space<vmem>>, %arg8: memref<8x128xf32, #tpu.memory_space<vmem>>) attributes {dimension_semantics = [#tpu.dimension_semantics<parallel>], iteration_bounds = array<i64: 1>, scalar_prefetch = 0 : i64, scratch_operands = 2 : i64, tpu.core_type = #tpu.core_type<tc>, window_params = [{transform_indices = @transform_0, window_bounds = array<i64: 8, 128>}, {pipeline_mode = #tpu.pipeline_mode<synchronous>, transform_indices = @transform_1, window_bounds = array<i64: 3, 128, 256>}, {pipeline_mode = #tpu.pipeline_mode<synchronous>, transform_indices = @transform_2, window_bounds = array<i64: 3, 128, 128>}, {pipeline_mode = #tpu.pipeline_mode<synchronous>, transform_indices = @transform_3, window_bounds = array<i64: 1, 128>}, {pipeline_mode = #tpu.pipeline_mode<synchronous>, transform_indices = @transform_4, window_bounds = array<i64: 6, 128>}, {transform_indices = @transform_5, window_bounds = array<i64: 4, 128>}]} {
    %c0 = arith.constant 0 : index
    %c0_0 = arith.constant 0 : index
    %0 = tpu.strided_load %arg1[%c0, %c0_0] {strides = array<i32: 2, 1>} : memref<8x128xf32, #tpu.memory_space<vmem>>, vector<4x128xf32>
    %c1 = arith.constant 1 : index
    %c0_1 = arith.constant 0 : index
    %1 = tpu.strided_load %arg1[%c1, %c0_1] {strides = array<i32: 2, 1>} : memref<8x128xf32, #tpu.memory_space<vmem>>, vector<4x128xf32>
    %2 = arith.maximumf %0, %1 : vector<4x128xf32>
    %3 = vector.extract_strided_slice %2 {offsets = [0, 32], sizes = [4, 96], strides = [1, 1]} : vector<4x128xf32> to vector<4x96xf32>
    %4 = vector.extract_strided_slice %2 {offsets = [0, 0], sizes = [4, 32], strides = [1, 1]} : vector<4x128xf32> to vector<4x32xf32>
    %5 = tpu.concatenate %3, %4 in 1 : vector<4x96xf32>, vector<4x32xf32> -> vector<4x128xf32>
    %6 = arith.maximumf %2, %5 : vector<4x128xf32>
    %cst = arith.constant 0.000000e+00 : f32
    %7 = vector.broadcast %cst : f32 to vector<1x128xf32>
    %c0_2 = arith.constant 0 : index
    %c0_3 = arith.constant 0 : index
    %8 = vector.load %arg7[%c0_2, %c0_3] : memref<8x128xf32, #tpu.memory_space<vmem>>, vector<1x128xf32>
    tpu.vector_store %arg7[%c0_2, %c0_3], %7 {strides = array<i32>} : memref<8x128xf32, #tpu.memory_space<vmem>>, vector<1x128xf32>,
    %cst_4 = arith.constant 0.000000e+00 : f32
    %9 = vector.broadcast %cst_4 : f32 to vector<1x128xf32>
    %c3 = arith.constant 3 : index
    %c0_5 = arith.constant 0 : index
    %10 = vector.load %arg7[%c3, %c0_5] : memref<8x128xf32, #tpu.memory_space<vmem>>, vector<1x128xf32>
    tpu.vector_store %arg7[%c3, %c0_5], %9 {strides = array<i32>} : memref<8x128xf32, #tpu.memory_space<vmem>>, vector<1x128xf32>,
    %cst_6 = arith.constant 0.000000e+00 : f32
    %11 = vector.broadcast %cst_6 : f32 to vector<1x128xf32>
    %c0_7 = arith.constant 0 : index
    %c0_8 = arith.constant 0 : index
    %12 = vector.load %arg8[%c0_7, %c0_8] : memref<8x128xf32, #tpu.memory_space<vmem>>, vector<1x128xf32>
    tpu.vector_store %arg8[%c0_7, %c0_8], %11 {strides = array<i32>} : memref<8x128xf32, #tpu.memory_space<vmem>>, vector<1x128xf32>,
    %cst_9 = arith.constant 0.000000e+00 : f32
    %13 = vector.broadcast %cst_9 : f32 to vector<1x128xf32>
    %c3_10 = arith.constant 3 : index
    %c0_11 = arith.constant 0 : index
    %14 = vector.load %arg8[%c3_10, %c0_11] : memref<8x128xf32, #tpu.memory_space<vmem>>, vector<1x128xf32>
    tpu.vector_store %arg8[%c3_10, %c0_11], %13 {strides = array<i32>} : memref<8x128xf32, #tpu.memory_space<vmem>>, vector<1x128xf32>,
    %15 = vector.extract_strided_slice %6 {offsets = [0, 0], sizes = [2, 128], strides = [1, 1]} : vector<4x128xf32> to vector<2x128xf32>
    %c1_12 = arith.constant 1 : index
    %c0_13 = arith.constant 0 : index
    %16 = vector.load %arg7[%c1_12, %c0_13] : memref<8x128xf32, #tpu.memory_space<vmem>>, vector<2x128xf32>
    tpu.vector_store %arg7[%c1_12, %c0_13], %15 {strides = array<i32>} : memref<8x128xf32, #tpu.memory_space<vmem>>, vector<2x128xf32>,
    %cst_14 = arith.constant 0.000000e+00 : f32
    %17 = vector.broadcast %cst_14 : f32 to vector<1x128xf32>
    %c4 = arith.constant 4 : index
    %c0_15 = arith.constant 0 : index
    %18 = vector.load %arg7[%c4, %c0_15] : memref<8x128xf32, #tpu.memory_space<vmem>>, vector<1x128xf32>
    tpu.vector_store %arg7[%c4, %c0_15], %17 {strides = array<i32>} : memref<8x128xf32, #tpu.memory_space<vmem>>, vector<1x128xf32>,
    %cst_16 = arith.constant 0.000000e+00 : f32
    %19 = vector.broadcast %cst_16 : f32 to vector<1x128xf32>
    %c7 = arith.constant 7 : index
    %c0_17 = arith.constant 0 : index
    %20 = vector.load %arg7[%c7, %c0_17] : memref<8x128xf32, #tpu.memory_space<vmem>>, vector<1x128xf32>
    tpu.vector_store %arg7[%c7, %c0_17], %19 {strides = array<i32>} : memref<8x128xf32, #tpu.memory_space<vmem>>, vector<1x128xf32>,
    %cst_18 = arith.constant 0.000000e+00 : f32
    %21 = vector.broadcast %cst_18 : f32 to vector<1x128xf32>
    %c4_19 = arith.constant 4 : index
    %c0_20 = arith.constant 0 : index
    %22 = vector.load %arg8[%c4_19, %c0_20] : memref<8x128xf32, #tpu.memory_space<vmem>>, vector<1x128xf32>
    tpu.vector_store %arg8[%c4_19, %c0_20], %21 {strides = array<i32>} : memref<8x128xf32, #tpu.memory_space<vmem>>, vector<1x128xf32>,
    %cst_21 = arith.constant 0.000000e+00 : f32
    %23 = vector.broadcast %cst_21 : f32 to vector<1x128xf32>
    %c7_22 = arith.constant 7 : index
    %c0_23 = arith.constant 0 : index
    %24 = vector.load %arg8[%c7_22, %c0_23] : memref<8x128xf32, #tpu.memory_space<vmem>>, vector<1x128xf32>
    tpu.vector_store %arg8[%c7_22, %c0_23], %23 {strides = array<i32>} : memref<8x128xf32, #tpu.memory_space<vmem>>, vector<1x128xf32>,
    %25 = vector.extract_strided_slice %6 {offsets = [2, 0], sizes = [2, 128], strides = [1, 1]} : vector<4x128xf32> to vector<2x128xf32>
    %c5 = arith.constant 5 : index
    %c0_24 = arith.constant 0 : index
    %26 = vector.load %arg7[%c5, %c0_24] : memref<8x128xf32, #tpu.memory_space<vmem>>, vector<2x128xf32>
    tpu.vector_store %arg7[%c5, %c0_24], %25 {strides = array<i32>} : memref<8x128xf32, #tpu.memory_space<vmem>>, vector<2x128xf32>,
    %c0_25 = arith.constant 0 : index
    %c0_26 = arith.constant 0 : index
    %27 = vector.load %arg7[%c0_25, %c0_26] : memref<8x128xf32, #tpu.memory_space<vmem>>, vector<6x128xf32>
    %c0_27 = arith.constant 0 : index
    %c0_28 = arith.constant 0 : index
    %c0_29 = arith.constant 0 : index
    %28 = vector.load %arg2[%c0_27, %c0_28, %c0_29] : memref<3x128x256xf32, #tpu.memory_space<vmem>>, vector<1x128x256xf32>
    %29 = vector.shape_cast %28 : vector<1x128x256xf32> to vector<128x256xf32>
    %cst_30 = arith.constant dense<0.000000e+00> : vector<6x256xf32>
    %30 = tpu.matmul %27, %29, %cst_30 {dimension_numbers = #tpu.dot_dimension_numbers<[1], [0], [0], [1], [0, 0, 1, 1], [], []>} : vector<6x128xf32>, vector<128x256xf32>, vector<6x256xf32> -> vector<6x256xf32>
    %c1_31 = arith.constant 1 : index
    %c0_32 = arith.constant 0 : index
    %31 = vector.load %arg7[%c1_31, %c0_32] : memref<8x128xf32, #tpu.memory_space<vmem>>, vector<6x128xf32>
    %c1_33 = arith.constant 1 : index
    %c0_34 = arith.constant 0 : index
    %c0_35 = arith.constant 0 : index
    %32 = vector.load %arg2[%c1_33, %c0_34, %c0_35] : memref<3x128x256xf32, #tpu.memory_space<vmem>>, vector<1x128x256xf32>
    %33 = vector.shape_cast %32 : vector<1x128x256xf32> to vector<128x256xf32>
    %cst_36 = arith.constant dense<0.000000e+00> : vector<6x256xf32>
    %34 = tpu.matmul %31, %33, %cst_36 {dimension_numbers = #tpu.dot_dimension_numbers<[1], [0], [0], [1], [0, 0, 1, 1], [], []>} : vector<6x128xf32>, vector<128x256xf32>, vector<6x256xf32> -> vector<6x256xf32>
    %35 = arith.addf %30, %34 : vector<6x256xf32>
    %c2 = arith.constant 2 : index
    %c0_37 = arith.constant 0 : index
    %36 = vector.load %arg7[%c2, %c0_37] : memref<8x128xf32, #tpu.memory_space<vmem>>, vector<6x128xf32>
    %c2_38 = arith.constant 2 : index
    %c0_39 = arith.constant 0 : index
    %c0_40 = arith.constant 0 : index
    %37 = vector.load %arg2[%c2_38, %c0_39, %c0_40] : memref<3x128x256xf32, #tpu.memory_space<vmem>>, vector<1x128x256xf32>
    %38 = vector.shape_cast %37 : vector<1x128x256xf32> to vector<128x256xf32>
    %cst_41 = arith.constant dense<0.000000e+00> : vector<6x256xf32>
    %39 = tpu.matmul %36, %38, %cst_41 {dimension_numbers = #tpu.dot_dimension_numbers<[1], [0], [0], [1], [0, 0, 1, 1], [], []>} : vector<6x128xf32>, vector<128x256xf32>, vector<6x256xf32> -> vector<6x256xf32>
    %40 = arith.addf %35, %39 : vector<6x256xf32>
    %41 = vector.extract_strided_slice %40 {offsets = [0, 0], sizes = [6, 128], strides = [1, 1]} : vector<6x256xf32> to vector<6x128xf32>
    %c0_42 = arith.constant 0 : index
    %c0_43 = arith.constant 0 : index
    %42 = vector.load %arg4[%c0_42, %c0_43] : memref<1x128xf32, #tpu.memory_space<vmem>>, vector<1x128xf32>
    %43 = vector.broadcast %42 : vector<1x128xf32> to vector<6x128xf32>
    %44 = arith.addf %41, %43 : vector<6x128xf32>
    %cst_44 = arith.constant 0.000000e+00 : f32
    %45 = vector.broadcast %cst_44 : f32 to vector<6x128xf32>
    %46 = arith.maximumf %44, %45 : vector<6x128xf32>
    %47 = vector.extract_strided_slice %40 {offsets = [0, 128], sizes = [6, 128], strides = [1, 1]} : vector<6x256xf32> to vector<6x128xf32>
    %48 = vector.extract_strided_slice %46 {offsets = [0, 0], sizes = [2, 128], strides = [1, 1]} : vector<6x128xf32> to vector<2x128xf32>
    %c1_45 = arith.constant 1 : index
    %c0_46 = arith.constant 0 : index
    %49 = vector.load %arg8[%c1_45, %c0_46] : memref<8x128xf32, #tpu.memory_space<vmem>>, vector<2x128xf32>
    tpu.vector_store %arg8[%c1_45, %c0_46], %48 {strides = array<i32>} : memref<8x128xf32, #tpu.memory_space<vmem>>, vector<2x128xf32>,
    %50 = vector.extract_strided_slice %46 {offsets = [4, 0], sizes = [2, 128], strides = [1, 1]} : vector<6x128xf32> to vector<2x128xf32>
    %c5_47 = arith.constant 5 : index
    %c0_48 = arith.constant 0 : index
    %51 = vector.load %arg8[%c5_47, %c0_48] : memref<8x128xf32, #tpu.memory_space<vmem>>, vector<2x128xf32>
    tpu.vector_store %arg8[%c5_47, %c0_48], %50 {strides = array<i32>} : memref<8x128xf32, #tpu.memory_space<vmem>>, vector<2x128xf32>,
    %c0_49 = arith.constant 0 : index
    %c0_50 = arith.constant 0 : index
    %52 = vector.load %arg8[%c0_49, %c0_50] : memref<8x128xf32, #tpu.memory_space<vmem>>, vector<6x128xf32>
    %c0_51 = arith.constant 0 : index
    %c0_52 = arith.constant 0 : index
    %c0_53 = arith.constant 0 : index
    %53 = vector.load %arg3[%c0_51, %c0_52, %c0_53] : memref<3x128x128xf32, #tpu.memory_space<vmem>>, vector<1x128x128xf32>
    %54 = vector.shape_cast %53 : vector<1x128x128xf32> to vector<128x128xf32>
    %cst_54 = arith.constant dense<0.000000e+00> : vector<6x128xf32>
    %55 = tpu.matmul %52, %54, %cst_54 {dimension_numbers = #tpu.dot_dimension_numbers<[1], [0], [0], [1], [0, 0, 1, 1], [], []>} : vector<6x128xf32>, vector<128x128xf32>, vector<6x128xf32> -> vector<6x128xf32>
    %c1_55 = arith.constant 1 : index
    %c0_56 = arith.constant 0 : index
    %56 = vector.load %arg8[%c1_55, %c0_56] : memref<8x128xf32, #tpu.memory_space<vmem>>, vector<6x128xf32>
    %c1_57 = arith.constant 1 : index
    %c0_58 = arith.constant 0 : index
    %c0_59 = arith.constant 0 : index
    %57 = vector.load %arg3[%c1_57, %c0_58, %c0_59] : memref<3x128x128xf32, #tpu.memory_space<vmem>>, vector<1x128x128xf32>
    %58 = vector.shape_cast %57 : vector<1x128x128xf32> to vector<128x128xf32>
    %cst_60 = arith.constant dense<0.000000e+00> : vector<6x128xf32>
    %59 = tpu.matmul %56, %58, %cst_60 {dimension_numbers = #tpu.dot_dimension_numbers<[1], [0], [0], [1], [0, 0, 1, 1], [], []>} : vector<6x128xf32>, vector<128x128xf32>, vector<6x128xf32> -> vector<6x128xf32>
    %60 = arith.addf %55, %59 : vector<6x128xf32>
    %c2_61 = arith.constant 2 : index
    %c0_62 = arith.constant 0 : index
    %61 = vector.load %arg8[%c2_61, %c0_62] : memref<8x128xf32, #tpu.memory_space<vmem>>, vector<6x128xf32>
    %c2_63 = arith.constant 2 : index
    %c0_64 = arith.constant 0 : index
    %c0_65 = arith.constant 0 : index
    %62 = vector.load %arg3[%c2_63, %c0_64, %c0_65] : memref<3x128x128xf32, #tpu.memory_space<vmem>>, vector<1x128x128xf32>
    %63 = vector.shape_cast %62 : vector<1x128x128xf32> to vector<128x128xf32>
    %cst_66 = arith.constant dense<0.000000e+00> : vector<6x128xf32>
    %64 = tpu.matmul %61, %63, %cst_66 {dimension_numbers = #tpu.dot_dimension_numbers<[1], [0], [0], [1], [0, 0, 1, 1], [], []>} : vector<6x128xf32>, vector<128x128xf32>, vector<6x128xf32> -> vector<6x128xf32>
    %65 = arith.addf %60, %64 : vector<6x128xf32>
    %66 = arith.addf %65, %47 : vector<6x128xf32>
    %c0_67 = arith.constant 0 : index
    %c0_68 = arith.constant 0 : index
    %67 = vector.load %arg5[%c0_67, %c0_68] : memref<6x128xf32, #tpu.memory_space<vmem>>, vector<6x128xf32>
    %68 = arith.addf %66, %67 : vector<6x128xf32>
    %69 = vector.extract_strided_slice %68 {offsets = [0, 0], sizes = [2, 128], strides = [1, 1]} : vector<6x128xf32> to vector<2x128xf32>
    %c0_69 = arith.constant 0 : index
    %c0_70 = arith.constant 0 : index
    %70 = vector.load %arg6[%c0_69, %c0_70] : memref<4x128xf32, #tpu.memory_space<vmem>>, vector<2x128xf32>
    tpu.vector_store %arg6[%c0_69, %c0_70], %69 {strides = array<i32>} : memref<4x128xf32, #tpu.memory_space<vmem>>, vector<2x128xf32>,
    %71 = vector.extract_strided_slice %68 {offsets = [4, 0], sizes = [2, 128], strides = [1, 1]} : vector<6x128xf32> to vector<2x128xf32>
    %c2_71 = arith.constant 2 : index
    %c0_72 = arith.constant 0 : index
    %72 = vector.load %arg6[%c2_71, %c0_72] : memref<4x128xf32, #tpu.memory_space<vmem>>, vector<2x128xf32>
    tpu.vector_store %arg6[%c2_71, %c0_72], %71 {strides = array<i32>} : memref<4x128xf32, #tpu.memory_space<vmem>>, vector<2x128xf32>,
    return
  }
  func.func @transform_0(%arg0: i32) -> (i32, i32) {
    %c0_i32 = arith.constant 0 : i32
    %c0_i32_0 = arith.constant 0 : i32
    return %arg0, %c0_i32 : i32, i32
  }
  func.func @transform_1(%arg0: i32) -> (i32, i32, i32) {
    %c0_i32 = arith.constant 0 : i32
    %c0_i32_0 = arith.constant 0 : i32
    %c0_i32_1 = arith.constant 0 : i32
    %c0_i32_2 = arith.constant 0 : i32
    return %c0_i32, %c0_i32_0, %c0_i32_1 : i32, i32, i32
  }
  func.func @transform_2(%arg0: i32) -> (i32, i32, i32) {
    %c0_i32 = arith.constant 0 : i32
    %c0_i32_0 = arith.constant 0 : i32
    %c0_i32_1 = arith.constant 0 : i32
    %c0_i32_2 = arith.constant 0 : i32
    return %c0_i32, %c0_i32_0, %c0_i32_1 : i32, i32, i32
  }
  func.func @transform_3(%arg0: i32) -> (i32, i32) {
    %c0_i32 = arith.constant 0 : i32
    %c0_i32_0 = arith.constant 0 : i32
    %c0_i32_1 = arith.constant 0 : i32
    return %c0_i32, %c0_i32_0 : i32, i32
  }
  func.func @transform_4(%arg0: i32) -> (i32, i32) {
    %c0_i32 = arith.constant 0 : i32
    %c0_i32_0 = arith.constant 0 : i32
    %c0_i32_1 = arith.constant 0 : i32
    return %c0_i32, %c0_i32_0 : i32, i32
  }
  func.func @transform_5(%arg0: i32) -> (i32, i32) {
    %c0_i32 = arith.constant 0 : i32
    %c0_i32_0 = arith.constant 0 : i32
    return %arg0, %c0_i32 : i32, i32
  }
}

</mosaic_0001>

<llo_original>
// kernel: tile.43
$region0: #{tile.43}
  #allocation0 [shape = 's32[1]{0}', space=sflag, size = 0x4, scoped, tag = 'scoped memory for tile.43']
  %s0 = inlined_call_operand.vmem [shape: f32[8], index: 0, kind: input, shape index: {}]
  %s1 = inlined_call_operand.vmem [shape: f32[16,8], index: 1, kind: output, shape index: {}]
  // Predicated region
  $region2: #{tile.43} parent=0 // pred_check
    _
  $region3: #{tile.43} parent=0 // pred_check_branch
    %3 = sbr.rel (0) target = $region5
  $region4: #{tile.43} parent=0 // pred_region
    _
  $region5: #{tile.43} parent=0 // pred_fallthru
    _
  %v4 = vld [vmem:[%s0] ss:$0 sm:$0xff]
  %5 = vst [vmem:[%s1] sm:$0xff] %v4
  %s6 = scalar_lea.vmem %s1, 8
  %7 = vst [vmem:[%s6] sm:$0xff] %v4

// kernel: tile.44
$region0: #{tile.44}
  %s0 = inlined_call_operand.vmem [shape: f32[16,8], index: 0, kind: input, shape index: {}]
  %s1 = inlined_call_operand.vmem [shape: f32[1,128], index: 1, kind: output, shape index: {}]
  $region1: #{tile.44} parent=0
    #allocation0 [shape = 'u8[4096]{0}', space=vmem, size = 0x1000, scoped, tag = 'scoped mem for output reshape']
    %v2 = vld [vmem:[%s0] sm:$0x1]
    %vm3 = vcmask 64512
    %4 = vst.msk [vmem:[#allocation0] sm:$0x1] %vm3, %v2
    %s5 = scalar_lea.vmem %s0, 15
    %v6 = vld [vmem:[%s5] sm:$0x1]
    %7 = vrot.lane.b32.xlu0 %v6, 120
    %v8 = vpop.permute.xlu0 %7
    %vm9 = vcmask 1048512
    %10 = vst.msk [vmem:[#allocation0] sm:$0x1] %vm9, %v8
    %s11 = scalar_lea.vmem %s0, 14
    %v12 = vld [vmem:[%s11] sm:$0x1]
    %13 = vrot.lane.b32.xlu0 %v12, 112
    %v14 = vpop.permute.xlu0 %13
    %vm15 = vcmask 982912
    %16 = vst.msk [vmem:[#allocation0] sm:$0x1] %vm15, %v14
    %s17 = scalar_lea.vmem %s0, 13
    %v18 = vld [vmem:[%s17] sm:$0x1]
    %19 = vrot.lane.b32.xlu0 %v18, 104
    %v20 = vpop.permute.xlu0 %19
    %vm21 = vcmask 917312
    %22 = vst.msk [vmem:[#allocation0] sm:$0x1] %vm21, %v20
    %s23 = scalar_lea.vmem %s0, 12
    %v24 = vld [vmem:[%s23] sm:$0x1]
    %25 = vrot.lane.b32.xlu0 %v24, 96
    %v26 = vpop.permute.xlu0 %25
    %vm27 = vcmask 851712
    %28 = vst.msk [vmem:[#allocation0] sm:$0x1] %vm27, %v26
    %s29 = scalar_lea.vmem %s0, 11
    %v30 = vld [vmem:[%s29] sm:$0x1]
    %31 = vrot.lane.b32.xlu0 %v30, 88
    %v32 = vpop.permute.xlu0 %31
    %vm33 = vcmask 786112
    %34 = vst.msk [vmem:[#allocation0] sm:$0x1] %vm33, %v32
    %s35 = scalar_lea.vmem %s0, 10
    %v36 = vld [vmem:[%s35] sm:$0x1]
    %37 = vrot.lane.b32.xlu0 %v36, 80
    %v38 = vpop.permute.xlu0 %37
    %vm39 = vcmask 720512
    %40 = vst.msk [vmem:[#allocation0] sm:$0x1] %vm39, %v38
    %s41 = scalar_lea.vmem %s0, 9
    %v42 = vld [vmem:[%s41] sm:$0x1]
    %43 = vrot.lane.b32.xlu0 %v42, 72
    %v44 = vpop.permute.xlu0 %43
    %vm45 = vcmask 654912
    %46 = vst.msk [vmem:[#allocation0] sm:$0x1] %vm45, %v44
    %s47 = scalar_lea.vmem %s0, 8
    %v48 = vld [vmem:[%s47] sm:$0x1]
    %49 = vrot.lane.b32.xlu0 %v48, 64
    %v50 = vpop.permute.xlu0 %49
    %vm51 = vcmask 589312
    %52 = vst.msk [vmem:[#allocation0] sm:$0x1] %vm51, %v50
    %s53 = scalar_lea.vmem %s0, 7
    %v54 = vld [vmem:[%s53] sm:$0x1]
    %55 = vrot.lane.b32.xlu0 %v54, 56
    %v56 = vpop.permute.xlu0 %55
    %vm57 = vcmask 523712
    %58 = vst.msk [vmem:[#allocation0] sm:$0x1] %vm57, %v56
    %s59 = scalar_lea.vmem %s0, 6
    %v60 = vld [vmem:[%s59] sm:$0x1]
    %61 = vrot.lane.b32.xlu0 %v60, 48
    %v62 = vpop.permute.xlu0 %61
    %vm63 = vcmask 458112
    %64 = vst.msk [vmem:[#allocation0] sm:$0x1] %vm63, %v62
    %s65 = scalar_lea.vmem %s0, 5
    %v66 = vld [vmem:[%s65] sm:$0x1]
    %67 = vrot.lane.b32.xlu0 %v66, 40
    %v68 = vpop.permute.xlu0 %67
    %vm69 = vcmask 392512
    %70 = vst.msk [vmem:[#allocation0] sm:$0x1] %vm69, %v68
    %s71 = scalar_lea.vmem %s0, 4
    %v72 = vld [vmem:[%s71] sm:$0x1]
    %73 = vrot.lane.b32.xlu0 %v72, 32
    %v74 = vpop.permute.xlu0 %73
    %vm75 = vcmask 326912
    %76 = vst.msk [vmem:[#allocation0] sm:$0x1] %vm75, %v74
    %s77 = scalar_lea.vmem %s0, 3
    %v78 = vld [vmem:[%s77] sm:$0x1]
    %79 = vrot.lane.b32.xlu0 %v78, 24
    %v80 = vpop.permute.xlu0 %79
    %vm81 = vcmask 261312
    %82 = vst.msk [vmem:[#allocation0] sm:$0x1] %vm81, %v80
    %s83 = scalar_lea.vmem %s0, 2
    %v84 = vld [vmem:[%s83] sm:$0x1]
    %85 = vrot.lane.b32.xlu0 %v84, 16
    %v86 = vpop.permute.xlu0 %85
    %vm87 = vcmask 195712
    %88 = vst.msk [vmem:[#allocation0] sm:$0x1] %vm87, %v86
    %s89 = scalar_lea.vmem %s0, 1
    %v90 = vld [vmem:[%s89] sm:$0x1]
    %91 = vrot.lane.b32.xlu0 %v90, 8
    %v92 = vpop.permute.xlu0 %91
    %vm93 = vcmask 130112
    %94 = vst.msk [vmem:[#allocation0] sm:$0x1] %vm93, %v92
    %s96 = sshllo.u32 0, 1
    %v98 = vld [vmem:[#allocation0] sm:%s96]
    %s99 = sshllo.u32 0, 1
    %100 = vst [vmem:[%s1] sm:%s99] %v98

// kernel: tile.49
$region0: #{tile.49}
  %s0 = inlined_call_operand.vmem [shape: f32[2,18,128], index: 0, kind: input, shape index: {}]
  %s1 = inlined_call_operand.vmem [shape: f32[36,128], index: 1, kind: output, shape index: {}]
  %v2 = vld [vmem:[%s0] sm:$0xff]
  %3 = vst [vmem:[%s1] sm:$0xff] %v2
  %s4 = scalar_lea.vmem %s0, 8
  %v5 = vld [vmem:[%s4] sm:$0xff]
  %s6 = scalar_lea.vmem %s1, 8
  %7 = vst [vmem:[%s6] sm:$0xff] %v5
  %s8 = scalar_lea.vmem %s0, 16
  %v9 = vld [vmem:[%s8] sm:$0x3]
  %s10 = scalar_lea.vmem %s1, 16
  %11 = vst [vmem:[%s10] sm:$0x3] %v9
  %s12 = scalar_lea.vmem %s0, 24
  %v13 = vld [vmem:[%s12] sm:$0xff]
  %s14 = scalar_lea.vmem %s1, 18
  %15 = vst [vmem:[%s14] sm:$0xff] %v13
  %s16 = scalar_lea.vmem %s0, 32
  %v17 = vld [vmem:[%s16] sm:$0xff]
  %s18 = scalar_lea.vmem %s1, 26
  %19 = vst [vmem:[%s18] sm:$0xff] %v17
  %s20 = scalar_lea.vmem %s0, 40
  %v21 = vld [vmem:[%s20] sm:$0x3]
  %s22 = scalar_lea.vmem %s1, 34
  %23 = vst [vmem:[%s22] sm:$0x3] %v21

// kernel: generative_encoder_fwd.4
$region0: #{generative_encoder_fwd.4}
  #allocation0 [shape = 'u32[]', space=smem, size = 0x4, offset = 0x4, fixed_abs, tag = 'smem constant byte address 0x4 - core index']
  #allocation1 [shape = 'u32[144,128]{1,0:T(1,128)}', space=vmem, size = 0x12000, scoped, tag = 'internal scratch']
  #allocation2 [shape = 'f32[36,64]{1,0:T(8,128)}', space=vmem, size = 0x5000, scoped, tag = 'scratch operand']
  #allocation3 [shape = 'f32[36,128]{1,0:T(8,128)}', space=vmem, size = 0x5000, scoped, tag = 'scratch operand']
  %s0 = inlined_call_operand.vmem [shape: f32[32,64], index: 0, kind: input, shape index: {}]
  %s1 = inlined_call_operand.vmem [shape: f32[3,64,256], index: 1, kind: input, shape index: {}]
  %s2 = inlined_call_operand.vmem [shape: f32[3,128,128], index: 2, kind: input, shape index: {}]
  %s3 = inlined_call_operand.vmem [shape: f32[1,128], index: 3, kind: input, shape index: {}]
  %s4 = inlined_call_operand.vmem [shape: f32[34,128], index: 4, kind: input, shape index: {}]
  %s5 = inlined_call_operand.vmem [shape: f32[32,128], index: 5, kind: output, shape index: {}]
  %s6 = sld [smem:[#allocation0]]
  $region30: #{generative_encoder_fwd.4} parent=0
    _
  %s8 = ssub.s32 1, %s6
  %s9 = scalar_select 0, %s8, %s6
  // Predicated region
  $region2: #{generative_encoder_fwd.4} parent=0 // pred_check
    _
  $region3: #{generative_encoder_fwd.4} parent=0 // pred_check_branch
    %11 = sbr.rel (0) target = $region5
  $region4: #{generative_encoder_fwd.4} parent=0 // pred_region
    _
  $region5: #{generative_encoder_fwd.4} parent=0 // pred_fallthru
    _
  // Predicated region
  $region6: #{generative_encoder_fwd.4} parent=0 // pred_check
    _
  $region7: #{generative_encoder_fwd.4} parent=0 // pred_check_branch
    %13 = sbr.rel (0) target = $region9
  $region8: #{generative_encoder_fwd.4} parent=0 // pred_region
    _
  $region9: #{generative_encoder_fwd.4} parent=0 // pred_fallthru
    _
  // Predicated region
  $region10: #{generative_encoder_fwd.4} parent=0 // pred_check
    _
  $region11: #{generative_encoder_fwd.4} parent=0 // pred_check_branch
    %15 = sbr.rel (0) target = $region13
  $region12: #{generative_encoder_fwd.4} parent=0 // pred_region
    _
  $region13: #{generative_encoder_fwd.4} parent=0 // pred_fallthru
    _
  // Predicated region
  $region14: #{generative_encoder_fwd.4} parent=0 // pred_check
    _
  $region15: #{generative_encoder_fwd.4} parent=0 // pred_check_branch
    %17 = sbr.rel (0) target = $region17
  $region16: #{generative_encoder_fwd.4} parent=0 // pred_region
    _
  $region17: #{generative_encoder_fwd.4} parent=0 // pred_fallthru
    _
  // Predicated region
  $region18: #{generative_encoder_fwd.4} parent=0 // pred_check
    _
  $region19: #{generative_encoder_fwd.4} parent=0 // pred_check_branch
    %19 = sbr.rel (0) target = $region21
  $region20: #{generative_encoder_fwd.4} parent=0 // pred_region
    _
  $region21: #{generative_encoder_fwd.4} parent=0 // pred_fallthru
    _
  %v20 = vld [vmem:[%s0] sm:$0xff]
  %v21 = vld [vmem:[%s0 + $0x8] sm:$0xff]
  %v22 = vld [vmem:[%s0 + $0x10] sm:$0xff]
  %v23 = vld [vmem:[%s0 + $0x18] sm:$0xff]
  %vm24 = vcmask 516096
  %25 = vst.msk [vmem:[#allocation2] sm:$0x1] %vm24, 0.0
  %26 = vst.msk [vmem:[#allocation2 + $0x11] sm:$0x1] %vm24, 0.0
  %27 = vst [vmem:[#allocation3] sm:$0x1] 0.0
  %28 = vst [vmem:[#allocation3 + $0x11] sm:$0x1] 0.0
  %vm29 = vcmask 523264
  %30 = vst.msk [vmem:[#allocation2 + $0x1] sm:$0xff] %vm29, %v20
  %31 = vst.msk [vmem:[#allocation2 + $0x9] sm:$0xff] %vm29, %v21
  %32 = vst.msk [vmem:[#allocation2 + $0x12] sm:$0x1] %vm24, 0.0
  %33 = vst.msk [vmem:[#allocation2 + $0x23] sm:$0x1] %vm24, 0.0
  %34 = vst [vmem:[#allocation3 + $0x12] sm:$0x1] 0.0
  %35 = vst [vmem:[#allocation3 + $0x23] sm:$0x1] 0.0
  %36 = vst.msk [vmem:[#allocation2 + $0x13] sm:$0xff] %vm29, %v22
  %37 = vst.msk [vmem:[#allocation2 + $0x1b] sm:$0xff] %vm29, %v23
  %v38 = vld [vmem:[#allocation2] sm:$0xff]
  %v39 = vld [vmem:[#allocation2 + $0x8] sm:$0xff]
  %v40 = vld [vmem:[#allocation2 + $0x10] sm:$0xff]
  %v41 = vld [vmem:[#allocation2 + $0x18] sm:$0xff]
  %v42 = vld [vmem:[#allocation2 + $0x20] sm:$0x3]
  %v43 = vld [vmem:[%s1] sm:$0xff]
  %v44 = vld [vmem:[%s1 + $0x8] sm:$0xff]
  %v45 = vld [vmem:[%s1 + $0x10] sm:$0xff]
  %v46 = vld [vmem:[%s1 + $0x18] sm:$0xff]
  %v47 = vld [vmem:[%s1 + $0x20] sm:$0xff]
  %v48 = vld [vmem:[%s1 + $0x28] sm:$0xff]
  %v49 = vld [vmem:[%s1 + $0x30] sm:$0xff]
  %v50 = vld [vmem:[%s1 + $0x38] sm:$0xff]
  %v51 = vld [vmem:[%s1 + $0x40] sm:$0xff]
  %v52 = vld [vmem:[%s1 + $0x48] sm:$0xff]
  %v53 = vld [vmem:[%s1 + $0x50] sm:$0xff]
  %v54 = vld [vmem:[%s1 + $0x58] sm:$0xff]
  %v55 = vld [vmem:[%s1 + $0x60] sm:$0xff]
  %v56 = vld [vmem:[%s1 + $0x68] sm:$0xff]
  %v57 = vld [vmem:[%s1 + $0x70] sm:$0xff]
  %v58 = vld [vmem:[%s1 + $0x78] sm:$0xff]
  %v59 = vld [vmem:[#allocation2 + $0x1] sm:$0xff]
  %v60 = vld [vmem:[#allocation2 + $0x9] sm:$0xff]
  %v61 = vld [vmem:[#allocation2 + $0x11] sm:$0xff]
  %v62 = vld [vmem:[#allocation2 + $0x19] sm:$0xff]
  %v63 = vld [vmem:[#allocation2 + $0x21] sm:$0x3]
  %s64 = scalar_lea.vmem %s1, 128
  %v65 = vld [vmem:[%s64] sm:$0xff]
  %v66 = vld [vmem:[%s64 + $0x8] sm:$0xff]
  %v67 = vld [vmem:[%s64 + $0x10] sm:$0xff]
  %v68 = vld [vmem:[%s64 + $0x18] sm:$0xff]
  %v69 = vld [vmem:[%s64 + $0x20] sm:$0xff]
  %v70 = vld [vmem:[%s64 + $0x28] sm:$0xff]
  %v71 = vld [vmem:[%s64 + $0x30] sm:$0xff]
  %v72 = vld [vmem:[%s64 + $0x38] sm:$0xff]
  %v73 = vld [vmem:[%s64 + $0x40] sm:$0xff]
  %v74 = vld [vmem:[%s64 + $0x48] sm:$0xff]
  %v75 = vld [vmem:[%s64 + $0x50] sm:$0xff]
  %v76 = vld [vmem:[%s64 + $0x58] sm:$0xff]
  %v77 = vld [vmem:[%s64 + $0x60] sm:$0xff]
  %v78 = vld [vmem:[%s64 + $0x68] sm:$0xff]
  %v79 = vld [vmem:[%s64 + $0x70] sm:$0xff]
  %v80 = vld [vmem:[%s64 + $0x78] sm:$0xff]
  %v82 = vsel %vm29, %v59, 0
  %v85 = vsel %vm29, %v60, 0
  %v88 = vsel %vm29, %v61, 0
  %v91 = vsel %vm29, %v62, 0
  %v94 = vsel %vm29, %v63, 0
  %96 = vmatprep.subr.mxu0 %v66
  %97 = vmatpush1.msra.mxu0 %v65
  %98 = vmatprep.subr.mxu0 %v68
  %99 = vmatpush1.msra.mxu0 %v67
  %100 = vmatprep.subr.mxu0 %v70
  %101 = vmatpush1.msra.mxu0 %v69
  %102 = vmatprep.subr.mxu0 %v72
  %103 = vmatpush1.msra.mxu0 %v71
  %104 = vmatprep.subr.mxu0 %v74
  %105 = vmatpush1.msra.mxu0 %v73
  %106 = vmatprep.subr.mxu0 %v76
  %107 = vmatpush1.msra.mxu0 %v75
  %108 = vmatprep.subr.mxu0 %v78
  %109 = vmatpush1.msra.mxu0 %v77
  %110 = vmatprep.subr.mxu0 %v80
  %111 = vmatpush1.msra.mxu0 %v79
  %112 = vmatprep.subr.mxu0 0.0
  %113 = vmatpush1.msra.mxu0 0.0
  %114 = vmatprep.subr.mxu0 0.0
  %115 = vmatpush1.msra.mxu0 0.0
  %116 = vmatprep.subr.mxu0 0.0
  %117 = vmatpush1.msra.mxu0 0.0
  %118 = vmatprep.subr.mxu0 0.0
  %119 = vmatpush1.msra.mxu0 0.0
  %120 = vmatprep.subr.mxu0 0.0
  %121 = vmatpush1.msra.mxu0 0.0
  %122 = vmatprep.subr.mxu0 0.0
  %123 = vmatpush1.msra.mxu0 0.0
  %124 = vmatprep.subr.mxu0 0.0
  %125 = vmatpush1.msra.mxu0 0.0
  %126 = vmatprep.subr.mxu0 0.0
  %127 = vmatpush1.msra.mxu0 0.0
  %128 = vmatprep.subr.mxu0 0.0
  %129 = vmatpush1.msra.mxu0 0.0
  %130 = vmatprep.subr.mxu0 0.0
  %131 = vmatpush1.msra.mxu0 0.0
  %132 = vmatprep.subr.mxu0 0.0
  %133 = vmatpush1.msra.mxu0 0.0
  %134 = vmatprep.subr.mxu0 0.0
  %135 = vmatpush1.msra.mxu0 0.0
  %136 = vmatprep.subr.mxu0 0.0
  %137 = vmatpush1.msra.mxu0 0.0
  %138 = vmatprep.subr.mxu0 0.0
  %139 = vmatpush1.msra.mxu0 0.0
  %140 = vmatprep.subr.mxu0 0.0
  %141 = vmatpush1.msra.mxu0 0.0
  %142 = vmatprep.subr.mxu0 0.0
  %143 = vmatpush1.msra.mxu0 0.0
  %144 = vmatprep.subr.mxu0 0.0
  %145 = vmatpush1.msra.mxu0 0.0
  %146 = vmatprep.subr.mxu0 0.0
  %147 = vmatpush1.msra.mxu0 0.0
  %148 = vmatprep.subr.mxu0 0.0
  %149 = vmatpush1.msra.mxu0 0.0
  %150 = vmatprep.subr.mxu0 0.0
  %151 = vmatpush1.msra.mxu0 0.0
  %152 = vmatprep.subr.mxu0 0.0
  %153 = vmatpush1.msra.mxu0 0.0
  %154 = vmatprep.subr.mxu0 0.0
  %155 = vmatpush1.msra.mxu0 0.0
  %156 = vmatprep.subr.mxu0 0.0
  %157 = vmatpush1.msra.mxu0 0.0
  %158 = vmatprep.subr.mxu0 0.0
  %159 = vmatpush1.msra.mxu0 0.0
  %160 = vmatprep.mubr.f32.mxu0 0.0
  %161 = vmatmul.mubr.f32.gmra.mrb[0].mxu0 %v82
  %v162 = vpop.f32.mrb[0].mxu0
  %v163 = vadd.f32 0.0, %v162
  %v164 = vpop.f32.mrb[0].mxu0
  %v165 = vadd.f32 0.0, %v164
  %166 = vmatprep.mubr.f32.mxu0 0.0
  %167 = vmatmul.mubr.f32.gmra.mrb[0].mxu0 %v85
  %v168 = vpop.f32.mrb[0].mxu0
  %v169 = vadd.f32 0.0, %v168
  %v170 = vpop.f32.mrb[0].mxu0
  %v171 = vadd.f32 0.0, %v170
  %172 = vmatprep.mubr.f32.mxu0 0.0
  %173 = vmatmul.mubr.f32.gmra.mrb[0].mxu0 %v88
  %v174 = vpop.f32.mrb[0].mxu0
  %v175 = vadd.f32 0.0, %v174
  %v176 = vpop.f32.mrb[0].mxu0
  %v177 = vadd.f32 0.0, %v176
  %178 = vmatprep.mubr.f32.mxu0 0.0
  %179 = vmatmul.mubr.f32.gmra.mrb[0].mxu0 %v91
  %v180 = vpop.f32.mrb[0].mxu0
  %v181 = vadd.f32 0.0, %v180
  %v182 = vpop.f32.mrb[0].mxu0
  %v183 = vadd.f32 0.0, %v182
  %184 = vmatprep.mubr.f32.mxu0 0.0
  %185 = vmatmul.mubr.f32.gmra.mrb[0].mxu0 %v94
  %v186 = vpop.f32.mrb[0].mxu0
  %v187 = vadd.f32 0.0, %v186
  %v188 = vpop.f32.mrb[0].mxu0
  %v189 = vadd.f32 0.0, %v188
  %190 = vdwg.mxu0
  %v192 = vsel %vm29, %v38, 0
  %v195 = vsel %vm29, %v39, 0
  %v198 = vsel %vm29, %v40, 0
  %v201 = vsel %vm29, %v41, 0
  %v204 = vsel %vm29, %v42, 0
  %206 = vmatprep.subr.mxu0 %v44
  %207 = vmatpush1.msra.mxu0 %v43
  %208 = vmatprep.subr.mxu0 %v46
  %209 = vmatpush1.msra.mxu0 %v45
  %210 = vmatprep.subr.mxu0 %v48
  %211 = vmatpush1.msra.mxu0 %v47
  %212 = vmatprep.subr.mxu0 %v50
  %213 = vmatpush1.msra.mxu0 %v49
  %214 = vmatprep.subr.mxu0 %v52
  %215 = vmatpush1.msra.mxu0 %v51
  %216 = vmatprep.subr.mxu0 %v54
  %217 = vmatpush1.msra.mxu0 %v53
  %218 = vmatprep.subr.mxu0 %v56
  %219 = vmatpush1.msra.mxu0 %v55
  %220 = vmatprep.subr.mxu0 %v58
  %221 = vmatpush1.msra.mxu0 %v57
  %222 = vmatprep.subr.mxu0 0.0
  %223 = vmatpush1.msra.mxu0 0.0
  %224 = vmatprep.subr.mxu0 0.0
  %225 = vmatpush1.msra.mxu0 0.0
  %226 = vmatprep.subr.mxu0 0.0
  %227 = vmatpush1.msra.mxu0 0.0
  %228 = vmatprep.subr.mxu0 0.0
  %229 = vmatpush1.msra.mxu0 0.0
  %230 = vmatprep.subr.mxu0 0.0
  %231 = vmatpush1.msra.mxu0 0.0
  %232 = vmatprep.subr.mxu0 0.0
  %233 = vmatpush1.msra.mxu0 0.0
  %234 = vmatprep.subr.mxu0 0.0
  %235 = vmatpush1.msra.mxu0 0.0
  %236 = vmatprep.subr.mxu0 0.0
  %237 = vmatpush1.msra.mxu0 0.0
  %238 = vmatprep.subr.mxu0 0.0
  %239 = vmatpush1.msra.mxu0 0.0
  %240 = vmatprep.subr.mxu0 0.0
  %241 = vmatpush1.msra.mxu0 0.0
  %242 = vmatprep.subr.mxu0 0.0
  %243 = vmatpush1.msra.mxu0 0.0
  %244 = vmatprep.subr.mxu0 0.0
  %245 = vmatpush1.msra.mxu0 0.0
  %246 = vmatprep.subr.mxu0 0.0
  %247 = vmatpush1.msra.mxu0 0.0
  %248 = vmatprep.subr.mxu0 0.0
  %249 = vmatpush1.msra.mxu0 0.0
  %250 = vmatprep.subr.mxu0 0.0
  %251 = vmatpush1.msra.mxu0 0.0
  %252 = vmatprep.subr.mxu0 0.0
  %253 = vmatpush1.msra.mxu0 0.0
  %254 = vmatprep.subr.mxu0 0.0
  %255 = vmatpush1.msra.mxu0 0.0
  %256 = vmatprep.subr.mxu0 0.0
  %257 = vmatpush1.msra.mxu0 0.0
  %258 = vmatprep.subr.mxu0 0.0
  %259 = vmatpush1.msra.mxu0 0.0
  %260 = vmatprep.subr.mxu0 0.0
  %261 = vmatpush1.msra.mxu0 0.0
  %262 = vmatprep.subr.mxu0 0.0
  %263 = vmatpush1.msra.mxu0 0.0
  %264 = vmatprep.subr.mxu0 0.0
  %265 = vmatpush1.msra.mxu0 0.0
  %266 = vmatprep.subr.mxu0 0.0
  %267 = vmatpush1.msra.mxu0 0.0
  %268 = vmatprep.subr.mxu0 0.0
  %269 = vmatpush1.msra.mxu0 0.0
  %270 = vmatprep.mubr.f32.mxu0 0.0
  %271 = vmatmul.mubr.f32.gmra.mrb[0].mxu0 %v192
  %v272 = vpop.f32.mrb[0].mxu0
  %v273 = vadd.f32 %v163, %v272
  %v274 = vpop.f32.mrb[0].mxu0
  %v275 = vadd.f32 %v165, %v274
  %276 = vmatprep.mubr.f32.mxu0 0.0
  %277 = vmatmul.mubr.f32.gmra.mrb[0].mxu0 %v195
  %v278 = vpop.f32.mrb[0].mxu0
  %v279 = vadd.f32 %v169, %v278
  %v280 = vpop.f32.mrb[0].mxu0
  %v281 = vadd.f32 %v171, %v280
  %282 = vmatprep.mubr.f32.mxu0 0.0
  %283 = vmatmul.mubr.f32.gmra.mrb[0].mxu0 %v198
  %v284 = vpop.f32.mrb[0].mxu0
  %v285 = vadd.f32 %v175, %v284
  %v286 = vpop.f32.mrb[0].mxu0
  %v287 = vadd.f32 %v177, %v286
  %288 = vmatprep.mubr.f32.mxu0 0.0
  %289 = vmatmul.mubr.f32.gmra.mrb[0].mxu0 %v201
  %v290 = vpop.f32.mrb[0].mxu0
  %v291 = vadd.f32 %v181, %v290
  %v292 = vpop.f32.mrb[0].mxu0
  %v293 = vadd.f32 %v183, %v292
  %294 = vmatprep.mubr.f32.mxu0 0.0
  %295 = vmatmul.mubr.f32.gmra.mrb[0].mxu0 %v204
  %v296 = vpop.f32.mrb[0].mxu0
  %v297 = vadd.f32 %v187, %v296
  %v298 = vpop.f32.mrb[0].mxu0
  %v299 = vadd.f32 %v189, %v298
  %300 = vdwg.mxu0
  %v301 = vld [vmem:[#allocation2 + $0x2] sm:$0xff]
  %v302 = vld [vmem:[#allocation2 + $0xa] sm:$0xff]
  %v303 = vld [vmem:[#allocation2 + $0x12] sm:$0xff]
  %v304 = vld [vmem:[#allocation2 + $0x1a] sm:$0xff]
  %v305 = vld [vmem:[#allocation2 + $0x22] sm:$0x3]
  %s306 = scalar_lea.vmem %s1, 256
  %v307 = vld [vmem:[%s306] sm:$0xff]
  %v308 = vld [vmem:[%s306 + $0x8] sm:$0xff]
  %v309 = vld [vmem:[%s306 + $0x10] sm:$0xff]
  %v310 = vld [vmem:[%s306 + $0x18] sm:$0xff]
  %v311 = vld [vmem:[%s306 + $0x20] sm:$0xff]
  %v312 = vld [vmem:[%s306 + $0x28] sm:$0xff]
  %v313 = vld [vmem:[%s306 + $0x30] sm:$0xff]
  %v314 = vld [vmem:[%s306 + $0x38] sm:$0xff]
  %v315 = vld [vmem:[%s306 + $0x40] sm:$0xff]
  %v316 = vld [vmem:[%s306 + $0x48] sm:$0xff]
  %v317 = vld [vmem:[%s306 + $0x50] sm:$0xff]
  %v318 = vld [vmem:[%s306 + $0x58] sm:$0xff]
  %v319 = vld [vmem:[%s306 + $0x60] sm:$0xff]
  %v320 = vld [vmem:[%s306 + $0x68] sm:$0xff]
  %v321 = vld [vmem:[%s306 + $0x70] sm:$0xff]
  %v322 = vld [vmem:[%s306 + $0x78] sm:$0xff]
  %v324 = vsel %vm29, %v301, 0
  %v327 = vsel %vm29, %v302, 0
  %v330 = vsel %vm29, %v303, 0
  %v333 = vsel %vm29, %v304, 0
  %v336 = vsel %vm29, %v305, 0
  %338 = vmatprep.subr.mxu0 %v308
  %339 = vmatpush1.msra.mxu0 %v307
  %340 = vmatprep.subr.mxu0 %v310
  %341 = vmatpush1.msra.mxu0 %v309
  %342 = vmatprep.subr.mxu0 %v312
  %343 = vmatpush1.msra.mxu0 %v311
  %344 = vmatprep.subr.mxu0 %v314
  %345 = vmatpush1.msra.mxu0 %v313
  %346 = vmatprep.subr.mxu0 %v316
  %347 = vmatpush1.msra.mxu0 %v315
  %348 = vmatprep.subr.mxu0 %v318
  %349 = vmatpush1.msra.mxu0 %v317
  %350 = vmatprep.subr.mxu0 %v320
  %351 = vmatpush1.msra.mxu0 %v319
  %352 = vmatprep.subr.mxu0 %v322
  %353 = vmatpush1.msra.mxu0 %v321
  %354 = vmatprep.subr.mxu0 0.0
  %355 = vmatpush1.msra.mxu0 0.0
  %356 = vmatprep.subr.mxu0 0.0
  %357 = vmatpush1.msra.mxu0 0.0
  %358 = vmatprep.subr.mxu0 0.0
  %359 = vmatpush1.msra.mxu0 0.0
  %360 = vmatprep.subr.mxu0 0.0
  %361 = vmatpush1.msra.mxu0 0.0
  %362 = vmatprep.subr.mxu0 0.0
  %363 = vmatpush1.msra.mxu0 0.0
  %364 = vmatprep.subr.mxu0 0.0
  %365 = vmatpush1.msra.mxu0 0.0
  %366 = vmatprep.subr.mxu0 0.0
  %367 = vmatpush1.msra.mxu0 0.0
  %368 = vmatprep.subr.mxu0 0.0
  %369 = vmatpush1.msra.mxu0 0.0
  %370 = vmatprep.subr.mxu0 0.0
  %371 = vmatpush1.msra.mxu0 0.0
  %372 = vmatprep.subr.mxu0 0.0
  %373 = vmatpush1.msra.mxu0 0.0
  %374 = vmatprep.subr.mxu0 0.0
  %375 = vmatpush1.msra.mxu0 0.0
  %376 = vmatprep.subr.mxu0 0.0
  %377 = vmatpush1.msra.mxu0 0.0
  %378 = vmatprep.subr.mxu0 0.0
  %379 = vmatpush1.msra.mxu0 0.0
  %380 = vmatprep.subr.mxu0 0.0
  %381 = vmatpush1.msra.mxu0 0.0
  %382 = vmatprep.subr.mxu0 0.0
  %383 = vmatpush1.msra.mxu0 0.0
  %384 = vmatprep.subr.mxu0 0.0
  %385 = vmatpush1.msra.mxu0 0.0
  %386 = vmatprep.subr.mxu0 0.0
  %387 = vmatpush1.msra.mxu0 0.0
  %388 = vmatprep.subr.mxu0 0.0
  %389 = vmatpush1.msra.mxu0 0.0
  %390 = vmatprep.subr.mxu0 0.0
  %391 = vmatpush1.msra.mxu0 0.0
  %392 = vmatprep.subr.mxu0 0.0
  %393 = vmatpush1.msra.mxu0 0.0
  %394 = vmatprep.subr.mxu0 0.0
  %395 = vmatpush1.msra.mxu0 0.0
  %396 = vmatprep.subr.mxu0 0.0
  %397 = vmatpush1.msra.mxu0 0.0
  %398 = vmatprep.subr.mxu0 0.0
  %399 = vmatpush1.msra.mxu0 0.0
  %400 = vmatprep.subr.mxu0 0.0
  %401 = vmatpush1.msra.mxu0 0.0
  %402 = vmatprep.mubr.f32.mxu0 0.0
  %403 = vmatmul.mubr.f32.gmra.mrb[0].mxu0 %v324
  %v404 = vpop.f32.mrb[0].mxu0
  %v405 = vadd.f32 0.0, %v404
  %v406 = vpop.f32.mrb[0].mxu0
  %v407 = vadd.f32 0.0, %v406
  %408 = vmatprep.mubr.f32.mxu0 0.0
  %409 = vmatmul.mubr.f32.gmra.mrb[0].mxu0 %v327
  %v410 = vpop.f32.mrb[0].mxu0
  %v411 = vadd.f32 0.0, %v410
  %v412 = vpop.f32.mrb[0].mxu0
  %v413 = vadd.f32 0.0, %v412
  %414 = vmatprep.mubr.f32.mxu0 0.0
  %415 = vmatmul.mubr.f32.gmra.mrb[0].mxu0 %v330
  %v416 = vpop.f32.mrb[0].mxu0
  %v417 = vadd.f32 0.0, %v416
  %v418 = vpop.f32.mrb[0].mxu0
  %v419 = vadd.f32 0.0, %v418
  %420 = vmatprep.mubr.f32.mxu0 0.0
  %421 = vmatmul.mubr.f32.gmra.mrb[0].mxu0 %v333
  %v422 = vpop.f32.mrb[0].mxu0
  %v423 = vadd.f32 0.0, %v422
  %v424 = vpop.f32.mrb[0].mxu0
  %v425 = vadd.f32 0.0, %v424
  %426 = vmatprep.mubr.f32.mxu0 0.0
  %427 = vmatmul.mubr.f32.gmra.mrb[0].mxu0 %v336
  %v428 = vpop.f32.mrb[0].mxu0
  %v429 = vadd.f32 0.0, %v428
  %v430 = vpop.f32.mrb[0].mxu0
  %v431 = vadd.f32 0.0, %v430
  %432 = vdwg.mxu0
  %v433 = vadd.f32 %v273, %v405
  %v434 = vadd.f32 %v275, %v407
  %v435 = vadd.f32 %v279, %v411
  %v436 = vadd.f32 %v281, %v413
  %v437 = vadd.f32 %v285, %v417
  %v438 = vadd.f32 %v287, %v419
  %v439 = vadd.f32 %v291, %v423
  %v440 = vadd.f32 %v293, %v425
  %v441 = vadd.f32 %v297, %v429
  %v442 = vadd.f32 %v299, %v431
  %v443 = vld [vmem:[%s3] sm:$0x1]
  %v445 = vlaneseq
  %v446 = vshrl.u32 %v445, 7
  %v447 = vsub.s32 0, %v446
  %v448 = vrot.slane %v443, %v447
  %v450 = vadd.f32 %v433, %v448
  %v451 = vadd.f32 %v435, %v448
  %v452 = vadd.f32 %v437, %v448
  %v453 = vadd.f32 %v439, %v448
  %v454 = vadd.f32 %v441, %v448
  %v455 = vmax.f32 %v450, 0.0
  %v456 = vmax.f32 %v451, 0.0
  %v457 = vmax.f32 %v452, 0.0
  %v458 = vmax.f32 %v453, 0.0
  %v459 = vmax.f32 %v454, 0.0
  %460 = vst [vmem:[#allocation3 + $0x1] sm:$0xff] %v455
  %461 = vst [vmem:[#allocation3 + $0x9] sm:$0xff] %v456
  %462 = vst [vmem:[#allocation3 + $0x11] sm:$0xfc] %v457
  %463 = vst [vmem:[#allocation3 + $0x19] sm:$0xff] %v458
  %464 = vst [vmem:[#allocation3 + $0x21] sm:$0x3] %v459
  %v465 = vld [vmem:[#allocation3] sm:$0xff]
  %v466 = vld [vmem:[#allocation3 + $0x8] sm:$0xff]
  %v467 = vld [vmem:[#allocation3 + $0x10] sm:$0xff]
  %v468 = vld [vmem:[#allocation3 + $0x18] sm:$0xff]
  %v469 = vld [vmem:[#allocation3 + $0x20] sm:$0x3]
  %v470 = vld [vmem:[%s2] sm:$0xff]
  %v471 = vld [vmem:[%s2 + $0x8] sm:$0xff]
  %v472 = vld [vmem:[%s2 + $0x10] sm:$0xff]
  %v473 = vld [vmem:[%s2 + $0x18] sm:$0xff]
  %v474 = vld [vmem:[%s2 + $0x20] sm:$0xff]
  %v475 = vld [vmem:[%s2 + $0x28] sm:$0xff]
  %v476 = vld [vmem:[%s2 + $0x30] sm:$0xff]
  %v477 = vld [vmem:[%s2 + $0x38] sm:$0xff]
  %v478 = vld [vmem:[%s2 + $0x40] sm:$0xff]
  %v479 = vld [vmem:[%s2 + $0x48] sm:$0xff]
  %v480 = vld [vmem:[%s2 + $0x50] sm:$0xff]
  %v481 = vld [vmem:[%s2 + $0x58] sm:$0xff]
  %v482 = vld [vmem:[%s2 + $0x60] sm:$0xff]
  %v483 = vld [vmem:[%s2 + $0x68] sm:$0xff]
  %v484 = vld [vmem:[%s2 + $0x70] sm:$0xff]
  %v485 = vld [vmem:[%s2 + $0x78] sm:$0xff]
  %v486 = vld [vmem:[#allocation3 + $0x1] sm:$0xff]
  %v487 = vld [vmem:[#allocation3 + $0x9] sm:$0xff]
  %v488 = vld [vmem:[#allocation3 + $0x11] sm:$0xff]
  %v489 = vld [vmem:[#allocation3 + $0x19] sm:$0xff]
  %v490 = vld [vmem:[#allocation3 + $0x21] sm:$0x3]
  %s491 = scalar_lea.vmem %s2, 128
  %v492 = vld [vmem:[%s491] sm:$0xff]
  %v493 = vld [vmem:[%s491 + $0x8] sm:$0xff]
  %v494 = vld [vmem:[%s491 + $0x10] sm:$0xff]
  %v495 = vld [vmem:[%s491 + $0x18] sm:$0xff]
  %v496 = vld [vmem:[%s491 + $0x20] sm:$0xff]
  %v497 = vld [vmem:[%s491 + $0x28] sm:$0xff]
  %v498 = vld [vmem:[%s491 + $0x30] sm:$0xff]
  %v499 = vld [vmem:[%s491 + $0x38] sm:$0xff]
  %v500 = vld [vmem:[%s491 + $0x40] sm:$0xff]
  %v501 = vld [vmem:[%s491 + $0x48] sm:$0xff]
  %v502 = vld [vmem:[%s491 + $0x50] sm:$0xff]
  %v503 = vld [vmem:[%s491 + $0x58] sm:$0xff]
  %v504 = vld [vmem:[%s491 + $0x60] sm:$0xff]
  %v505 = vld [vmem:[%s491 + $0x68] sm:$0xff]
  %v506 = vld [vmem:[%s491 + $0x70] sm:$0xff]
  %v507 = vld [vmem:[%s491 + $0x78] sm:$0xff]
  %508 = vmatprep.subr.mxu0 0.0
  %509 = vmatpush1.msra.mxu0 %v492
  %510 = vmatprep.subr.mxu0 0.0
  %511 = vmatpush1.msra.mxu0 %v493
  %512 = vmatprep.subr.mxu0 0.0
  %513 = vmatpush1.msra.mxu0 %v494
  %514 = vmatprep.subr.mxu0 0.0
  %515 = vmatpush1.msra.mxu0 %v495
  %516 = vmatprep.subr.mxu0 0.0
  %517 = vmatpush1.msra.mxu0 %v496
  %518 = vmatprep.subr.mxu0 0.0
  %519 = vmatpush1.msra.mxu0 %v497
  %520 = vmatprep.subr.mxu0 0.0
  %521 = vmatpush1.msra.mxu0 %v498
  %522 = vmatprep.subr.mxu0 0.0
  %523 = vmatpush1.msra.mxu0 %v499
  %524 = vmatprep.subr.mxu0 0.0
  %525 = vmatpush1.msra.mxu0 %v500
  %526 = vmatprep.subr.mxu0 0.0
  %527 = vmatpush1.msra.mxu0 %v501
  %528 = vmatprep.subr.mxu0 0.0
  %529 = vmatpush1.msra.mxu0 %v502
  %530 = vmatprep.subr.mxu0 0.0
  %531 = vmatpush1.msra.mxu0 %v503
  %532 = vmatprep.subr.mxu0 0.0
  %533 = vmatpush1.msra.mxu0 %v504
  %534 = vmatprep.subr.mxu0 0.0
  %535 = vmatpush1.msra.mxu0 %v505
  %536 = vmatprep.subr.mxu0 0.0
  %537 = vmatpush1.msra.mxu0 %v506
  %538 = vmatprep.subr.mxu0 0.0
  %539 = vmatpush1.msra.mxu0 %v507
  %540 = vmatprep.subr.mxu0 0.0
  %541 = vmatpush1.msra.mxu0 0.0
  %542 = vmatprep.subr.mxu0 0.0
  %543 = vmatpush1.msra.mxu0 0.0
  %544 = vmatprep.subr.mxu0 0.0
  %545 = vmatpush1.msra.mxu0 0.0
  %546 = vmatprep.subr.mxu0 0.0
  %547 = vmatpush1.msra.mxu0 0.0
  %548 = vmatprep.subr.mxu0 0.0
  %549 = vmatpush1.msra.mxu0 0.0
  %550 = vmatprep.subr.mxu0 0.0
  %551 = vmatpush1.msra.mxu0 0.0
  %552 = vmatprep.subr.mxu0 0.0
  %553 = vmatpush1.msra.mxu0 0.0
  %554 = vmatprep.subr.mxu0 0.0
  %555 = vmatpush1.msra.mxu0 0.0
  %556 = vmatprep.subr.mxu0 0.0
  %557 = vmatpush1.msra.mxu0 0.0
  %558 = vmatprep.subr.mxu0 0.0
  %559 = vmatpush1.msra.mxu0 0.0
  %560 = vmatprep.subr.mxu0 0.0
  %561 = vmatpush1.msra.mxu0 0.0
  %562 = vmatprep.subr.mxu0 0.0
  %563 = vmatpush1.msra.mxu0 0.0
  %564 = vmatprep.subr.mxu0 0.0
  %565 = vmatpush1.msra.mxu0 0.0
  %566 = vmatprep.subr.mxu0 0.0
  %567 = vmatpush1.msra.mxu0 0.0
  %568 = vmatprep.subr.mxu0 0.0
  %569 = vmatpush1.msra.mxu0 0.0
  %570 = vmatprep.subr.mxu0 0.0
  %571 = vmatpush1.msra.mxu0 0.0
  %572 = vmatprep.mubr.f32.mxu0 0.0
  %573 = vmatmul.mubr.f32.gmra.mrb[0].mxu0 %v486
  %v574 = vpop.f32.mrb[0].mxu0
  %v575 = vadd.f32 0.0, %v574
  %v576 = vpop.f32.mrb[0].mxu0
  %577 = vmatprep.mubr.f32.mxu0 0.0
  %578 = vmatmul.mubr.f32.gmra.mrb[0].mxu0 %v487
  %v579 = vpop.f32.mrb[0].mxu0
  %v580 = vadd.f32 0.0, %v579
  %v581 = vpop.f32.mrb[0].mxu0
  %582 = vmatprep.mubr.f32.mxu0 0.0
  %583 = vmatmul.mubr.f32.gmra.mrb[0].mxu0 %v488
  %v584 = vpop.f32.mrb[0].mxu0
  %v585 = vadd.f32 0.0, %v584
  %v586 = vpop.f32.mrb[0].mxu0
  %587 = vmatprep.mubr.f32.mxu0 0.0
  %588 = vmatmul.mubr.f32.gmra.mrb[0].mxu0 %v489
  %v589 = vpop.f32.mrb[0].mxu0
  %v590 = vadd.f32 0.0, %v589
  %v591 = vpop.f32.mrb[0].mxu0
  %592 = vmatprep.mubr.f32.mxu0 0.0
  %593 = vmatmul.mubr.f32.gmra.mrb[0].mxu0 %v490
  %v594 = vpop.f32.mrb[0].mxu0
  %v595 = vadd.f32 0.0, %v594
  %v596 = vpop.f32.mrb[0].mxu0
  %597 = vdwg.mxu0
  %598 = vmatprep.subr.mxu0 0.0
  %599 = vmatpush1.msra.mxu0 %v470
  %600 = vmatprep.subr.mxu0 0.0
  %601 = vmatpush1.msra.mxu0 %v471
  %602 = vmatprep.subr.mxu0 0.0
  %603 = vmatpush1.msra.mxu0 %v472
  %604 = vmatprep.subr.mxu0 0.0
  %605 = vmatpush1.msra.mxu0 %v473
  %606 = vmatprep.subr.mxu0 0.0
  %607 = vmatpush1.msra.mxu0 %v474
  %608 = vmatprep.subr.mxu0 0.0
  %609 = vmatpush1.msra.mxu0 %v475
  %610 = vmatprep.subr.mxu0 0.0
  %611 = vmatpush1.msra.mxu0 %v476
  %612 = vmatprep.subr.mxu0 0.0
  %613 = vmatpush1.msra.mxu0 %v477
  %614 = vmatprep.subr.mxu0 0.0
  %615 = vmatpush1.msra.mxu0 %v478
  %616 = vmatprep.subr.mxu0 0.0
  %617 = vmatpush1.msra.mxu0 %v479
  %618 = vmatprep.subr.mxu0 0.0
  %619 = vmatpush1.msra.mxu0 %v480
  %620 = vmatprep.subr.mxu0 0.0
  %621 = vmatpush1.msra.mxu0 %v481
  %622 = vmatprep.subr.mxu0 0.0
  %623 = vmatpush1.msra.mxu0 %v482
  %624 = vmatprep.subr.mxu0 0.0
  %625 = vmatpush1.msra.mxu0 %v483
  %626 = vmatprep.subr.mxu0 0.0
  %627 = vmatpush1.msra.mxu0 %v484
  %628 = vmatprep.subr.mxu0 0.0
  %629 = vmatpush1.msra.mxu0 %v485
  %630 = vmatprep.subr.mxu0 0.0
  %631 = vmatpush1.msra.mxu0 0.0
  %632 = vmatprep.subr.mxu0 0.0
  %633 = vmatpush1.msra.mxu0 0.0
  %634 = vmatprep.subr.mxu0 0.0
  %635 = vmatpush1.msra.mxu0 0.0
  %636 = vmatprep.subr.mxu0 0.0
  %637 = vmatpush1.msra.mxu0 0.0
  %638 = vmatprep.subr.mxu0 0.0
  %639 = vmatpush1.msra.mxu0 0.0
  %640 = vmatprep.subr.mxu0 0.0
  %641 = vmatpush1.msra.mxu0 0.0
  %642 = vmatprep.subr.mxu0 0.0
  %643 = vmatpush1.msra.mxu0 0.0
  %644 = vmatprep.subr.mxu0 0.0
  %645 = vmatpush1.msra.mxu0 0.0
  %646 = vmatprep.subr.mxu0 0.0
  %647 = vmatpush1.msra.mxu0 0.0
  %648 = vmatprep.subr.mxu0 0.0
  %649 = vmatpush1.msra.mxu0 0.0
  %650 = vmatprep.subr.mxu0 0.0
  %651 = vmatpush1.msra.mxu0 0.0
  %652 = vmatprep.subr.mxu0 0.0
  %653 = vmatpush1.msra.mxu0 0.0
  %654 = vmatprep.subr.mxu0 0.0
  %655 = vmatpush1.msra.mxu0 0.0
  %656 = vmatprep.subr.mxu0 0.0
  %657 = vmatpush1.msra.mxu0 0.0
  %658 = vmatprep.subr.mxu0 0.0
  %659 = vmatpush1.msra.mxu0 0.0
  %660 = vmatprep.subr.mxu0 0.0
  %661 = vmatpush1.msra.mxu0 0.0
  %662 = vmatprep.mubr.f32.mxu0 0.0
  %663 = vmatmul.mubr.f32.gmra.mrb[0].mxu0 %v465
  %v664 = vpop.f32.mrb[0].mxu0
  %v665 = vadd.f32 %v575, %v664
  %v666 = vpop.f32.mrb[0].mxu0
  %667 = vmatprep.mubr.f32.mxu0 0.0
  %668 = vmatmul.mubr.f32.gmra.mrb[0].mxu0 %v466
  %v669 = vpop.f32.mrb[0].mxu0
  %v670 = vadd.f32 %v580, %v669
  %v671 = vpop.f32.mrb[0].mxu0
  %672 = vmatprep.mubr.f32.mxu0 0.0
  %673 = vmatmul.mubr.f32.gmra.mrb[0].mxu0 %v467
  %v674 = vpop.f32.mrb[0].mxu0
  %v675 = vadd.f32 %v585, %v674
  %v676 = vpop.f32.mrb[0].mxu0
  %677 = vmatprep.mubr.f32.mxu0 0.0
  %678 = vmatmul.mubr.f32.gmra.mrb[0].mxu0 %v468
  %v679 = vpop.f32.mrb[0].mxu0
  %v680 = vadd.f32 %v590, %v679
  %v681 = vpop.f32.mrb[0].mxu0
  %682 = vmatprep.mubr.f32.mxu0 0.0
  %683 = vmatmul.mubr.f32.gmra.mrb[0].mxu0 %v469
  %v684 = vpop.f32.mrb[0].mxu0
  %v685 = vadd.f32 %v595, %v684
  %v686 = vpop.f32.mrb[0].mxu0
  %687 = vdwg.mxu0
  %v688 = vld [vmem:[#allocation3 + $0x2] sm:$0xff]
  %v689 = vld [vmem:[#allocation3 + $0xa] sm:$0xff]
  %v690 = vld [vmem:[#allocation3 + $0x12] sm:$0xff]
  %v691 = vld [vmem:[#allocation3 + $0x1a] sm:$0xff]
  %v692 = vld [vmem:[#allocation3 + $0x22] sm:$0x3]
  %s693 = scalar_lea.vmem %s2, 256
  %v694 = vld [vmem:[%s693] sm:$0xff]
  %v695 = vld [vmem:[%s693 + $0x8] sm:$0xff]
  %v696 = vld [vmem:[%s693 + $0x10] sm:$0xff]
  %v697 = vld [vmem:[%s693 + $0x18] sm:$0xff]
  %v698 = vld [vmem:[%s693 + $0x20] sm:$0xff]
  %v699 = vld [vmem:[%s693 + $0x28] sm:$0xff]
  %v700 = vld [vmem:[%s693 + $0x30] sm:$0xff]
  %v701 = vld [vmem:[%s693 + $0x38] sm:$0xff]
  %v702 = vld [vmem:[%s693 + $0x40] sm:$0xff]
  %v703 = vld [vmem:[%s693 + $0x48] sm:$0xff]
  %v704 = vld [vmem:[%s693 + $0x50] sm:$0xff]
  %v705 = vld [vmem:[%s693 + $0x58] sm:$0xff]
  %v706 = vld [vmem:[%s693 + $0x60] sm:$0xff]
  %v707 = vld [vmem:[%s693 + $0x68] sm:$0xff]
  %v708 = vld [vmem:[%s693 + $0x70] sm:$0xff]
  %v709 = vld [vmem:[%s693 + $0x78] sm:$0xff]
  %710 = vmatprep.subr.mxu0 0.0
  %711 = vmatpush1.msra.mxu0 %v694
  %712 = vmatprep.subr.mxu0 0.0
  %713 = vmatpush1.msra.mxu0 %v695
  %714 = vmatprep.subr.mxu0 0.0
  %715 = vmatpush1.msra.mxu0 %v696
  %716 = vmatprep.subr.mxu0 0.0
  %717 = vmatpush1.msra.mxu0 %v697
  %718 = vmatprep.subr.mxu0 0.0
  %719 = vmatpush1.msra.mxu0 %v698
  %720 = vmatprep.subr.mxu0 0.0
  %721 = vmatpush1.msra.mxu0 %v699
  %722 = vmatprep.subr.mxu0 0.0
  %723 = vmatpush1.msra.mxu0 %v700
  %724 = vmatprep.subr.mxu0 0.0
  %725 = vmatpush1.msra.mxu0 %v701
  %726 = vmatprep.subr.mxu0 0.0
  %727 = vmatpush1.msra.mxu0 %v702
  %728 = vmatprep.subr.mxu0 0.0
  %729 = vmatpush1.msra.mxu0 %v703
  %730 = vmatprep.subr.mxu0 0.0
  %731 = vmatpush1.msra.mxu0 %v704
  %732 = vmatprep.subr.mxu0 0.0
  %733 = vmatpush1.msra.mxu0 %v705
  %734 = vmatprep.subr.mxu0 0.0
  %735 = vmatpush1.msra.mxu0 %v706
  %736 = vmatprep.subr.mxu0 0.0
  %737 = vmatpush1.msra.mxu0 %v707
  %738 = vmatprep.subr.mxu0 0.0
  %739 = vmatpush1.msra.mxu0 %v708
  %740 = vmatprep.subr.mxu0 0.0
  %741 = vmatpush1.msra.mxu0 %v709
  %742 = vmatprep.subr.mxu0 0.0
  %743 = vmatpush1.msra.mxu0 0.0
  %744 = vmatprep.subr.mxu0 0.0
  %745 = vmatpush1.msra.mxu0 0.0
  %746 = vmatprep.subr.mxu0 0.0
  %747 = vmatpush1.msra.mxu0 0.0
  %748 = vmatprep.subr.mxu0 0.0
  %749 = vmatpush1.msra.mxu0 0.0
  %750 = vmatprep.subr.mxu0 0.0
  %751 = vmatpush1.msra.mxu0 0.0
  %752 = vmatprep.subr.mxu0 0.0
  %753 = vmatpush1.msra.mxu0 0.0
  %754 = vmatprep.subr.mxu0 0.0
  %755 = vmatpush1.msra.mxu0 0.0
  %756 = vmatprep.subr.mxu0 0.0
  %757 = vmatpush1.msra.mxu0 0.0
  %758 = vmatprep.subr.mxu0 0.0
  %759 = vmatpush1.msra.mxu0 0.0
  %760 = vmatprep.subr.mxu0 0.0
  %761 = vmatpush1.msra.mxu0 0.0
  %762 = vmatprep.subr.mxu0 0.0
  %763 = vmatpush1.msra.mxu0 0.0
  %764 = vmatprep.subr.mxu0 0.0
  %765 = vmatpush1.msra.mxu0 0.0
  %766 = vmatprep.subr.mxu0 0.0
  %767 = vmatpush1.msra.mxu0 0.0
  %768 = vmatprep.subr.mxu0 0.0
  %769 = vmatpush1.msra.mxu0 0.0
  %770 = vmatprep.subr.mxu0 0.0
  %771 = vmatpush1.msra.mxu0 0.0
  %772 = vmatprep.subr.mxu0 0.0
  %773 = vmatpush1.msra.mxu0 0.0
  %774 = vmatprep.mubr.f32.mxu0 0.0
  %775 = vmatmul.mubr.f32.gmra.mrb[0].mxu0 %v688
  %v776 = vpop.f32.mrb[0].mxu0
  %v777 = vadd.f32 0.0, %v776
  %v778 = vpop.f32.mrb[0].mxu0
  %779 = vmatprep.mubr.f32.mxu0 0.0
  %780 = vmatmul.mubr.f32.gmra.mrb[0].mxu0 %v689
  %v781 = vpop.f32.mrb[0].mxu0
  %v782 = vadd.f32 0.0, %v781
  %v783 = vpop.f32.mrb[0].mxu0
  %784 = vmatprep.mubr.f32.mxu0 0.0
  %785 = vmatmul.mubr.f32.gmra.mrb[0].mxu0 %v690
  %v786 = vpop.f32.mrb[0].mxu0
  %v787 = vadd.f32 0.0, %v786
  %v788 = vpop.f32.mrb[0].mxu0
  %789 = vmatprep.mubr.f32.mxu0 0.0
  %790 = vmatmul.mubr.f32.gmra.mrb[0].mxu0 %v691
  %v791 = vpop.f32.mrb[0].mxu0
  %v792 = vadd.f32 0.0, %v791
  %v793 = vpop.f32.mrb[0].mxu0
  %794 = vmatprep.mubr.f32.mxu0 0.0
  %795 = vmatmul.mubr.f32.gmra.mrb[0].mxu0 %v692
  %v796 = vpop.f32.mrb[0].mxu0
  %v797 = vadd.f32 0.0, %v796
  %v798 = vpop.f32.mrb[0].mxu0
  %799 = vdwg.mxu0
  %v800 = vadd.f32 %v665, %v777
  %v801 = vadd.f32 %v670, %v782
  %v802 = vadd.f32 %v675, %v787
  %v803 = vadd.f32 %v680, %v792
  %v804 = vadd.f32 %v685, %v797
  %v805 = vadd.f32 %v800, %v434
  %v806 = vadd.f32 %v801, %v436
  %v807 = vadd.f32 %v802, %v438
  %v808 = vadd.f32 %v803, %v440
  %v809 = vadd.f32 %v804, %v442
  %v810 = vld [vmem:[%s4] sm:$0xff]
  %v811 = vld [vmem:[%s4 + $0x8] sm:$0xff]
  %v812 = vld [vmem:[%s4 + $0x10] sm:$0xff]
  %v813 = vld [vmem:[%s4 + $0x18] sm:$0xff]
  %v814 = vld [vmem:[%s4 + $0x20] sm:$0x3]
  %v815 = vadd.f32 %v805, %v810
  %v816 = vadd.f32 %v806, %v811
  %v817 = vadd.f32 %v807, %v812
  %v818 = vadd.f32 %v808, %v813
  %v819 = vadd.f32 %v809, %v814
  %820 = vst [vmem:[%s5] sm:$0xff] %v815
  %821 = vst [vmem:[%s5 + $0x8] sm:$0xff] %v816
  %822 = vst [vmem:[%s5 + $0xe] sm:$0xfc] %v817
  %823 = vst [vmem:[%s5 + $0x16] sm:$0xff] %v818
  %824 = vst [vmem:[%s5 + $0x1e] sm:$0x3] %v819
  // Predicated region
  $region22: #{generative_encoder_fwd.4} parent=0 // pred_check
    _
  $region23: #{generative_encoder_fwd.4} parent=0 // pred_check_branch
    %826 = sbr.rel (0) target = $region25
  $region24: #{generative_encoder_fwd.4} parent=0 // pred_region
    _
  $region25: #{generative_encoder_fwd.4} parent=0 // pred_fallthru
    _
  // Predicated region
  $region26: #{generative_encoder_fwd.4} parent=0 // pred_check
    _
  $region27: #{generative_encoder_fwd.4} parent=0 // pred_check_branch
    %828 = sbr.rel (0) target = $region29
  $region28: #{generative_encoder_fwd.4} parent=0 // pred_region
    _
  $region29: #{generative_encoder_fwd.4} parent=0 // pred_fallthru
    _

// kernel: tile.53
$region0: #{tile.53}
  #allocation0 [shape = 's32[1]{0}', space=sflag, size = 0x4, scoped, tag = 'scoped memory for tile.53']
  %s0 = inlined_call_operand.vmem [shape: f32[16], index: 0, kind: input, shape index: {}]
  %s1 = inlined_call_operand.vmem [shape: f32[8,16], index: 1, kind: output, shape index: {}]
  // Predicated region
  $region2: #{tile.53} parent=0 // pred_check
    _
  $region3: #{tile.53} parent=0 // pred_check_branch
    %3 = sbr.rel (0) target = $region5
  $region4: #{tile.53} parent=0 // pred_region
    _
  $region5: #{tile.53} parent=0 // pred_fallthru
    _
  %v4 = vld [vmem:[%s0] ss:$0 sm:$0xff]
  %5 = vst [vmem:[%s1] sm:$0xff] %v4

// kernel: tile.54
$region0: #{tile.54}
  %s0 = inlined_call_operand.vmem [shape: f32[8,16], index: 0, kind: input, shape index: {}]
  %s1 = inlined_call_operand.vmem [shape: f32[1,128], index: 1, kind: output, shape index: {}]
  $region1: #{tile.54} parent=0
    #allocation0 [shape = 'u8[4096]{0}', space=vmem, size = 0x1000, scoped, tag = 'scoped mem for output reshape']
    %v2 = vld [vmem:[%s0] sm:$0x1]
    %vm3 = vcmask 130048
    %4 = vst.msk [vmem:[#allocation0] sm:$0x1] %vm3, %v2
    %s5 = scalar_lea.vmem %s0, 7
    %v6 = vld [vmem:[%s5] sm:$0x1]
    %7 = vrot.lane.b32.xlu0 %v6, 112
    %v8 = vpop.permute.xlu0 %7
    %vm9 = vcmask 1048448
    %10 = vst.msk [vmem:[#allocation0] sm:$0x1] %vm9, %v8
    %s11 = scalar_lea.vmem %s0, 6
    %v12 = vld [vmem:[%s11] sm:$0x1]
    %13 = vrot.lane.b32.xlu0 %v12, 96
    %v14 = vpop.permute.xlu0 %13
    %vm15 = vcmask 917248
    %16 = vst.msk [vmem:[#allocation0] sm:$0x1] %vm15, %v14
    %s17 = scalar_lea.vmem %s0, 5
    %v18 = vld [vmem:[%s17] sm:$0x1]
    %19 = vrot.lane.b32.xlu0 %v18, 80
    %v20 = vpop.permute.xlu0 %19
    %vm21 = vcmask 786048
    %22 = vst.msk [vmem:[#allocation0] sm:$0x1] %vm21, %v20
    %s23 = scalar_lea.vmem %s0, 4
    %v24 = vld [vmem:[%s23] sm:$0x1]
    %25 = vrot.lane.b32.xlu0 %v24, 64
    %v26 = vpop.permute.xlu0 %25
    %vm27 = vcmask 654848
    %28 = vst.msk [vmem:[#allocation0] sm:$0x1] %vm27, %v26
    %s29 = scalar_lea.vmem %s0, 3
    %v30 = vld [vmem:[%s29] sm:$0x1]
    %31 = vrot.lane.b32.xlu0 %v30, 48
    %v32 = vpop.permute.xlu0 %31
    %vm33 = vcmask 523648
    %34 = vst.msk [vmem:[#allocation0] sm:$0x1] %vm33, %v32
    %s35 = scalar_lea.vmem %s0, 2
    %v36 = vld [vmem:[%s35] sm:$0x1]
    %37 = vrot.lane.b32.xlu0 %v36, 32
    %v38 = vpop.permute.xlu0 %37
    %vm39 = vcmask 392448
    %40 = vst.msk [vmem:[#allocation0] sm:$0x1] %vm39, %v38
    %s41 = scalar_lea.vmem %s0, 1
    %v42 = vld [vmem:[%s41] sm:$0x1]
    %43 = vrot.lane.b32.xlu0 %v42, 16
    %v44 = vpop.permute.xlu0 %43
    %vm45 = vcmask 261248
    %46 = vst.msk [vmem:[#allocation0] sm:$0x1] %vm45, %v44
    %s48 = sshllo.u32 0, 1
    %v50 = vld [vmem:[#allocation0] sm:%s48]
    %s51 = sshllo.u32 0, 1
    %52 = vst [vmem:[%s1] sm:%s51] %v50

// kernel: tile.59
$region0: #{tile.59}
  %s0 = inlined_call_operand.vmem [shape: f32[2,10,128], index: 0, kind: input, shape index: {}]
  %s1 = inlined_call_operand.vmem [shape: f32[20,128], index: 1, kind: output, shape index: {}]
  %v2 = vld [vmem:[%s0] sm:$0xff]
  %3 = vst [vmem:[%s1] sm:$0xff] %v2
  %s4 = scalar_lea.vmem %s0, 8
  %v5 = vld [vmem:[%s4] sm:$0x3]
  %s6 = scalar_lea.vmem %s1, 8
  %7 = vst [vmem:[%s6] sm:$0x3] %v5
  %s8 = scalar_lea.vmem %s0, 16
  %v9 = vld [vmem:[%s8] sm:$0xff]
  %s10 = scalar_lea.vmem %s1, 10
  %11 = vst [vmem:[%s10] sm:$0xff] %v9
  %s12 = scalar_lea.vmem %s0, 24
  %v13 = vld [vmem:[%s12] sm:$0x3]
  %s14 = scalar_lea.vmem %s1, 18
  %15 = vst [vmem:[%s14] sm:$0x3] %v13

// kernel: generative_encoder_fwd.5
$region0: #{generative_encoder_fwd.5}
  #allocation0 [shape = 'u32[]', space=smem, size = 0x4, offset = 0x4, fixed_abs, tag = 'smem constant byte address 0x4 - core index']
  #allocation1 [shape = 'u32[144,128]{1,0:T(1,128)}', space=vmem, size = 0x12000, scoped, tag = 'internal scratch']
  #allocation2 [shape = 'f32[20,128]{1,0:T(8,128)}', space=vmem, size = 0x3000, scoped, tag = 'scratch operand']
  #allocation3 [shape = 'f32[20,128]{1,0:T(8,128)}', space=vmem, size = 0x3000, scoped, tag = 'scratch operand']
  %s0 = inlined_call_operand.vmem [shape: f32[32,128], index: 0, kind: input, shape index: {}]
  %s1 = inlined_call_operand.vmem [shape: f32[3,128,256], index: 1, kind: input, shape index: {}]
  %s2 = inlined_call_operand.vmem [shape: f32[3,128,128], index: 2, kind: input, shape index: {}]
  %s3 = inlined_call_operand.vmem [shape: f32[1,128], index: 3, kind: input, shape index: {}]
  %s4 = inlined_call_operand.vmem [shape: f32[18,128], index: 4, kind: input, shape index: {}]
  %s5 = inlined_call_operand.vmem [shape: f32[16,128], index: 5, kind: output, shape index: {}]
  %s6 = sld [smem:[#allocation0]]
  $region30: #{generative_encoder_fwd.5} parent=0
    _
  %s8 = ssub.s32 1, %s6
  %s9 = scalar_select 0, %s8, %s6
  // Predicated region
  $region2: #{generative_encoder_fwd.5} parent=0 // pred_check
    _
  $region3: #{generative_encoder_fwd.5} parent=0 // pred_check_branch
    %11 = sbr.rel (0) target = $region5
  $region4: #{generative_encoder_fwd.5} parent=0 // pred_region
    _
  $region5: #{generative_encoder_fwd.5} parent=0 // pred_fallthru
    _
  // Predicated region
  $region6: #{generative_encoder_fwd.5} parent=0 // pred_check
    _
  $region7: #{generative_encoder_fwd.5} parent=0 // pred_check_branch
    %13 = sbr.rel (0) target = $region9
  $region8: #{generative_encoder_fwd.5} parent=0 // pred_region
    _
  $region9: #{generative_encoder_fwd.5} parent=0 // pred_fallthru
    _
  // Predicated region
  $region10: #{generative_encoder_fwd.5} parent=0 // pred_check
    _
  $region11: #{generative_encoder_fwd.5} parent=0 // pred_check_branch
    %15 = sbr.rel (0) target = $region13
  $region12: #{generative_encoder_fwd.5} parent=0 // pred_region
    _
  $region13: #{generative_encoder_fwd.5} parent=0 // pred_fallthru
    _
  // Predicated region
  $region14: #{generative_encoder_fwd.5} parent=0 // pred_check
    _
  $region15: #{generative_encoder_fwd.5} parent=0 // pred_check_branch
    %17 = sbr.rel (0) target = $region17
  $region16: #{generative_encoder_fwd.5} parent=0 // pred_region
    _
  $region17: #{generative_encoder_fwd.5} parent=0 // pred_fallthru
    _
  // Predicated region
  $region18: #{generative_encoder_fwd.5} parent=0 // pred_check
    _
  $region19: #{generative_encoder_fwd.5} parent=0 // pred_check_branch
    %19 = sbr.rel (0) target = $region21
  $region20: #{generative_encoder_fwd.5} parent=0 // pred_region
    _
  $region21: #{generative_encoder_fwd.5} parent=0 // pred_fallthru
    _
  %v20 = vld [vmem:[%s0] ss:$2 sm:$0xff]
  %s21 = scalar_lea.vmem %s0, 16
  %v22 = vld [vmem:[%s21] ss:$2 sm:$0xff]
  %s23 = scalar_lea.vmem %s0, 1
  %v24 = vld [vmem:[%s23] ss:$2 sm:$0xff]
  %s25 = scalar_lea.vmem %s0, 17
  %v26 = vld [vmem:[%s25] ss:$2 sm:$0xff]
  %v27 = vmax.f32 %v20, %v24
  %v28 = vmax.f32 %v22, %v26
  %31 = vrot.lane.b32.xlu0 %v27, 120
  %v32 = vpop.permute.xlu0 %31
  %33 = vrot.lane.b32.xlu0 %v28, 120
  %v34 = vpop.permute.xlu0 %33
  %v37 = vmax.f32 %v27, %v32
  %v38 = vmax.f32 %v28, %v34
  %39 = vst [vmem:[#allocation2] sm:$0x1] 0.0
  %40 = vst [vmem:[#allocation2 + $0x9] sm:$0x1] 0.0
  %41 = vst [vmem:[#allocation3] sm:$0x1] 0.0
  %42 = vst [vmem:[#allocation3 + $0x9] sm:$0x1] 0.0
  %43 = vst [vmem:[#allocation2 + $0x1] sm:$0xff] %v37
  %44 = vst [vmem:[#allocation2 + $0xa] sm:$0x1] 0.0
  %45 = vst [vmem:[#allocation2 + $0x13] sm:$0x1] 0.0
  %46 = vst [vmem:[#allocation3 + $0xa] sm:$0x1] 0.0
  %47 = vst [vmem:[#allocation3 + $0x13] sm:$0x1] 0.0
  %48 = vst [vmem:[#allocation2 + $0xb] sm:$0xff] %v38
  %v49 = vld [vmem:[#allocation2] sm:$0xff]
  %v50 = vld [vmem:[#allocation2 + $0x8] sm:$0xff]
  %v51 = vld [vmem:[#allocation2 + $0x10] sm:$0x3]
  %v52 = vld [vmem:[%s1] sm:$0xff]
  %v53 = vld [vmem:[%s1 + $0x8] sm:$0xff]
  %v54 = vld [vmem:[%s1 + $0x10] sm:$0xff]
  %v55 = vld [vmem:[%s1 + $0x18] sm:$0xff]
  %v56 = vld [vmem:[%s1 + $0x20] sm:$0xff]
  %v57 = vld [vmem:[%s1 + $0x28] sm:$0xff]
  %v58 = vld [vmem:[%s1 + $0x30] sm:$0xff]
  %v59 = vld [vmem:[%s1 + $0x38] sm:$0xff]
  %v60 = vld [vmem:[%s1 + $0x40] sm:$0xff]
  %v61 = vld [vmem:[%s1 + $0x48] sm:$0xff]
  %v62 = vld [vmem:[%s1 + $0x50] sm:$0xff]
  %v63 = vld [vmem:[%s1 + $0x58] sm:$0xff]
  %v64 = vld [vmem:[%s1 + $0x60] sm:$0xff]
  %v65 = vld [vmem:[%s1 + $0x68] sm:$0xff]
  %v66 = vld [vmem:[%s1 + $0x70] sm:$0xff]
  %v67 = vld [vmem:[%s1 + $0x78] sm:$0xff]
  %v68 = vld [vmem:[%s1 + $0x80] sm:$0xff]
  %v69 = vld [vmem:[%s1 + $0x88] sm:$0xff]
  %v70 = vld [vmem:[%s1 + $0x90] sm:$0xff]
  %v71 = vld [vmem:[%s1 + $0x98] sm:$0xff]
  %v72 = vld [vmem:[%s1 + $0xa0] sm:$0xff]
  %v73 = vld [vmem:[%s1 + $0xa8] sm:$0xff]
  %v74 = vld [vmem:[%s1 + $0xb0] sm:$0xff]
  %v75 = vld [vmem:[%s1 + $0xb8] sm:$0xff]
  %v76 = vld [vmem:[%s1 + $0xc0] sm:$0xff]
  %v77 = vld [vmem:[%s1 + $0xc8] sm:$0xff]
  %v78 = vld [vmem:[%s1 + $0xd0] sm:$0xff]
  %v79 = vld [vmem:[%s1 + $0xd8] sm:$0xff]
  %v80 = vld [vmem:[%s1 + $0xe0] sm:$0xff]
  %v81 = vld [vmem:[%s1 + $0xe8] sm:$0xff]
  %v82 = vld [vmem:[%s1 + $0xf0] sm:$0xff]
  %v83 = vld [vmem:[%s1 + $0xf8] sm:$0xff]
  %v84 = vld [vmem:[#allocation2 + $0x1] sm:$0xff]
  %v85 = vld [vmem:[#allocation2 + $0x9] sm:$0xff]
  %v86 = vld [vmem:[#allocation2 + $0x11] sm:$0x3]
  %s87 = scalar_lea.vmem %s1, 256
  %v88 = vld [vmem:[%s87] sm:$0xff]
  %v89 = vld [vmem:[%s87 + $0x8] sm:$0xff]
  %v90 = vld [vmem:[%s87 + $0x10] sm:$0xff]
  %v91 = vld [vmem:[%s87 + $0x18] sm:$0xff]
  %v92 = vld [vmem:[%s87 + $0x20] sm:$0xff]
  %v93 = vld [vmem:[%s87 + $0x28] sm:$0xff]
  %v94 = vld [vmem:[%s87 + $0x30] sm:$0xff]
  %v95 = vld [vmem:[%s87 + $0x38] sm:$0xff]
  %v96 = vld [vmem:[%s87 + $0x40] sm:$0xff]
  %v97 = vld [vmem:[%s87 + $0x48] sm:$0xff]
  %v98 = vld [vmem:[%s87 + $0x50] sm:$0xff]
  %v99 = vld [vmem:[%s87 + $0x58] sm:$0xff]
  %v100 = vld [vmem:[%s87 + $0x60] sm:$0xff]
  %v101 = vld [vmem:[%s87 + $0x68] sm:$0xff]
  %v102 = vld [vmem:[%s87 + $0x70] sm:$0xff]
  %v103 = vld [vmem:[%s87 + $0x78] sm:$0xff]
  %v104 = vld [vmem:[%s87 + $0x80] sm:$0xff]
  %v105 = vld [vmem:[%s87 + $0x88] sm:$0xff]
  %v106 = vld [vmem:[%s87 + $0x90] sm:$0xff]
  %v107 = vld [vmem:[%s87 + $0x98] sm:$0xff]
  %v108 = vld [vmem:[%s87 + $0xa0] sm:$0xff]
  %v109 = vld [vmem:[%s87 + $0xa8] sm:$0xff]
  %v110 = vld [vmem:[%s87 + $0xb0] sm:$0xff]
  %v111 = vld [vmem:[%s87 + $0xb8] sm:$0xff]
  %v112 = vld [vmem:[%s87 + $0xc0] sm:$0xff]
  %v113 = vld [vmem:[%s87 + $0xc8] sm:$0xff]
  %v114 = vld [vmem:[%s87 + $0xd0] sm:$0xff]
  %v115 = vld [vmem:[%s87 + $0xd8] sm:$0xff]
  %v116 = vld [vmem:[%s87 + $0xe0] sm:$0xff]
  %v117 = vld [vmem:[%s87 + $0xe8] sm:$0xff]
  %v118 = vld [vmem:[%s87 + $0xf0] sm:$0xff]
  %v119 = vld [vmem:[%s87 + $0xf8] sm:$0xff]
  %120 = vmatprep.subr.mxu0 %v89
  %121 = vmatpush1.msra.mxu0 %v88
  %122 = vmatprep.subr.mxu0 %v91
  %123 = vmatpush1.msra.mxu0 %v90
  %124 = vmatprep.subr.mxu0 %v93
  %125 = vmatpush1.msra.mxu0 %v92
  %126 = vmatprep.subr.mxu0 %v95
  %127 = vmatpush1.msra.mxu0 %v94
  %128 = vmatprep.subr.mxu0 %v97
  %129 = vmatpush1.msra.mxu0 %v96
  %130 = vmatprep.subr.mxu0 %v99
  %131 = vmatpush1.msra.mxu0 %v98
  %132 = vmatprep.subr.mxu0 %v101
  %133 = vmatpush1.msra.mxu0 %v100
  %134 = vmatprep.subr.mxu0 %v103
  %135 = vmatpush1.msra.mxu0 %v102
  %136 = vmatprep.subr.mxu0 %v105
  %137 = vmatpush1.msra.mxu0 %v104
  %138 = vmatprep.subr.mxu0 %v107
  %139 = vmatpush1.msra.mxu0 %v106
  %140 = vmatprep.subr.mxu0 %v109
  %141 = vmatpush1.msra.mxu0 %v108
  %142 = vmatprep.subr.mxu0 %v111
  %143 = vmatpush1.msra.mxu0 %v110
  %144 = vmatprep.subr.mxu0 %v113
  %145 = vmatpush1.msra.mxu0 %v112
  %146 = vmatprep.subr.mxu0 %v115
  %147 = vmatpush1.msra.mxu0 %v114
  %148 = vmatprep.subr.mxu0 %v117
  %149 = vmatpush1.msra.mxu0 %v116
  %150 = vmatprep.subr.mxu0 %v119
  %151 = vmatpush1.msra.mxu0 %v118
  %152 = vmatprep.subr.mxu0 0.0
  %153 = vmatpush1.msra.mxu0 0.0
  %154 = vmatprep.subr.mxu0 0.0
  %155 = vmatpush1.msra.mxu0 0.0
  %156 = vmatprep.subr.mxu0 0.0
  %157 = vmatpush1.msra.mxu0 0.0
  %158 = vmatprep.subr.mxu0 0.0
  %159 = vmatpush1.msra.mxu0 0.0
  %160 = vmatprep.subr.mxu0 0.0
  %161 = vmatpush1.msra.mxu0 0.0
  %162 = vmatprep.subr.mxu0 0.0
  %163 = vmatpush1.msra.mxu0 0.0
  %164 = vmatprep.subr.mxu0 0.0
  %165 = vmatpush1.msra.mxu0 0.0
  %166 = vmatprep.subr.mxu0 0.0
  %167 = vmatpush1.msra.mxu0 0.0
  %168 = vmatprep.subr.mxu0 0.0
  %169 = vmatpush1.msra.mxu0 0.0
  %170 = vmatprep.subr.mxu0 0.0
  %171 = vmatpush1.msra.mxu0 0.0
  %172 = vmatprep.subr.mxu0 0.0
  %173 = vmatpush1.msra.mxu0 0.0
  %174 = vmatprep.subr.mxu0 0.0
  %175 = vmatpush1.msra.mxu0 0.0
  %176 = vmatprep.subr.mxu0 0.0
  %177 = vmatpush1.msra.mxu0 0.0
  %178 = vmatprep.subr.mxu0 0.0
  %179 = vmatpush1.msra.mxu0 0.0
  %180 = vmatprep.subr.mxu0 0.0
  %181 = vmatpush1.msra.mxu0 0.0
  %182 = vmatprep.subr.mxu0 0.0
  %183 = vmatpush1.msra.mxu0 0.0
  %184 = vmatprep.mubr.f32.mxu0 0.0
  %185 = vmatmul.mubr.f32.gmra.mrb[0].mxu0 %v84
  %v186 = vpop.f32.mrb[0].mxu0
  %v187 = vadd.f32 0.0, %v186
  %v188 = vpop.f32.mrb[0].mxu0
  %v189 = vadd.f32 0.0, %v188
  %190 = vmatprep.mubr.f32.mxu0 0.0
  %191 = vmatmul.mubr.f32.gmra.mrb[0].mxu0 %v85
  %v192 = vpop.f32.mrb[0].mxu0
  %v193 = vadd.f32 0.0, %v192
  %v194 = vpop.f32.mrb[0].mxu0
  %v195 = vadd.f32 0.0, %v194
  %196 = vmatprep.mubr.f32.mxu0 0.0
  %197 = vmatmul.mubr.f32.gmra.mrb[0].mxu0 %v86
  %v198 = vpop.f32.mrb[0].mxu0
  %v199 = vadd.f32 0.0, %v198
  %v200 = vpop.f32.mrb[0].mxu0
  %v201 = vadd.f32 0.0, %v200
  %202 = vdwg.mxu0
  %203 = vmatprep.subr.mxu0 %v53
  %204 = vmatpush1.msra.mxu0 %v52
  %205 = vmatprep.subr.mxu0 %v55
  %206 = vmatpush1.msra.mxu0 %v54
  %207 = vmatprep.subr.mxu0 %v57
  %208 = vmatpush1.msra.mxu0 %v56
  %209 = vmatprep.subr.mxu0 %v59
  %210 = vmatpush1.msra.mxu0 %v58
  %211 = vmatprep.subr.mxu0 %v61
  %212 = vmatpush1.msra.mxu0 %v60
  %213 = vmatprep.subr.mxu0 %v63
  %214 = vmatpush1.msra.mxu0 %v62
  %215 = vmatprep.subr.mxu0 %v65
  %216 = vmatpush1.msra.mxu0 %v64
  %217 = vmatprep.subr.mxu0 %v67
  %218 = vmatpush1.msra.mxu0 %v66
  %219 = vmatprep.subr.mxu0 %v69
  %220 = vmatpush1.msra.mxu0 %v68
  %221 = vmatprep.subr.mxu0 %v71
  %222 = vmatpush1.msra.mxu0 %v70
  %223 = vmatprep.subr.mxu0 %v73
  %224 = vmatpush1.msra.mxu0 %v72
  %225 = vmatprep.subr.mxu0 %v75
  %226 = vmatpush1.msra.mxu0 %v74
  %227 = vmatprep.subr.mxu0 %v77
  %228 = vmatpush1.msra.mxu0 %v76
  %229 = vmatprep.subr.mxu0 %v79
  %230 = vmatpush1.msra.mxu0 %v78
  %231 = vmatprep.subr.mxu0 %v81
  %232 = vmatpush1.msra.mxu0 %v80
  %233 = vmatprep.subr.mxu0 %v83
  %234 = vmatpush1.msra.mxu0 %v82
  %235 = vmatprep.subr.mxu0 0.0
  %236 = vmatpush1.msra.mxu0 0.0
  %237 = vmatprep.subr.mxu0 0.0
  %238 = vmatpush1.msra.mxu0 0.0
  %239 = vmatprep.subr.mxu0 0.0
  %240 = vmatpush1.msra.mxu0 0.0
  %241 = vmatprep.subr.mxu0 0.0
  %242 = vmatpush1.msra.mxu0 0.0
  %243 = vmatprep.subr.mxu0 0.0
  %244 = vmatpush1.msra.mxu0 0.0
  %245 = vmatprep.subr.mxu0 0.0
  %246 = vmatpush1.msra.mxu0 0.0
  %247 = vmatprep.subr.mxu0 0.0
  %248 = vmatpush1.msra.mxu0 0.0
  %249 = vmatprep.subr.mxu0 0.0
  %250 = vmatpush1.msra.mxu0 0.0
  %251 = vmatprep.subr.mxu0 0.0
  %252 = vmatpush1.msra.mxu0 0.0
  %253 = vmatprep.subr.mxu0 0.0
  %254 = vmatpush1.msra.mxu0 0.0
  %255 = vmatprep.subr.mxu0 0.0
  %256 = vmatpush1.msra.mxu0 0.0
  %257 = vmatprep.subr.mxu0 0.0
  %258 = vmatpush1.msra.mxu0 0.0
  %259 = vmatprep.subr.mxu0 0.0
  %260 = vmatpush1.msra.mxu0 0.0
  %261 = vmatprep.subr.mxu0 0.0
  %262 = vmatpush1.msra.mxu0 0.0
  %263 = vmatprep.subr.mxu0 0.0
  %264 = vmatpush1.msra.mxu0 0.0
  %265 = vmatprep.subr.mxu0 0.0
  %266 = vmatpush1.msra.mxu0 0.0
  %267 = vmatprep.mubr.f32.mxu0 0.0
  %268 = vmatmul.mubr.f32.gmra.mrb[0].mxu0 %v49
  %v269 = vpop.f32.mrb[0].mxu0
  %v270 = vadd.f32 %v187, %v269
  %v271 = vpop.f32.mrb[0].mxu0
  %v272 = vadd.f32 %v189, %v271
  %273 = vmatprep.mubr.f32.mxu0 0.0
  %274 = vmatmul.mubr.f32.gmra.mrb[0].mxu0 %v50
  %v275 = vpop.f32.mrb[0].mxu0
  %v276 = vadd.f32 %v193, %v275
  %v277 = vpop.f32.mrb[0].mxu0
  %v278 = vadd.f32 %v195, %v277
  %279 = vmatprep.mubr.f32.mxu0 0.0
  %280 = vmatmul.mubr.f32.gmra.mrb[0].mxu0 %v51
  %v281 = vpop.f32.mrb[0].mxu0
  %v282 = vadd.f32 %v199, %v281
  %v283 = vpop.f32.mrb[0].mxu0
  %v284 = vadd.f32 %v201, %v283
  %285 = vdwg.mxu0
  %v286 = vld [vmem:[#allocation2 + $0x2] sm:$0xff]
  %v287 = vld [vmem:[#allocation2 + $0xa] sm:$0xff]
  %v288 = vld [vmem:[#allocation2 + $0x12] sm:$0x3]
  %s289 = scalar_lea.vmem %s1, 512
  %v290 = vld [vmem:[%s289] sm:$0xff]
  %v291 = vld [vmem:[%s289 + $0x8] sm:$0xff]
  %v292 = vld [vmem:[%s289 + $0x10] sm:$0xff]
  %v293 = vld [vmem:[%s289 + $0x18] sm:$0xff]
  %v294 = vld [vmem:[%s289 + $0x20] sm:$0xff]
  %v295 = vld [vmem:[%s289 + $0x28] sm:$0xff]
  %v296 = vld [vmem:[%s289 + $0x30] sm:$0xff]
  %v297 = vld [vmem:[%s289 + $0x38] sm:$0xff]
  %v298 = vld [vmem:[%s289 + $0x40] sm:$0xff]
  %v299 = vld [vmem:[%s289 + $0x48] sm:$0xff]
  %v300 = vld [vmem:[%s289 + $0x50] sm:$0xff]
  %v301 = vld [vmem:[%s289 + $0x58] sm:$0xff]
  %v302 = vld [vmem:[%s289 + $0x60] sm:$0xff]
  %v303 = vld [vmem:[%s289 + $0x68] sm:$0xff]
  %v304 = vld [vmem:[%s289 + $0x70] sm:$0xff]
  %v305 = vld [vmem:[%s289 + $0x78] sm:$0xff]
  %v306 = vld [vmem:[%s289 + $0x80] sm:$0xff]
  %v307 = vld [vmem:[%s289 + $0x88] sm:$0xff]
  %v308 = vld [vmem:[%s289 + $0x90] sm:$0xff]
  %v309 = vld [vmem:[%s289 + $0x98] sm:$0xff]
  %v310 = vld [vmem:[%s289 + $0xa0] sm:$0xff]
  %v311 = vld [vmem:[%s289 + $0xa8] sm:$0xff]
  %v312 = vld [vmem:[%s289 + $0xb0] sm:$0xff]
  %v313 = vld [vmem:[%s289 + $0xb8] sm:$0xff]
  %v314 = vld [vmem:[%s289 + $0xc0] sm:$0xff]
  %v315 = vld [vmem:[%s289 + $0xc8] sm:$0xff]
  %v316 = vld [vmem:[%s289 + $0xd0] sm:$0xff]
  %v317 = vld [vmem:[%s289 + $0xd8] sm:$0xff]
  %v318 = vld [vmem:[%s289 + $0xe0] sm:$0xff]
  %v319 = vld [vmem:[%s289 + $0xe8] sm:$0xff]
  %v320 = vld [vmem:[%s289 + $0xf0] sm:$0xff]
  %v321 = vld [vmem:[%s289 + $0xf8] sm:$0xff]
  %322 = vmatprep.subr.mxu0 %v291
  %323 = vmatpush1.msra.mxu0 %v290
  %324 = vmatprep.subr.mxu0 %v293
  %325 = vmatpush1.msra.mxu0 %v292
  %326 = vmatprep.subr.mxu0 %v295
  %327 = vmatpush1.msra.mxu0 %v294
  %328 = vmatprep.subr.mxu0 %v297
  %329 = vmatpush1.msra.mxu0 %v296
  %330 = vmatprep.subr.mxu0 %v299
  %331 = vmatpush1.msra.mxu0 %v298
  %332 = vmatprep.subr.mxu0 %v301
  %333 = vmatpush1.msra.mxu0 %v300
  %334 = vmatprep.subr.mxu0 %v303
  %335 = vmatpush1.msra.mxu0 %v302
  %336 = vmatprep.subr.mxu0 %v305
  %337 = vmatpush1.msra.mxu0 %v304
  %338 = vmatprep.subr.mxu0 %v307
  %339 = vmatpush1.msra.mxu0 %v306
  %340 = vmatprep.subr.mxu0 %v309
  %341 = vmatpush1.msra.mxu0 %v308
  %342 = vmatprep.subr.mxu0 %v311
  %343 = vmatpush1.msra.mxu0 %v310
  %344 = vmatprep.subr.mxu0 %v313
  %345 = vmatpush1.msra.mxu0 %v312
  %346 = vmatprep.subr.mxu0 %v315
  %347 = vmatpush1.msra.mxu0 %v314
  %348 = vmatprep.subr.mxu0 %v317
  %349 = vmatpush1.msra.mxu0 %v316
  %350 = vmatprep.subr.mxu0 %v319
  %351 = vmatpush1.msra.mxu0 %v318
  %352 = vmatprep.subr.mxu0 %v321
  %353 = vmatpush1.msra.mxu0 %v320
  %354 = vmatprep.subr.mxu0 0.0
  %355 = vmatpush1.msra.mxu0 0.0
  %356 = vmatprep.subr.mxu0 0.0
  %357 = vmatpush1.msra.mxu0 0.0
  %358 = vmatprep.subr.mxu0 0.0
  %359 = vmatpush1.msra.mxu0 0.0
  %360 = vmatprep.subr.mxu0 0.0
  %361 = vmatpush1.msra.mxu0 0.0
  %362 = vmatprep.subr.mxu0 0.0
  %363 = vmatpush1.msra.mxu0 0.0
  %364 = vmatprep.subr.mxu0 0.0
  %365 = vmatpush1.msra.mxu0 0.0
  %366 = vmatprep.subr.mxu0 0.0
  %367 = vmatpush1.msra.mxu0 0.0
  %368 = vmatprep.subr.mxu0 0.0
  %369 = vmatpush1.msra.mxu0 0.0
  %370 = vmatprep.subr.mxu0 0.0
  %371 = vmatpush1.msra.mxu0 0.0
  %372 = vmatprep.subr.mxu0 0.0
  %373 = vmatpush1.msra.mxu0 0.0
  %374 = vmatprep.subr.mxu0 0.0
  %375 = vmatpush1.msra.mxu0 0.0
  %376 = vmatprep.subr.mxu0 0.0
  %377 = vmatpush1.msra.mxu0 0.0
  %378 = vmatprep.subr.mxu0 0.0
  %379 = vmatpush1.msra.mxu0 0.0
  %380 = vmatprep.subr.mxu0 0.0
  %381 = vmatpush1.msra.mxu0 0.0
  %382 = vmatprep.subr.mxu0 0.0
  %383 = vmatpush1.msra.mxu0 0.0
  %384 = vmatprep.subr.mxu0 0.0
  %385 = vmatpush1.msra.mxu0 0.0
  %386 = vmatprep.mubr.f32.mxu0 0.0
  %387 = vmatmul.mubr.f32.gmra.mrb[0].mxu0 %v286
  %v388 = vpop.f32.mrb[0].mxu0
  %v389 = vadd.f32 0.0, %v388
  %v390 = vpop.f32.mrb[0].mxu0
  %v391 = vadd.f32 0.0, %v390
  %392 = vmatprep.mubr.f32.mxu0 0.0
  %393 = vmatmul.mubr.f32.gmra.mrb[0].mxu0 %v287
  %v394 = vpop.f32.mrb[0].mxu0
  %v395 = vadd.f32 0.0, %v394
  %v396 = vpop.f32.mrb[0].mxu0
  %v397 = vadd.f32 0.0, %v396
  %398 = vmatprep.mubr.f32.mxu0 0.0
  %399 = vmatmul.mubr.f32.gmra.mrb[0].mxu0 %v288
  %v400 = vpop.f32.mrb[0].mxu0
  %v401 = vadd.f32 0.0, %v400
  %v402 = vpop.f32.mrb[0].mxu0
  %v403 = vadd.f32 0.0, %v402
  %404 = vdwg.mxu0
  %v405 = vadd.f32 %v270, %v389
  %v406 = vadd.f32 %v272, %v391
  %v407 = vadd.f32 %v276, %v395
  %v408 = vadd.f32 %v278, %v397
  %v409 = vadd.f32 %v282, %v401
  %v410 = vadd.f32 %v284, %v403
  %v411 = vld [vmem:[%s3] sm:$0x1]
  %v413 = vlaneseq
  %v414 = vshrl.u32 %v413, 7
  %v415 = vsub.s32 0, %v414
  %v416 = vrot.slane %v411, %v415
  %v418 = vadd.f32 %v405, %v416
  %v419 = vadd.f32 %v407, %v416
  %v420 = vadd.f32 %v409, %v416
  %v421 = vmax.f32 %v418, 0.0
  %v422 = vmax.f32 %v419, 0.0
  %v423 = vmax.f32 %v420, 0.0
  %424 = vst [vmem:[#allocation3 + $0x1] sm:$0xff] %v421
  %425 = vst [vmem:[#allocation3 + $0x9] sm:$0xfc] %v422
  %426 = vst [vmem:[#allocation3 + $0x11] sm:$0x3] %v423
  %v427 = vld [vmem:[#allocation3] sm:$0xff]
  %v428 = vld [vmem:[#allocation3 + $0x8] sm:$0xff]
  %v429 = vld [vmem:[#allocation3 + $0x10] sm:$0x3]
  %v430 = vld [vmem:[%s2] sm:$0xff]
  %v431 = vld [vmem:[%s2 + $0x8] sm:$0xff]
  %v432 = vld [vmem:[%s2 + $0x10] sm:$0xff]
  %v433 = vld [vmem:[%s2 + $0x18] sm:$0xff]
  %v434 = vld [vmem:[%s2 + $0x20] sm:$0xff]
  %v435 = vld [vmem:[%s2 + $0x28] sm:$0xff]
  %v436 = vld [vmem:[%s2 + $0x30] sm:$0xff]
  %v437 = vld [vmem:[%s2 + $0x38] sm:$0xff]
  %v438 = vld [vmem:[%s2 + $0x40] sm:$0xff]
  %v439 = vld [vmem:[%s2 + $0x48] sm:$0xff]
  %v440 = vld [vmem:[%s2 + $0x50] sm:$0xff]
  %v441 = vld [vmem:[%s2 + $0x58] sm:$0xff]
  %v442 = vld [vmem:[%s2 + $0x60] sm:$0xff]
  %v443 = vld [vmem:[%s2 + $0x68] sm:$0xff]
  %v444 = vld [vmem:[%s2 + $0x70] sm:$0xff]
  %v445 = vld [vmem:[%s2 + $0x78] sm:$0xff]
  %v446 = vld [vmem:[#allocation3 + $0x1] sm:$0xff]
  %v447 = vld [vmem:[#allocation3 + $0x9] sm:$0xff]
  %v448 = vld [vmem:[#allocation3 + $0x11] sm:$0x3]
  %s449 = scalar_lea.vmem %s2, 128
  %v450 = vld [vmem:[%s449] sm:$0xff]
  %v451 = vld [vmem:[%s449 + $0x8] sm:$0xff]
  %v452 = vld [vmem:[%s449 + $0x10] sm:$0xff]
  %v453 = vld [vmem:[%s449 + $0x18] sm:$0xff]
  %v454 = vld [vmem:[%s449 + $0x20] sm:$0xff]
  %v455 = vld [vmem:[%s449 + $0x28] sm:$0xff]
  %v456 = vld [vmem:[%s449 + $0x30] sm:$0xff]
  %v457 = vld [vmem:[%s449 + $0x38] sm:$0xff]
  %v458 = vld [vmem:[%s449 + $0x40] sm:$0xff]
  %v459 = vld [vmem:[%s449 + $0x48] sm:$0xff]
  %v460 = vld [vmem:[%s449 + $0x50] sm:$0xff]
  %v461 = vld [vmem:[%s449 + $0x58] sm:$0xff]
  %v462 = vld [vmem:[%s449 + $0x60] sm:$0xff]
  %v463 = vld [vmem:[%s449 + $0x68] sm:$0xff]
  %v464 = vld [vmem:[%s449 + $0x70] sm:$0xff]
  %v465 = vld [vmem:[%s449 + $0x78] sm:$0xff]
  %466 = vmatprep.subr.mxu0 0.0
  %467 = vmatpush1.msra.mxu0 %v450
  %468 = vmatprep.subr.mxu0 0.0
  %469 = vmatpush1.msra.mxu0 %v451
  %470 = vmatprep.subr.mxu0 0.0
  %471 = vmatpush1.msra.mxu0 %v452
  %472 = vmatprep.subr.mxu0 0.0
  %473 = vmatpush1.msra.mxu0 %v453
  %474 = vmatprep.subr.mxu0 0.0
  %475 = vmatpush1.msra.mxu0 %v454
  %476 = vmatprep.subr.mxu0 0.0
  %477 = vmatpush1.msra.mxu0 %v455
  %478 = vmatprep.subr.mxu0 0.0
  %479 = vmatpush1.msra.mxu0 %v456
  %480 = vmatprep.subr.mxu0 0.0
  %481 = vmatpush1.msra.mxu0 %v457
  %482 = vmatprep.subr.mxu0 0.0
  %483 = vmatpush1.msra.mxu0 %v458
  %484 = vmatprep.subr.mxu0 0.0
  %485 = vmatpush1.msra.mxu0 %v459
  %486 = vmatprep.subr.mxu0 0.0
  %487 = vmatpush1.msra.mxu0 %v460
  %488 = vmatprep.subr.mxu0 0.0
  %489 = vmatpush1.msra.mxu0 %v461
  %490 = vmatprep.subr.mxu0 0.0
  %491 = vmatpush1.msra.mxu0 %v462
  %492 = vmatprep.subr.mxu0 0.0
  %493 = vmatpush1.msra.mxu0 %v463
  %494 = vmatprep.subr.mxu0 0.0
  %495 = vmatpush1.msra.mxu0 %v464
  %496 = vmatprep.subr.mxu0 0.0
  %497 = vmatpush1.msra.mxu0 %v465
  %498 = vmatprep.subr.mxu0 0.0
  %499 = vmatpush1.msra.mxu0 0.0
  %500 = vmatprep.subr.mxu0 0.0
  %501 = vmatpush1.msra.mxu0 0.0
  %502 = vmatprep.subr.mxu0 0.0
  %503 = vmatpush1.msra.mxu0 0.0
  %504 = vmatprep.subr.mxu0 0.0
  %505 = vmatpush1.msra.mxu0 0.0
  %506 = vmatprep.subr.mxu0 0.0
  %507 = vmatpush1.msra.mxu0 0.0
  %508 = vmatprep.subr.mxu0 0.0
  %509 = vmatpush1.msra.mxu0 0.0
  %510 = vmatprep.subr.mxu0 0.0
  %511 = vmatpush1.msra.mxu0 0.0
  %512 = vmatprep.subr.mxu0 0.0
  %513 = vmatpush1.msra.mxu0 0.0
  %514 = vmatprep.subr.mxu0 0.0
  %515 = vmatpush1.msra.mxu0 0.0
  %516 = vmatprep.subr.mxu0 0.0
  %517 = vmatpush1.msra.mxu0 0.0
  %518 = vmatprep.subr.mxu0 0.0
  %519 = vmatpush1.msra.mxu0 0.0
  %520 = vmatprep.subr.mxu0 0.0
  %521 = vmatpush1.msra.mxu0 0.0
  %522 = vmatprep.subr.mxu0 0.0
  %523 = vmatpush1.msra.mxu0 0.0
  %524 = vmatprep.subr.mxu0 0.0
  %525 = vmatpush1.msra.mxu0 0.0
  %526 = vmatprep.subr.mxu0 0.0
  %527 = vmatpush1.msra.mxu0 0.0
  %528 = vmatprep.subr.mxu0 0.0
  %529 = vmatpush1.msra.mxu0 0.0
  %530 = vmatprep.mubr.f32.mxu0 0.0
  %531 = vmatmul.mubr.f32.gmra.mrb[0].mxu0 %v446
  %v532 = vpop.f32.mrb[0].mxu0
  %v533 = vadd.f32 0.0, %v532
  %v534 = vpop.f32.mrb[0].mxu0
  %535 = vmatprep.mubr.f32.mxu0 0.0
  %536 = vmatmul.mubr.f32.gmra.mrb[0].mxu0 %v447
  %v537 = vpop.f32.mrb[0].mxu0
  %v538 = vadd.f32 0.0, %v537
  %v539 = vpop.f32.mrb[0].mxu0
  %540 = vmatprep.mubr.f32.mxu0 0.0
  %541 = vmatmul.mubr.f32.gmra.mrb[0].mxu0 %v448
  %v542 = vpop.f32.mrb[0].mxu0
  %v543 = vadd.f32 0.0, %v542
  %v544 = vpop.f32.mrb[0].mxu0
  %545 = vdwg.mxu0
  %546 = vmatprep.subr.mxu0 0.0
  %547 = vmatpush1.msra.mxu0 %v430
  %548 = vmatprep.subr.mxu0 0.0
  %549 = vmatpush1.msra.mxu0 %v431
  %550 = vmatprep.subr.mxu0 0.0
  %551 = vmatpush1.msra.mxu0 %v432
  %552 = vmatprep.subr.mxu0 0.0
  %553 = vmatpush1.msra.mxu0 %v433
  %554 = vmatprep.subr.mxu0 0.0
  %555 = vmatpush1.msra.mxu0 %v434
  %556 = vmatprep.subr.mxu0 0.0
  %557 = vmatpush1.msra.mxu0 %v435
  %558 = vmatprep.subr.mxu0 0.0
  %559 = vmatpush1.msra.mxu0 %v436
  %560 = vmatprep.subr.mxu0 0.0
  %561 = vmatpush1.msra.mxu0 %v437
  %562 = vmatprep.subr.mxu0 0.0
  %563 = vmatpush1.msra.mxu0 %v438
  %564 = vmatprep.subr.mxu0 0.0
  %565 = vmatpush1.msra.mxu0 %v439
  %566 = vmatprep.subr.mxu0 0.0
  %567 = vmatpush1.msra.mxu0 %v440
  %568 = vmatprep.subr.mxu0 0.0
  %569 = vmatpush1.msra.mxu0 %v441
  %570 = vmatprep.subr.mxu0 0.0
  %571 = vmatpush1.msra.mxu0 %v442
  %572 = vmatprep.subr.mxu0 0.0
  %573 = vmatpush1.msra.mxu0 %v443
  %574 = vmatprep.subr.mxu0 0.0
  %575 = vmatpush1.msra.mxu0 %v444
  %576 = vmatprep.subr.mxu0 0.0
  %577 = vmatpush1.msra.mxu0 %v445
  %578 = vmatprep.subr.mxu0 0.0
  %579 = vmatpush1.msra.mxu0 0.0
  %580 = vmatprep.subr.mxu0 0.0
  %581 = vmatpush1.msra.mxu0 0.0
  %582 = vmatprep.subr.mxu0 0.0
  %583 = vmatpush1.msra.mxu0 0.0
  %584 = vmatprep.subr.mxu0 0.0
  %585 = vmatpush1.msra.mxu0 0.0
  %586 = vmatprep.subr.mxu0 0.0
  %587 = vmatpush1.msra.mxu0 0.0
  %588 = vmatprep.subr.mxu0 0.0
  %589 = vmatpush1.msra.mxu0 0.0
  %590 = vmatprep.subr.mxu0 0.0
  %591 = vmatpush1.msra.mxu0 0.0
  %592 = vmatprep.subr.mxu0 0.0
  %593 = vmatpush1.msra.mxu0 0.0
  %594 = vmatprep.subr.mxu0 0.0
  %595 = vmatpush1.msra.mxu0 0.0
  %596 = vmatprep.subr.mxu0 0.0
  %597 = vmatpush1.msra.mxu0 0.0
  %598 = vmatprep.subr.mxu0 0.0
  %599 = vmatpush1.msra.mxu0 0.0
  %600 = vmatprep.subr.mxu0 0.0
  %601 = vmatpush1.msra.mxu0 0.0
  %602 = vmatprep.subr.mxu0 0.0
  %603 = vmatpush1.msra.mxu0 0.0
  %604 = vmatprep.subr.mxu0 0.0
  %605 = vmatpush1.msra.mxu0 0.0
  %606 = vmatprep.subr.mxu0 0.0
  %607 = vmatpush1.msra.mxu0 0.0
  %608 = vmatprep.subr.mxu0 0.0
  %609 = vmatpush1.msra.mxu0 0.0
  %610 = vmatprep.mubr.f32.mxu0 0.0
  %611 = vmatmul.mubr.f32.gmra.mrb[0].mxu0 %v427
  %v612 = vpop.f32.mrb[0].mxu0
  %v613 = vadd.f32 %v533, %v612
  %v614 = vpop.f32.mrb[0].mxu0
  %615 = vmatprep.mubr.f32.mxu0 0.0
  %616 = vmatmul.mubr.f32.gmra.mrb[0].mxu0 %v428
  %v617 = vpop.f32.mrb[0].mxu0
  %v618 = vadd.f32 %v538, %v617
  %v619 = vpop.f32.mrb[0].mxu0
  %620 = vmatprep.mubr.f32.mxu0 0.0
  %621 = vmatmul.mubr.f32.gmra.mrb[0].mxu0 %v429
  %v622 = vpop.f32.mrb[0].mxu0
  %v623 = vadd.f32 %v543, %v622
  %v624 = vpop.f32.mrb[0].mxu0
  %625 = vdwg.mxu0
  %v626 = vld [vmem:[#allocation3 + $0x2] sm:$0xff]
  %v627 = vld [vmem:[#allocation3 + $0xa] sm:$0xff]
  %v628 = vld [vmem:[#allocation3 + $0x12] sm:$0x3]
  %s629 = scalar_lea.vmem %s2, 256
  %v630 = vld [vmem:[%s629] sm:$0xff]
  %v631 = vld [vmem:[%s629 + $0x8] sm:$0xff]
  %v632 = vld [vmem:[%s629 + $0x10] sm:$0xff]
  %v633 = vld [vmem:[%s629 + $0x18] sm:$0xff]
  %v634 = vld [vmem:[%s629 + $0x20] sm:$0xff]
  %v635 = vld [vmem:[%s629 + $0x28] sm:$0xff]
  %v636 = vld [vmem:[%s629 + $0x30] sm:$0xff]
  %v637 = vld [vmem:[%s629 + $0x38] sm:$0xff]
  %v638 = vld [vmem:[%s629 + $0x40] sm:$0xff]
  %v639 = vld [vmem:[%s629 + $0x48] sm:$0xff]
  %v640 = vld [vmem:[%s629 + $0x50] sm:$0xff]
  %v641 = vld [vmem:[%s629 + $0x58] sm:$0xff]
  %v642 = vld [vmem:[%s629 + $0x60] sm:$0xff]
  %v643 = vld [vmem:[%s629 + $0x68] sm:$0xff]
  %v644 = vld [vmem:[%s629 + $0x70] sm:$0xff]
  %v645 = vld [vmem:[%s629 + $0x78] sm:$0xff]
  %646 = vmatprep.subr.mxu0 0.0
  %647 = vmatpush1.msra.mxu0 %v630
  %648 = vmatprep.subr.mxu0 0.0
  %649 = vmatpush1.msra.mxu0 %v631
  %650 = vmatprep.subr.mxu0 0.0
  %651 = vmatpush1.msra.mxu0 %v632
  %652 = vmatprep.subr.mxu0 0.0
  %653 = vmatpush1.msra.mxu0 %v633
  %654 = vmatprep.subr.mxu0 0.0
  %655 = vmatpush1.msra.mxu0 %v634
  %656 = vmatprep.subr.mxu0 0.0
  %657 = vmatpush1.msra.mxu0 %v635
  %658 = vmatprep.subr.mxu0 0.0
  %659 = vmatpush1.msra.mxu0 %v636
  %660 = vmatprep.subr.mxu0 0.0
  %661 = vmatpush1.msra.mxu0 %v637
  %662 = vmatprep.subr.mxu0 0.0
  %663 = vmatpush1.msra.mxu0 %v638
  %664 = vmatprep.subr.mxu0 0.0
  %665 = vmatpush1.msra.mxu0 %v639
  %666 = vmatprep.subr.mxu0 0.0
  %667 = vmatpush1.msra.mxu0 %v640
  %668 = vmatprep.subr.mxu0 0.0
  %669 = vmatpush1.msra.mxu0 %v641
  %670 = vmatprep.subr.mxu0 0.0
  %671 = vmatpush1.msra.mxu0 %v642
  %672 = vmatprep.subr.mxu0 0.0
  %673 = vmatpush1.msra.mxu0 %v643
  %674 = vmatprep.subr.mxu0 0.0
  %675 = vmatpush1.msra.mxu0 %v644
  %676 = vmatprep.subr.mxu0 0.0
  %677 = vmatpush1.msra.mxu0 %v645
  %678 = vmatprep.subr.mxu0 0.0
  %679 = vmatpush1.msra.mxu0 0.0
  %680 = vmatprep.subr.mxu0 0.0
  %681 = vmatpush1.msra.mxu0 0.0
  %682 = vmatprep.subr.mxu0 0.0
  %683 = vmatpush1.msra.mxu0 0.0
  %684 = vmatprep.subr.mxu0 0.0
  %685 = vmatpush1.msra.mxu0 0.0
  %686 = vmatprep.subr.mxu0 0.0
  %687 = vmatpush1.msra.mxu0 0.0
  %688 = vmatprep.subr.mxu0 0.0
  %689 = vmatpush1.msra.mxu0 0.0
  %690 = vmatprep.subr.mxu0 0.0
  %691 = vmatpush1.msra.mxu0 0.0
  %692 = vmatprep.subr.mxu0 0.0
  %693 = vmatpush1.msra.mxu0 0.0
  %694 = vmatprep.subr.mxu0 0.0
  %695 = vmatpush1.msra.mxu0 0.0
  %696 = vmatprep.subr.mxu0 0.0
  %697 = vmatpush1.msra.mxu0 0.0
  %698 = vmatprep.subr.mxu0 0.0
  %699 = vmatpush1.msra.mxu0 0.0
  %700 = vmatprep.subr.mxu0 0.0
  %701 = vmatpush1.msra.mxu0 0.0
  %702 = vmatprep.subr.mxu0 0.0
  %703 = vmatpush1.msra.mxu0 0.0
  %704 = vmatprep.subr.mxu0 0.0
  %705 = vmatpush1.msra.mxu0 0.0
  %706 = vmatprep.subr.mxu0 0.0
  %707 = vmatpush1.msra.mxu0 0.0
  %708 = vmatprep.subr.mxu0 0.0
  %709 = vmatpush1.msra.mxu0 0.0
  %710 = vmatprep.mubr.f32.mxu0 0.0
  %711 = vmatmul.mubr.f32.gmra.mrb[0].mxu0 %v626
  %v712 = vpop.f32.mrb[0].mxu0
  %v713 = vadd.f32 0.0, %v712
  %v714 = vpop.f32.mrb[0].mxu0
  %715 = vmatprep.mubr.f32.mxu0 0.0
  %716 = vmatmul.mubr.f32.gmra.mrb[0].mxu0 %v627
  %v717 = vpop.f32.mrb[0].mxu0
  %v718 = vadd.f32 0.0, %v717
  %v719 = vpop.f32.mrb[0].mxu0
  %720 = vmatprep.mubr.f32.mxu0 0.0
  %721 = vmatmul.mubr.f32.gmra.mrb[0].mxu0 %v628
  %v722 = vpop.f32.mrb[0].mxu0
  %v723 = vadd.f32 0.0, %v722
  %v724 = vpop.f32.mrb[0].mxu0
  %725 = vdwg.mxu0
  %v726 = vadd.f32 %v613, %v713
  %v727 = vadd.f32 %v618, %v718
  %v728 = vadd.f32 %v623, %v723
  %v729 = vadd.f32 %v726, %v406
  %v730 = vadd.f32 %v727, %v408
  %v731 = vadd.f32 %v728, %v410
  %v732 = vld [vmem:[%s4] sm:$0xff]
  %v733 = vld [vmem:[%s4 + $0x8] sm:$0xff]
  %v734 = vld [vmem:[%s4 + $0x10] sm:$0x3]
  %v735 = vadd.f32 %v729, %v732
  %v736 = vadd.f32 %v730, %v733
  %v737 = vadd.f32 %v731, %v734
  %738 = vst [vmem:[%s5] sm:$0xff] %v735
  %739 = vst [vmem:[%s5 + $0x6] sm:$0xfc] %v736
  %740 = vst [vmem:[%s5 + $0xe] sm:$0x3] %v737
  // Predicated region
  $region22: #{generative_encoder_fwd.5} parent=0 // pred_check
    _
  $region23: #{generative_encoder_fwd.5} parent=0 // pred_check_branch
    %742 = sbr.rel (0) target = $region25
  $region24: #{generative_encoder_fwd.5} parent=0 // pred_region
    _
  $region25: #{generative_encoder_fwd.5} parent=0 // pred_fallthru
    _
  // Predicated region
  $region26: #{generative_encoder_fwd.5} parent=0 // pred_check
    _
  $region27: #{generative_encoder_fwd.5} parent=0 // pred_check_branch
    %744 = sbr.rel (0) target = $region29
  $region28: #{generative_encoder_fwd.5} parent=0 // pred_region
    _
  $region29: #{generative_encoder_fwd.5} parent=0 // pred_fallthru
    _

// kernel: tile.63
$region0: #{tile.63}
  #allocation0 [shape = 's32[1]{0}', space=sflag, size = 0x4, scoped, tag = 'scoped memory for tile.63']
  %s0 = inlined_call_operand.vmem [shape: f32[32], index: 0, kind: input, shape index: {}]
  %s1 = inlined_call_operand.vmem [shape: f32[4,32], index: 1, kind: output, shape index: {}]
  // Predicated region
  $region2: #{tile.63} parent=0 // pred_check
    _
  $region3: #{tile.63} parent=0 // pred_check_branch
    %3 = sbr.rel (0) target = $region5
  $region4: #{tile.63} parent=0 // pred_region
    _
  $region5: #{tile.63} parent=0 // pred_fallthru
    _
  %v4 = vld [vmem:[%s0] ss:$0 sm:$0xff]
  %5 = vst [vmem:[%s1] sm:$0xf] %v4

// kernel: tile.64
$region0: #{tile.64}
  %s0 = inlined_call_operand.vmem [shape: f32[4,32], index: 0, kind: input, shape index: {}]
  %s1 = inlined_call_operand.vmem [shape: f32[1,128], index: 1, kind: output, shape index: {}]
  $region1: #{tile.64} parent=0
    #allocation0 [shape = 'u8[4096]{0}', space=vmem, size = 0x1000, scoped, tag = 'scoped mem for output reshape']
    #allocation1 [shape = 'u8[4096]{0}', space=vmem, size = 0x1000, scoped, tag = 'scoped mem for input reshape']
    %s3 = sshllo.u32 0, 4
    %v4 = vld [vmem:[%s0] sm:%s3]
    %5 = vst [vmem:[#allocation1] sm:%s3] %v4
    %v6 = vld [vmem:[#allocation1] sm:$0x1]
    %vm7 = vcmask 261120
    %8 = vst.msk [vmem:[#allocation0] sm:$0x1] %vm7, %v6
    %s9 = scalar_lea.vmem [#allocation1], 3
    %v10 = vld [vmem:[%s9] sm:$0x1]
    %11 = vrot.lane.b32.xlu0 %v10, 96
    %v12 = vpop.permute.xlu0 %11
    %vm13 = vcmask 1048320
    %14 = vst.msk [vmem:[#allocation0] sm:$0x1] %vm13, %v12
    %s15 = scalar_lea.vmem [#allocation1], 2
    %v16 = vld [vmem:[%s15] sm:$0x1]
    %17 = vrot.lane.b32.xlu0 %v16, 64
    %v18 = vpop.permute.xlu0 %17
    %vm19 = vcmask 785920
    %20 = vst.msk [vmem:[#allocation0] sm:$0x1] %vm19, %v18
    %s21 = scalar_lea.vmem [#allocation1], 1
    %v22 = vld [vmem:[%s21] sm:$0x1]
    %23 = vrot.lane.b32.xlu0 %v22, 32
    %v24 = vpop.permute.xlu0 %23
    %vm25 = vcmask 523520
    %26 = vst.msk [vmem:[#allocation0] sm:$0x1] %vm25, %v24
    %s28 = sshllo.u32 0, 1
    %v30 = vld [vmem:[#allocation0] sm:%s28]
    %s31 = sshllo.u32 0, 1
    %32 = vst [vmem:[%s1] sm:%s31] %v30

// kernel: tile.69
$region0: #{tile.69}
  %s0 = inlined_call_operand.vmem [shape: f32[2,6,128], index: 0, kind: input, shape index: {}]
  %s1 = inlined_call_operand.vmem [shape: f32[12,128], index: 1, kind: output, shape index: {}]
  %v2 = vld [vmem:[%s0] sm:$0x3f]
  %3 = vst [vmem:[%s1] sm:$0x3f] %v2
  %s4 = scalar_lea.vmem %s0, 8
  %v5 = vld [vmem:[%s4] sm:$0x3f]
  %s6 = scalar_lea.vmem %s1, 6
  %7 = vst [vmem:[%s6] sm:$0x3f] %v5

// kernel: generative_encoder_fwd.6
$region0: #{generative_encoder_fwd.6}
  #allocation0 [shape = 'u32[]', space=smem, size = 0x4, offset = 0x4, fixed_abs, tag = 'smem constant byte address 0x4 - core index']
  #allocation1 [shape = 'u32[144,128]{1,0:T(1,128)}', space=vmem, size = 0x12000, scoped, tag = 'internal scratch']
  #allocation2 [shape = 'f32[12,128]{1,0:T(8,128)}', space=vmem, size = 0x2000, scoped, tag = 'scratch operand']
  #allocation3 [shape = 'f32[12,128]{1,0:T(8,128)}', space=vmem, size = 0x2000, scoped, tag = 'scratch operand']
  %s0 = inlined_call_operand.vmem [shape: f32[16,128], index: 0, kind: input, shape index: {}]
  %s1 = inlined_call_operand.vmem [shape: f32[3,128,256], index: 1, kind: input, shape index: {}]
  %s2 = inlined_call_operand.vmem [shape: f32[3,128,128], index: 2, kind: input, shape index: {}]
  %s3 = inlined_call_operand.vmem [shape: f32[1,128], index: 3, kind: input, shape index: {}]
  %s4 = inlined_call_operand.vmem [shape: f32[10,128], index: 4, kind: input, shape index: {}]
  %s5 = inlined_call_operand.vmem [shape: f32[8,128], index: 5, kind: output, shape index: {}]
  %s6 = sld [smem:[#allocation0]]
  $region30: #{generative_encoder_fwd.6} parent=0
    _
  %s8 = ssub.s32 1, %s6
  %s9 = scalar_select 0, %s8, %s6
  // Predicated region
  $region2: #{generative_encoder_fwd.6} parent=0 // pred_check
    _
  $region3: #{generative_encoder_fwd.6} parent=0 // pred_check_branch
    %11 = sbr.rel (0) target = $region5
  $region4: #{generative_encoder_fwd.6} parent=0 // pred_region
    _
  $region5: #{generative_encoder_fwd.6} parent=0 // pred_fallthru
    _
  // Predicated region
  $region6: #{generative_encoder_fwd.6} parent=0 // pred_check
    _
  $region7: #{generative_encoder_fwd.6} parent=0 // pred_check_branch
    %13 = sbr.rel (0) target = $region9
  $region8: #{generative_encoder_fwd.6} parent=0 // pred_region
    _
  $region9: #{generative_encoder_fwd.6} parent=0 // pred_fallthru
    _
  // Predicated region
  $region10: #{generative_encoder_fwd.6} parent=0 // pred_check
    _
  $region11: #{generative_encoder_fwd.6} parent=0 // pred_check_branch
    %15 = sbr.rel (0) target = $region13
  $region12: #{generative_encoder_fwd.6} parent=0 // pred_region
    _
  $region13: #{generative_encoder_fwd.6} parent=0 // pred_fallthru
    _
  // Predicated region
  $region14: #{generative_encoder_fwd.6} parent=0 // pred_check
    _
  $region15: #{generative_encoder_fwd.6} parent=0 // pred_check_branch
    %17 = sbr.rel (0) target = $region17
  $region16: #{generative_encoder_fwd.6} parent=0 // pred_region
    _
  $region17: #{generative_encoder_fwd.6} parent=0 // pred_fallthru
    _
  // Predicated region
  $region18: #{generative_encoder_fwd.6} parent=0 // pred_check
    _
  $region19: #{generative_encoder_fwd.6} parent=0 // pred_check_branch
    %19 = sbr.rel (0) target = $region21
  $region20: #{generative_encoder_fwd.6} parent=0 // pred_region
    _
  $region21: #{generative_encoder_fwd.6} parent=0 // pred_fallthru
    _
  %v20 = vld [vmem:[%s0] ss:$2 sm:$0xff]
  %s21 = scalar_lea.vmem %s0, 1
  %v22 = vld [vmem:[%s21] ss:$2 sm:$0xff]
  %v23 = vmax.f32 %v20, %v22
  %25 = vrot.lane.b32.xlu0 %v23, 112
  %v26 = vpop.permute.xlu0 %25
  %v28 = vmax.f32 %v23, %v26
  %29 = vst [vmem:[#allocation2] sm:$0x1] 0.0
  %30 = vst [vmem:[#allocation2 + $0x5] sm:$0x1] 0.0
  %31 = vst [vmem:[#allocation3] sm:$0x1] 0.0
  %32 = vst [vmem:[#allocation3 + $0x5] sm:$0x1] 0.0
  %33 = vst [vmem:[#allocation2 + $0x1] sm:$0xf] %v28
  %34 = vst [vmem:[#allocation2 + $0x6] sm:$0x1] 0.0
  %35 = vst [vmem:[#allocation2 + $0xb] sm:$0x1] 0.0
  %36 = vst [vmem:[#allocation3 + $0x6] sm:$0x1] 0.0
  %37 = vst [vmem:[#allocation3 + $0xb] sm:$0x1] 0.0
  %38 = vst [vmem:[#allocation2 + $0x3] sm:$0xf0] %v28
  %v39 = vld [vmem:[#allocation2] sm:$0xff]
  %v40 = vld [vmem:[#allocation2 + $0x8] sm:$0x3]
  %v41 = vld [vmem:[%s1] sm:$0xff]
  %v42 = vld [vmem:[%s1 + $0x8] sm:$0xff]
  %v43 = vld [vmem:[%s1 + $0x10] sm:$0xff]
  %v44 = vld [vmem:[%s1 + $0x18] sm:$0xff]
  %v45 = vld [vmem:[%s1 + $0x20] sm:$0xff]
  %v46 = vld [vmem:[%s1 + $0x28] sm:$0xff]
  %v47 = vld [vmem:[%s1 + $0x30] sm:$0xff]
  %v48 = vld [vmem:[%s1 + $0x38] sm:$0xff]
  %v49 = vld [vmem:[%s1 + $0x40] sm:$0xff]
  %v50 = vld [vmem:[%s1 + $0x48] sm:$0xff]
  %v51 = vld [vmem:[%s1 + $0x50] sm:$0xff]
  %v52 = vld [vmem:[%s1 + $0x58] sm:$0xff]
  %v53 = vld [vmem:[%s1 + $0x60] sm:$0xff]
  %v54 = vld [vmem:[%s1 + $0x68] sm:$0xff]
  %v55 = vld [vmem:[%s1 + $0x70] sm:$0xff]
  %v56 = vld [vmem:[%s1 + $0x78] sm:$0xff]
  %v57 = vld [vmem:[%s1 + $0x80] sm:$0xff]
  %v58 = vld [vmem:[%s1 + $0x88] sm:$0xff]
  %v59 = vld [vmem:[%s1 + $0x90] sm:$0xff]
  %v60 = vld [vmem:[%s1 + $0x98] sm:$0xff]
  %v61 = vld [vmem:[%s1 + $0xa0] sm:$0xff]
  %v62 = vld [vmem:[%s1 + $0xa8] sm:$0xff]
  %v63 = vld [vmem:[%s1 + $0xb0] sm:$0xff]
  %v64 = vld [vmem:[%s1 + $0xb8] sm:$0xff]
  %v65 = vld [vmem:[%s1 + $0xc0] sm:$0xff]
  %v66 = vld [vmem:[%s1 + $0xc8] sm:$0xff]
  %v67 = vld [vmem:[%s1 + $0xd0] sm:$0xff]
  %v68 = vld [vmem:[%s1 + $0xd8] sm:$0xff]
  %v69 = vld [vmem:[%s1 + $0xe0] sm:$0xff]
  %v70 = vld [vmem:[%s1 + $0xe8] sm:$0xff]
  %v71 = vld [vmem:[%s1 + $0xf0] sm:$0xff]
  %v72 = vld [vmem:[%s1 + $0xf8] sm:$0xff]
  %v73 = vld [vmem:[#allocation2 + $0x1] sm:$0xff]
  %v74 = vld [vmem:[#allocation2 + $0x9] sm:$0x3]
  %s75 = scalar_lea.vmem %s1, 256
  %v76 = vld [vmem:[%s75] sm:$0xff]
  %v77 = vld [vmem:[%s75 + $0x8] sm:$0xff]
  %v78 = vld [vmem:[%s75 + $0x10] sm:$0xff]
  %v79 = vld [vmem:[%s75 + $0x18] sm:$0xff]
  %v80 = vld [vmem:[%s75 + $0x20] sm:$0xff]
  %v81 = vld [vmem:[%s75 + $0x28] sm:$0xff]
  %v82 = vld [vmem:[%s75 + $0x30] sm:$0xff]
  %v83 = vld [vmem:[%s75 + $0x38] sm:$0xff]
  %v84 = vld [vmem:[%s75 + $0x40] sm:$0xff]
  %v85 = vld [vmem:[%s75 + $0x48] sm:$0xff]
  %v86 = vld [vmem:[%s75 + $0x50] sm:$0xff]
  %v87 = vld [vmem:[%s75 + $0x58] sm:$0xff]
  %v88 = vld [vmem:[%s75 + $0x60] sm:$0xff]
  %v89 = vld [vmem:[%s75 + $0x68] sm:$0xff]
  %v90 = vld [vmem:[%s75 + $0x70] sm:$0xff]
  %v91 = vld [vmem:[%s75 + $0x78] sm:$0xff]
  %v92 = vld [vmem:[%s75 + $0x80] sm:$0xff]
  %v93 = vld [vmem:[%s75 + $0x88] sm:$0xff]
  %v94 = vld [vmem:[%s75 + $0x90] sm:$0xff]
  %v95 = vld [vmem:[%s75 + $0x98] sm:$0xff]
  %v96 = vld [vmem:[%s75 + $0xa0] sm:$0xff]
  %v97 = vld [vmem:[%s75 + $0xa8] sm:$0xff]
  %v98 = vld [vmem:[%s75 + $0xb0] sm:$0xff]
  %v99 = vld [vmem:[%s75 + $0xb8] sm:$0xff]
  %v100 = vld [vmem:[%s75 + $0xc0] sm:$0xff]
  %v101 = vld [vmem:[%s75 + $0xc8] sm:$0xff]
  %v102 = vld [vmem:[%s75 + $0xd0] sm:$0xff]
  %v103 = vld [vmem:[%s75 + $0xd8] sm:$0xff]
  %v104 = vld [vmem:[%s75 + $0xe0] sm:$0xff]
  %v105 = vld [vmem:[%s75 + $0xe8] sm:$0xff]
  %v106 = vld [vmem:[%s75 + $0xf0] sm:$0xff]
  %v107 = vld [vmem:[%s75 + $0xf8] sm:$0xff]
  %108 = vmatprep.subr.mxu0 %v77
  %109 = vmatpush1.msra.mxu0 %v76
  %110 = vmatprep.subr.mxu0 %v79
  %111 = vmatpush1.msra.mxu0 %v78
  %112 = vmatprep.subr.mxu0 %v81
  %113 = vmatpush1.msra.mxu0 %v80
  %114 = vmatprep.subr.mxu0 %v83
  %115 = vmatpush1.msra.mxu0 %v82
  %116 = vmatprep.subr.mxu0 %v85
  %117 = vmatpush1.msra.mxu0 %v84
  %118 = vmatprep.subr.mxu0 %v87
  %119 = vmatpush1.msra.mxu0 %v86
  %120 = vmatprep.subr.mxu0 %v89
  %121 = vmatpush1.msra.mxu0 %v88
  %122 = vmatprep.subr.mxu0 %v91
  %123 = vmatpush1.msra.mxu0 %v90
  %124 = vmatprep.subr.mxu0 %v93
  %125 = vmatpush1.msra.mxu0 %v92
  %126 = vmatprep.subr.mxu0 %v95
  %127 = vmatpush1.msra.mxu0 %v94
  %128 = vmatprep.subr.mxu0 %v97
  %129 = vmatpush1.msra.mxu0 %v96
  %130 = vmatprep.subr.mxu0 %v99
  %131 = vmatpush1.msra.mxu0 %v98
  %132 = vmatprep.subr.mxu0 %v101
  %133 = vmatpush1.msra.mxu0 %v100
  %134 = vmatprep.subr.mxu0 %v103
  %135 = vmatpush1.msra.mxu0 %v102
  %136 = vmatprep.subr.mxu0 %v105
  %137 = vmatpush1.msra.mxu0 %v104
  %138 = vmatprep.subr.mxu0 %v107
  %139 = vmatpush1.msra.mxu0 %v106
  %140 = vmatprep.subr.mxu0 0.0
  %141 = vmatpush1.msra.mxu0 0.0
  %142 = vmatprep.subr.mxu0 0.0
  %143 = vmatpush1.msra.mxu0 0.0
  %144 = vmatprep.subr.mxu0 0.0
  %145 = vmatpush1.msra.mxu0 0.0
  %146 = vmatprep.subr.mxu0 0.0
  %147 = vmatpush1.msra.mxu0 0.0
  %148 = vmatprep.subr.mxu0 0.0
  %149 = vmatpush1.msra.mxu0 0.0
  %150 = vmatprep.subr.mxu0 0.0
  %151 = vmatpush1.msra.mxu0 0.0
  %152 = vmatprep.subr.mxu0 0.0
  %153 = vmatpush1.msra.mxu0 0.0
  %154 = vmatprep.subr.mxu0 0.0
  %155 = vmatpush1.msra.mxu0 0.0
  %156 = vmatprep.subr.mxu0 0.0
  %157 = vmatpush1.msra.mxu0 0.0
  %158 = vmatprep.subr.mxu0 0.0
  %159 = vmatpush1.msra.mxu0 0.0
  %160 = vmatprep.subr.mxu0 0.0
  %161 = vmatpush1.msra.mxu0 0.0
  %162 = vmatprep.subr.mxu0 0.0
  %163 = vmatpush1.msra.mxu0 0.0
  %164 = vmatprep.subr.mxu0 0.0
  %165 = vmatpush1.msra.mxu0 0.0
  %166 = vmatprep.subr.mxu0 0.0
  %167 = vmatpush1.msra.mxu0 0.0
  %168 = vmatprep.subr.mxu0 0.0
  %169 = vmatpush1.msra.mxu0 0.0
  %170 = vmatprep.subr.mxu0 0.0
  %171 = vmatpush1.msra.mxu0 0.0
  %172 = vmatprep.mubr.f32.mxu0 0.0
  %173 = vmatmul.mubr.f32.gmra.mrb[0].mxu0 %v73
  %v174 = vpop.f32.mrb[0].mxu0
  %v175 = vadd.f32 0.0, %v174
  %v176 = vpop.f32.mrb[0].mxu0
  %v177 = vadd.f32 0.0, %v176
  %178 = vmatprep.mubr.f32.mxu0 0.0
  %179 = vmatmul.mubr.f32.gmra.mrb[0].mxu0 %v74
  %v180 = vpop.f32.mrb[0].mxu0
  %v181 = vadd.f32 0.0, %v180
  %v182 = vpop.f32.mrb[0].mxu0
  %v183 = vadd.f32 0.0, %v182
  %184 = vdwg.mxu0
  %185 = vmatprep.subr.mxu0 %v42
  %186 = vmatpush1.msra.mxu0 %v41
  %187 = vmatprep.subr.mxu0 %v44
  %188 = vmatpush1.msra.mxu0 %v43
  %189 = vmatprep.subr.mxu0 %v46
  %190 = vmatpush1.msra.mxu0 %v45
  %191 = vmatprep.subr.mxu0 %v48
  %192 = vmatpush1.msra.mxu0 %v47
  %193 = vmatprep.subr.mxu0 %v50
  %194 = vmatpush1.msra.mxu0 %v49
  %195 = vmatprep.subr.mxu0 %v52
  %196 = vmatpush1.msra.mxu0 %v51
  %197 = vmatprep.subr.mxu0 %v54
  %198 = vmatpush1.msra.mxu0 %v53
  %199 = vmatprep.subr.mxu0 %v56
  %200 = vmatpush1.msra.mxu0 %v55
  %201 = vmatprep.subr.mxu0 %v58
  %202 = vmatpush1.msra.mxu0 %v57
  %203 = vmatprep.subr.mxu0 %v60
  %204 = vmatpush1.msra.mxu0 %v59
  %205 = vmatprep.subr.mxu0 %v62
  %206 = vmatpush1.msra.mxu0 %v61
  %207 = vmatprep.subr.mxu0 %v64
  %208 = vmatpush1.msra.mxu0 %v63
  %209 = vmatprep.subr.mxu0 %v66
  %210 = vmatpush1.msra.mxu0 %v65
  %211 = vmatprep.subr.mxu0 %v68
  %212 = vmatpush1.msra.mxu0 %v67
  %213 = vmatprep.subr.mxu0 %v70
  %214 = vmatpush1.msra.mxu0 %v69
  %215 = vmatprep.subr.mxu0 %v72
  %216 = vmatpush1.msra.mxu0 %v71
  %217 = vmatprep.subr.mxu0 0.0
  %218 = vmatpush1.msra.mxu0 0.0
  %219 = vmatprep.subr.mxu0 0.0
  %220 = vmatpush1.msra.mxu0 0.0
  %221 = vmatprep.subr.mxu0 0.0
  %222 = vmatpush1.msra.mxu0 0.0
  %223 = vmatprep.subr.mxu0 0.0
  %224 = vmatpush1.msra.mxu0 0.0
  %225 = vmatprep.subr.mxu0 0.0
  %226 = vmatpush1.msra.mxu0 0.0
  %227 = vmatprep.subr.mxu0 0.0
  %228 = vmatpush1.msra.mxu0 0.0
  %229 = vmatprep.subr.mxu0 0.0
  %230 = vmatpush1.msra.mxu0 0.0
  %231 = vmatprep.subr.mxu0 0.0
  %232 = vmatpush1.msra.mxu0 0.0
  %233 = vmatprep.subr.mxu0 0.0
  %234 = vmatpush1.msra.mxu0 0.0
  %235 = vmatprep.subr.mxu0 0.0
  %236 = vmatpush1.msra.mxu0 0.0
  %237 = vmatprep.subr.mxu0 0.0
  %238 = vmatpush1.msra.mxu0 0.0
  %239 = vmatprep.subr.mxu0 0.0
  %240 = vmatpush1.msra.mxu0 0.0
  %241 = vmatprep.subr.mxu0 0.0
  %242 = vmatpush1.msra.mxu0 0.0
  %243 = vmatprep.subr.mxu0 0.0
  %244 = vmatpush1.msra.mxu0 0.0
  %245 = vmatprep.subr.mxu0 0.0
  %246 = vmatpush1.msra.mxu0 0.0
  %247 = vmatprep.subr.mxu0 0.0
  %248 = vmatpush1.msra.mxu0 0.0
  %249 = vmatprep.mubr.f32.mxu0 0.0
  %250 = vmatmul.mubr.f32.gmra.mrb[0].mxu0 %v39
  %v251 = vpop.f32.mrb[0].mxu0
  %v252 = vadd.f32 %v175, %v251
  %v253 = vpop.f32.mrb[0].mxu0
  %v254 = vadd.f32 %v177, %v253
  %255 = vmatprep.mubr.f32.mxu0 0.0
  %256 = vmatmul.mubr.f32.gmra.mrb[0].mxu0 %v40
  %v257 = vpop.f32.mrb[0].mxu0
  %v258 = vadd.f32 %v181, %v257
  %v259 = vpop.f32.mrb[0].mxu0
  %v260 = vadd.f32 %v183, %v259
  %261 = vdwg.mxu0
  %v262 = vld [vmem:[#allocation2 + $0x2] sm:$0xff]
  %v263 = vld [vmem:[#allocation2 + $0xa] sm:$0x3]
  %s264 = scalar_lea.vmem %s1, 512
  %v265 = vld [vmem:[%s264] sm:$0xff]
  %v266 = vld [vmem:[%s264 + $0x8] sm:$0xff]
  %v267 = vld [vmem:[%s264 + $0x10] sm:$0xff]
  %v268 = vld [vmem:[%s264 + $0x18] sm:$0xff]
  %v269 = vld [vmem:[%s264 + $0x20] sm:$0xff]
  %v270 = vld [vmem:[%s264 + $0x28] sm:$0xff]
  %v271 = vld [vmem:[%s264 + $0x30] sm:$0xff]
  %v272 = vld [vmem:[%s264 + $0x38] sm:$0xff]
  %v273 = vld [vmem:[%s264 + $0x40] sm:$0xff]
  %v274 = vld [vmem:[%s264 + $0x48] sm:$0xff]
  %v275 = vld [vmem:[%s264 + $0x50] sm:$0xff]
  %v276 = vld [vmem:[%s264 + $0x58] sm:$0xff]
  %v277 = vld [vmem:[%s264 + $0x60] sm:$0xff]
  %v278 = vld [vmem:[%s264 + $0x68] sm:$0xff]
  %v279 = vld [vmem:[%s264 + $0x70] sm:$0xff]
  %v280 = vld [vmem:[%s264 + $0x78] sm:$0xff]
  %v281 = vld [vmem:[%s264 + $0x80] sm:$0xff]
  %v282 = vld [vmem:[%s264 + $0x88] sm:$0xff]
  %v283 = vld [vmem:[%s264 + $0x90] sm:$0xff]
  %v284 = vld [vmem:[%s264 + $0x98] sm:$0xff]
  %v285 = vld [vmem:[%s264 + $0xa0] sm:$0xff]
  %v286 = vld [vmem:[%s264 + $0xa8] sm:$0xff]
  %v287 = vld [vmem:[%s264 + $0xb0] sm:$0xff]
  %v288 = vld [vmem:[%s264 + $0xb8] sm:$0xff]
  %v289 = vld [vmem:[%s264 + $0xc0] sm:$0xff]
  %v290 = vld [vmem:[%s264 + $0xc8] sm:$0xff]
  %v291 = vld [vmem:[%s264 + $0xd0] sm:$0xff]
  %v292 = vld [vmem:[%s264 + $0xd8] sm:$0xff]
  %v293 = vld [vmem:[%s264 + $0xe0] sm:$0xff]
  %v294 = vld [vmem:[%s264 + $0xe8] sm:$0xff]
  %v295 = vld [vmem:[%s264 + $0xf0] sm:$0xff]
  %v296 = vld [vmem:[%s264 + $0xf8] sm:$0xff]
  %297 = vmatprep.subr.mxu0 %v266
  %298 = vmatpush1.msra.mxu0 %v265
  %299 = vmatprep.subr.mxu0 %v268
  %300 = vmatpush1.msra.mxu0 %v267
  %301 = vmatprep.subr.mxu0 %v270
  %302 = vmatpush1.msra.mxu0 %v269
  %303 = vmatprep.subr.mxu0 %v272
  %304 = vmatpush1.msra.mxu0 %v271
  %305 = vmatprep.subr.mxu0 %v274
  %306 = vmatpush1.msra.mxu0 %v273
  %307 = vmatprep.subr.mxu0 %v276
  %308 = vmatpush1.msra.mxu0 %v275
  %309 = vmatprep.subr.mxu0 %v278
  %310 = vmatpush1.msra.mxu0 %v277
  %311 = vmatprep.subr.mxu0 %v280
  %312 = vmatpush1.msra.mxu0 %v279
  %313 = vmatprep.subr.mxu0 %v282
  %314 = vmatpush1.msra.mxu0 %v281
  %315 = vmatprep.subr.mxu0 %v284
  %316 = vmatpush1.msra.mxu0 %v283
  %317 = vmatprep.subr.mxu0 %v286
  %318 = vmatpush1.msra.mxu0 %v285
  %319 = vmatprep.subr.mxu0 %v288
  %320 = vmatpush1.msra.mxu0 %v287
  %321 = vmatprep.subr.mxu0 %v290
  %322 = vmatpush1.msra.mxu0 %v289
  %323 = vmatprep.subr.mxu0 %v292
  %324 = vmatpush1.msra.mxu0 %v291
  %325 = vmatprep.subr.mxu0 %v294
  %326 = vmatpush1.msra.mxu0 %v293
  %327 = vmatprep.subr.mxu0 %v296
  %328 = vmatpush1.msra.mxu0 %v295
  %329 = vmatprep.subr.mxu0 0.0
  %330 = vmatpush1.msra.mxu0 0.0
  %331 = vmatprep.subr.mxu0 0.0
  %332 = vmatpush1.msra.mxu0 0.0
  %333 = vmatprep.subr.mxu0 0.0
  %334 = vmatpush1.msra.mxu0 0.0
  %335 = vmatprep.subr.mxu0 0.0
  %336 = vmatpush1.msra.mxu0 0.0
  %337 = vmatprep.subr.mxu0 0.0
  %338 = vmatpush1.msra.mxu0 0.0
  %339 = vmatprep.subr.mxu0 0.0
  %340 = vmatpush1.msra.mxu0 0.0
  %341 = vmatprep.subr.mxu0 0.0
  %342 = vmatpush1.msra.mxu0 0.0
  %343 = vmatprep.subr.mxu0 0.0
  %344 = vmatpush1.msra.mxu0 0.0
  %345 = vmatprep.subr.mxu0 0.0
  %346 = vmatpush1.msra.mxu0 0.0
  %347 = vmatprep.subr.mxu0 0.0
  %348 = vmatpush1.msra.mxu0 0.0
  %349 = vmatprep.subr.mxu0 0.0
  %350 = vmatpush1.msra.mxu0 0.0
  %351 = vmatprep.subr.mxu0 0.0
  %352 = vmatpush1.msra.mxu0 0.0
  %353 = vmatprep.subr.mxu0 0.0
  %354 = vmatpush1.msra.mxu0 0.0
  %355 = vmatprep.subr.mxu0 0.0
  %356 = vmatpush1.msra.mxu0 0.0
  %357 = vmatprep.subr.mxu0 0.0
  %358 = vmatpush1.msra.mxu0 0.0
  %359 = vmatprep.subr.mxu0 0.0
  %360 = vmatpush1.msra.mxu0 0.0
  %361 = vmatprep.mubr.f32.mxu0 0.0
  %362 = vmatmul.mubr.f32.gmra.mrb[0].mxu0 %v262
  %v363 = vpop.f32.mrb[0].mxu0
  %v364 = vadd.f32 0.0, %v363
  %v365 = vpop.f32.mrb[0].mxu0
  %v366 = vadd.f32 0.0, %v365
  %367 = vmatprep.mubr.f32.mxu0 0.0
  %368 = vmatmul.mubr.f32.gmra.mrb[0].mxu0 %v263
  %v369 = vpop.f32.mrb[0].mxu0
  %v370 = vadd.f32 0.0, %v369
  %v371 = vpop.f32.mrb[0].mxu0
  %v372 = vadd.f32 0.0, %v371
  %373 = vdwg.mxu0
  %v374 = vadd.f32 %v252, %v364
  %v375 = vadd.f32 %v254, %v366
  %v376 = vadd.f32 %v258, %v370
  %v377 = vadd.f32 %v260, %v372
  %v378 = vld [vmem:[%s3] sm:$0x1]
  %v380 = vlaneseq
  %v381 = vshrl.u32 %v380, 7
  %v382 = vsub.s32 0, %v381
  %v383 = vrot.slane %v378, %v382
  %v385 = vadd.f32 %v374, %v383
  %v386 = vadd.f32 %v376, %v383
  %v387 = vmax.f32 %v385, 0.0
  %v388 = vmax.f32 %v386, 0.0
  %389 = vst [vmem:[#allocation3 + $0x1] sm:$0xf] %v387
  %390 = vst [vmem:[#allocation3 + $0x1] sm:$0xc0] %v387
  %391 = vst [vmem:[#allocation3 + $0x9] sm:$0x3] %v388
  %v392 = vld [vmem:[#allocation3] sm:$0xff]
  %v393 = vld [vmem:[#allocation3 + $0x8] sm:$0x3]
  %v394 = vld [vmem:[%s2] sm:$0xff]
  %v395 = vld [vmem:[%s2 + $0x8] sm:$0xff]
  %v396 = vld [vmem:[%s2 + $0x10] sm:$0xff]
  %v397 = vld [vmem:[%s2 + $0x18] sm:$0xff]
  %v398 = vld [vmem:[%s2 + $0x20] sm:$0xff]
  %v399 = vld [vmem:[%s2 + $0x28] sm:$0xff]
  %v400 = vld [vmem:[%s2 + $0x30] sm:$0xff]
  %v401 = vld [vmem:[%s2 + $0x38] sm:$0xff]
  %v402 = vld [vmem:[%s2 + $0x40] sm:$0xff]
  %v403 = vld [vmem:[%s2 + $0x48] sm:$0xff]
  %v404 = vld [vmem:[%s2 + $0x50] sm:$0xff]
  %v405 = vld [vmem:[%s2 + $0x58] sm:$0xff]
  %v406 = vld [vmem:[%s2 + $0x60] sm:$0xff]
  %v407 = vld [vmem:[%s2 + $0x68] sm:$0xff]
  %v408 = vld [vmem:[%s2 + $0x70] sm:$0xff]
  %v409 = vld [vmem:[%s2 + $0x78] sm:$0xff]
  %v410 = vld [vmem:[#allocation3 + $0x1] sm:$0xff]
  %v411 = vld [vmem:[#allocation3 + $0x9] sm:$0x3]
  %s412 = scalar_lea.vmem %s2, 128
  %v413 = vld [vmem:[%s412] sm:$0xff]
  %v414 = vld [vmem:[%s412 + $0x8] sm:$0xff]
  %v415 = vld [vmem:[%s412 + $0x10] sm:$0xff]
  %v416 = vld [vmem:[%s412 + $0x18] sm:$0xff]
  %v417 = vld [vmem:[%s412 + $0x20] sm:$0xff]
  %v418 = vld [vmem:[%s412 + $0x28] sm:$0xff]
  %v419 = vld [vmem:[%s412 + $0x30] sm:$0xff]
  %v420 = vld [vmem:[%s412 + $0x38] sm:$0xff]
  %v421 = vld [vmem:[%s412 + $0x40] sm:$0xff]
  %v422 = vld [vmem:[%s412 + $0x48] sm:$0xff]
  %v423 = vld [vmem:[%s412 + $0x50] sm:$0xff]
  %v424 = vld [vmem:[%s412 + $0x58] sm:$0xff]
  %v425 = vld [vmem:[%s412 + $0x60] sm:$0xff]
  %v426 = vld [vmem:[%s412 + $0x68] sm:$0xff]
  %v427 = vld [vmem:[%s412 + $0x70] sm:$0xff]
  %v428 = vld [vmem:[%s412 + $0x78] sm:$0xff]
  %429 = vmatprep.subr.mxu0 0.0
  %430 = vmatpush1.msra.mxu0 %v413
  %431 = vmatprep.subr.mxu0 0.0
  %432 = vmatpush1.msra.mxu0 %v414
  %433 = vmatprep.subr.mxu0 0.0
  %434 = vmatpush1.msra.mxu0 %v415
  %435 = vmatprep.subr.mxu0 0.0
  %436 = vmatpush1.msra.mxu0 %v416
  %437 = vmatprep.subr.mxu0 0.0
  %438 = vmatpush1.msra.mxu0 %v417
  %439 = vmatprep.subr.mxu0 0.0
  %440 = vmatpush1.msra.mxu0 %v418
  %441 = vmatprep.subr.mxu0 0.0
  %442 = vmatpush1.msra.mxu0 %v419
  %443 = vmatprep.subr.mxu0 0.0
  %444 = vmatpush1.msra.mxu0 %v420
  %445 = vmatprep.subr.mxu0 0.0
  %446 = vmatpush1.msra.mxu0 %v421
  %447 = vmatprep.subr.mxu0 0.0
  %448 = vmatpush1.msra.mxu0 %v422
  %449 = vmatprep.subr.mxu0 0.0
  %450 = vmatpush1.msra.mxu0 %v423
  %451 = vmatprep.subr.mxu0 0.0
  %452 = vmatpush1.msra.mxu0 %v424
  %453 = vmatprep.subr.mxu0 0.0
  %454 = vmatpush1.msra.mxu0 %v425
  %455 = vmatprep.subr.mxu0 0.0
  %456 = vmatpush1.msra.mxu0 %v426
  %457 = vmatprep.subr.mxu0 0.0
  %458 = vmatpush1.msra.mxu0 %v427
  %459 = vmatprep.subr.mxu0 0.0
  %460 = vmatpush1.msra.mxu0 %v428
  %461 = vmatprep.subr.mxu0 0.0
  %462 = vmatpush1.msra.mxu0 0.0
  %463 = vmatprep.subr.mxu0 0.0
  %464 = vmatpush1.msra.mxu0 0.0
  %465 = vmatprep.subr.mxu0 0.0
  %466 = vmatpush1.msra.mxu0 0.0
  %467 = vmatprep.subr.mxu0 0.0
  %468 = vmatpush1.msra.mxu0 0.0
  %469 = vmatprep.subr.mxu0 0.0
  %470 = vmatpush1.msra.mxu0 0.0
  %471 = vmatprep.subr.mxu0 0.0
  %472 = vmatpush1.msra.mxu0 0.0
  %473 = vmatprep.subr.mxu0 0.0
  %474 = vmatpush1.msra.mxu0 0.0
  %475 = vmatprep.subr.mxu0 0.0
  %476 = vmatpush1.msra.mxu0 0.0
  %477 = vmatprep.subr.mxu0 0.0
  %478 = vmatpush1.msra.mxu0 0.0
  %479 = vmatprep.subr.mxu0 0.0
  %480 = vmatpush1.msra.mxu0 0.0
  %481 = vmatprep.subr.mxu0 0.0
  %482 = vmatpush1.msra.mxu0 0.0
  %483 = vmatprep.subr.mxu0 0.0
  %484 = vmatpush1.msra.mxu0 0.0
  %485 = vmatprep.subr.mxu0 0.0
  %486 = vmatpush1.msra.mxu0 0.0
  %487 = vmatprep.subr.mxu0 0.0
  %488 = vmatpush1.msra.mxu0 0.0
  %489 = vmatprep.subr.mxu0 0.0
  %490 = vmatpush1.msra.mxu0 0.0
  %491 = vmatprep.subr.mxu0 0.0
  %492 = vmatpush1.msra.mxu0 0.0
  %493 = vmatprep.mubr.f32.mxu0 0.0
  %494 = vmatmul.mubr.f32.gmra.mrb[0].mxu0 %v410
  %v495 = vpop.f32.mrb[0].mxu0
  %v496 = vadd.f32 0.0, %v495
  %v497 = vpop.f32.mrb[0].mxu0
  %498 = vmatprep.mubr.f32.mxu0 0.0
  %499 = vmatmul.mubr.f32.gmra.mrb[0].mxu0 %v411
  %v500 = vpop.f32.mrb[0].mxu0
  %v501 = vadd.f32 0.0, %v500
  %v502 = vpop.f32.mrb[0].mxu0
  %503 = vdwg.mxu0
  %504 = vmatprep.subr.mxu0 0.0
  %505 = vmatpush1.msra.mxu0 %v394
  %506 = vmatprep.subr.mxu0 0.0
  %507 = vmatpush1.msra.mxu0 %v395
  %508 = vmatprep.subr.mxu0 0.0
  %509 = vmatpush1.msra.mxu0 %v396
  %510 = vmatprep.subr.mxu0 0.0
  %511 = vmatpush1.msra.mxu0 %v397
  %512 = vmatprep.subr.mxu0 0.0
  %513 = vmatpush1.msra.mxu0 %v398
  %514 = vmatprep.subr.mxu0 0.0
  %515 = vmatpush1.msra.mxu0 %v399
  %516 = vmatprep.subr.mxu0 0.0
  %517 = vmatpush1.msra.mxu0 %v400
  %518 = vmatprep.subr.mxu0 0.0
  %519 = vmatpush1.msra.mxu0 %v401
  %520 = vmatprep.subr.mxu0 0.0
  %521 = vmatpush1.msra.mxu0 %v402
  %522 = vmatprep.subr.mxu0 0.0
  %523 = vmatpush1.msra.mxu0 %v403
  %524 = vmatprep.subr.mxu0 0.0
  %525 = vmatpush1.msra.mxu0 %v404
  %526 = vmatprep.subr.mxu0 0.0
  %527 = vmatpush1.msra.mxu0 %v405
  %528 = vmatprep.subr.mxu0 0.0
  %529 = vmatpush1.msra.mxu0 %v406
  %530 = vmatprep.subr.mxu0 0.0
  %531 = vmatpush1.msra.mxu0 %v407
  %532 = vmatprep.subr.mxu0 0.0
  %533 = vmatpush1.msra.mxu0 %v408
  %534 = vmatprep.subr.mxu0 0.0
  %535 = vmatpush1.msra.mxu0 %v409
  %536 = vmatprep.subr.mxu0 0.0
  %537 = vmatpush1.msra.mxu0 0.0
  %538 = vmatprep.subr.mxu0 0.0
  %539 = vmatpush1.msra.mxu0 0.0
  %540 = vmatprep.subr.mxu0 0.0
  %541 = vmatpush1.msra.mxu0 0.0
  %542 = vmatprep.subr.mxu0 0.0
  %543 = vmatpush1.msra.mxu0 0.0
  %544 = vmatprep.subr.mxu0 0.0
  %545 = vmatpush1.msra.mxu0 0.0
  %546 = vmatprep.subr.mxu0 0.0
  %547 = vmatpush1.msra.mxu0 0.0
  %548 = vmatprep.subr.mxu0 0.0
  %549 = vmatpush1.msra.mxu0 0.0
  %550 = vmatprep.subr.mxu0 0.0
  %551 = vmatpush1.msra.mxu0 0.0
  %552 = vmatprep.subr.mxu0 0.0
  %553 = vmatpush1.msra.mxu0 0.0
  %554 = vmatprep.subr.mxu0 0.0
  %555 = vmatpush1.msra.mxu0 0.0
  %556 = vmatprep.subr.mxu0 0.0
  %557 = vmatpush1.msra.mxu0 0.0
  %558 = vmatprep.subr.mxu0 0.0
  %559 = vmatpush1.msra.mxu0 0.0
  %560 = vmatprep.subr.mxu0 0.0
  %561 = vmatpush1.msra.mxu0 0.0
  %562 = vmatprep.subr.mxu0 0.0
  %563 = vmatpush1.msra.mxu0 0.0
  %564 = vmatprep.subr.mxu0 0.0
  %565 = vmatpush1.msra.mxu0 0.0
  %566 = vmatprep.subr.mxu0 0.0
  %567 = vmatpush1.msra.mxu0 0.0
  %568 = vmatprep.mubr.f32.mxu0 0.0
  %569 = vmatmul.mubr.f32.gmra.mrb[0].mxu0 %v392
  %v570 = vpop.f32.mrb[0].mxu0
  %v571 = vadd.f32 %v496, %v570
  %v572 = vpop.f32.mrb[0].mxu0
  %573 = vmatprep.mubr.f32.mxu0 0.0
  %574 = vmatmul.mubr.f32.gmra.mrb[0].mxu0 %v393
  %v575 = vpop.f32.mrb[0].mxu0
  %v576 = vadd.f32 %v501, %v575
  %v577 = vpop.f32.mrb[0].mxu0
  %578 = vdwg.mxu0
  %v579 = vld [vmem:[#allocation3 + $0x2] sm:$0xff]
  %v580 = vld [vmem:[#allocation3 + $0xa] sm:$0x3]
  %s581 = scalar_lea.vmem %s2, 256
  %v582 = vld [vmem:[%s581] sm:$0xff]
  %v583 = vld [vmem:[%s581 + $0x8] sm:$0xff]
  %v584 = vld [vmem:[%s581 + $0x10] sm:$0xff]
  %v585 = vld [vmem:[%s581 + $0x18] sm:$0xff]
  %v586 = vld [vmem:[%s581 + $0x20] sm:$0xff]
  %v587 = vld [vmem:[%s581 + $0x28] sm:$0xff]
  %v588 = vld [vmem:[%s581 + $0x30] sm:$0xff]
  %v589 = vld [vmem:[%s581 + $0x38] sm:$0xff]
  %v590 = vld [vmem:[%s581 + $0x40] sm:$0xff]
  %v591 = vld [vmem:[%s581 + $0x48] sm:$0xff]
  %v592 = vld [vmem:[%s581 + $0x50] sm:$0xff]
  %v593 = vld [vmem:[%s581 + $0x58] sm:$0xff]
  %v594 = vld [vmem:[%s581 + $0x60] sm:$0xff]
  %v595 = vld [vmem:[%s581 + $0x68] sm:$0xff]
  %v596 = vld [vmem:[%s581 + $0x70] sm:$0xff]
  %v597 = vld [vmem:[%s581 + $0x78] sm:$0xff]
  %598 = vmatprep.subr.mxu0 0.0
  %599 = vmatpush1.msra.mxu0 %v582
  %600 = vmatprep.subr.mxu0 0.0
  %601 = vmatpush1.msra.mxu0 %v583
  %602 = vmatprep.subr.mxu0 0.0
  %603 = vmatpush1.msra.mxu0 %v584
  %604 = vmatprep.subr.mxu0 0.0
  %605 = vmatpush1.msra.mxu0 %v585
  %606 = vmatprep.subr.mxu0 0.0
  %607 = vmatpush1.msra.mxu0 %v586
  %608 = vmatprep.subr.mxu0 0.0
  %609 = vmatpush1.msra.mxu0 %v587
  %610 = vmatprep.subr.mxu0 0.0
  %611 = vmatpush1.msra.mxu0 %v588
  %612 = vmatprep.subr.mxu0 0.0
  %613 = vmatpush1.msra.mxu0 %v589
  %614 = vmatprep.subr.mxu0 0.0
  %615 = vmatpush1.msra.mxu0 %v590
  %616 = vmatprep.subr.mxu0 0.0
  %617 = vmatpush1.msra.mxu0 %v591
  %618 = vmatprep.subr.mxu0 0.0
  %619 = vmatpush1.msra.mxu0 %v592
  %620 = vmatprep.subr.mxu0 0.0
  %621 = vmatpush1.msra.mxu0 %v593
  %622 = vmatprep.subr.mxu0 0.0
  %623 = vmatpush1.msra.mxu0 %v594
  %624 = vmatprep.subr.mxu0 0.0
  %625 = vmatpush1.msra.mxu0 %v595
  %626 = vmatprep.subr.mxu0 0.0
  %627 = vmatpush1.msra.mxu0 %v596
  %628 = vmatprep.subr.mxu0 0.0
  %629 = vmatpush1.msra.mxu0 %v597
  %630 = vmatprep.subr.mxu0 0.0
  %631 = vmatpush1.msra.mxu0 0.0
  %632 = vmatprep.subr.mxu0 0.0
  %633 = vmatpush1.msra.mxu0 0.0
  %634 = vmatprep.subr.mxu0 0.0
  %635 = vmatpush1.msra.mxu0 0.0
  %636 = vmatprep.subr.mxu0 0.0
  %637 = vmatpush1.msra.mxu0 0.0
  %638 = vmatprep.subr.mxu0 0.0
  %639 = vmatpush1.msra.mxu0 0.0
  %640 = vmatprep.subr.mxu0 0.0
  %641 = vmatpush1.msra.mxu0 0.0
  %642 = vmatprep.subr.mxu0 0.0
  %643 = vmatpush1.msra.mxu0 0.0
  %644 = vmatprep.subr.mxu0 0.0
  %645 = vmatpush1.msra.mxu0 0.0
  %646 = vmatprep.subr.mxu0 0.0
  %647 = vmatpush1.msra.mxu0 0.0
  %648 = vmatprep.subr.mxu0 0.0
  %649 = vmatpush1.msra.mxu0 0.0
  %650 = vmatprep.subr.mxu0 0.0
  %651 = vmatpush1.msra.mxu0 0.0
  %652 = vmatprep.subr.mxu0 0.0
  %653 = vmatpush1.msra.mxu0 0.0
  %654 = vmatprep.subr.mxu0 0.0
  %655 = vmatpush1.msra.mxu0 0.0
  %656 = vmatprep.subr.mxu0 0.0
  %657 = vmatpush1.msra.mxu0 0.0
  %658 = vmatprep.subr.mxu0 0.0
  %659 = vmatpush1.msra.mxu0 0.0
  %660 = vmatprep.subr.mxu0 0.0
  %661 = vmatpush1.msra.mxu0 0.0
  %662 = vmatprep.mubr.f32.mxu0 0.0
  %663 = vmatmul.mubr.f32.gmra.mrb[0].mxu0 %v579
  %v664 = vpop.f32.mrb[0].mxu0
  %v665 = vadd.f32 0.0, %v664
  %v666 = vpop.f32.mrb[0].mxu0
  %667 = vmatprep.mubr.f32.mxu0 0.0
  %668 = vmatmul.mubr.f32.gmra.mrb[0].mxu0 %v580
  %v669 = vpop.f32.mrb[0].mxu0
  %v670 = vadd.f32 0.0, %v669
  %v671 = vpop.f32.mrb[0].mxu0
  %672 = vdwg.mxu0
  %v673 = vadd.f32 %v571, %v665
  %v674 = vadd.f32 %v576, %v670
  %v675 = vadd.f32 %v673, %v375
  %v676 = vadd.f32 %v674, %v377
  %v677 = vld [vmem:[%s4] sm:$0xff]
  %v678 = vld [vmem:[%s4 + $0x8] sm:$0x3]
  %v679 = vadd.f32 %v675, %v677
  %v680 = vadd.f32 %v676, %v678
  %681 = vst [vmem:[%s5] sm:$0xf] %v679
  %682 = vst [vmem:[%s5 - $0x2] sm:$0xc0] %v679
  %683 = vst [vmem:[%s5 + $0x6] sm:$0x3] %v680
  // Predicated region
  $region22: #{generative_encoder_fwd.6} parent=0 // pred_check
    _
  $region23: #{generative_encoder_fwd.6} parent=0 // pred_check_branch
    %685 = sbr.rel (0) target = $region25
  $region24: #{generative_encoder_fwd.6} parent=0 // pred_region
    _
  $region25: #{generative_encoder_fwd.6} parent=0 // pred_fallthru
    _
  // Predicated region
  $region26: #{generative_encoder_fwd.6} parent=0 // pred_check
    _
  $region27: #{generative_encoder_fwd.6} parent=0 // pred_check_branch
    %687 = sbr.rel (0) target = $region29
  $region28: #{generative_encoder_fwd.6} parent=0 // pred_region
    _
  $region29: #{generative_encoder_fwd.6} parent=0 // pred_fallthru
    _

// kernel: tile.73
$region0: #{tile.73}
  #allocation0 [shape = 's32[1]{0}', space=sflag, size = 0x4, scoped, tag = 'scoped memory for tile.73']
  %s0 = inlined_call_operand.vmem [shape: f32[64], index: 0, kind: input, shape index: {}]
  %s1 = inlined_call_operand.vmem [shape: f32[2,64], index: 1, kind: output, shape index: {}]
  // Predicated region
  $region2: #{tile.73} parent=0 // pred_check
    _
  $region3: #{tile.73} parent=0 // pred_check_branch
    %3 = sbr.rel (0) target = $region5
  $region4: #{tile.73} parent=0 // pred_region
    _
  $region5: #{tile.73} parent=0 // pred_fallthru
    _
  %v4 = vld [vmem:[%s0] ss:$0 sm:$0xff]
  %5 = vst [vmem:[%s1] sm:$0x3] %v4

// kernel: tile.74
$region0: #{tile.74}
  %s0 = inlined_call_operand.vmem [shape: f32[2,64], index: 0, kind: input, shape index: {}]
  %s1 = inlined_call_operand.vmem [shape: f32[1,128], index: 1, kind: output, shape index: {}]
  $region1: #{tile.74} parent=0
    #allocation0 [shape = 'u8[4096]{0}', space=vmem, size = 0x1000, scoped, tag = 'scoped mem for output reshape']
    #allocation1 [shape = 'u8[4096]{0}', space=vmem, size = 0x1000, scoped, tag = 'scoped mem for input reshape']
    %s3 = sshllo.u32 0, 2
    %v4 = vld [vmem:[%s0] sm:%s3]
    %5 = vst [vmem:[#allocation1] sm:%s3] %v4
    %v6 = vld [vmem:[#allocation1] sm:$0x1]
    %vm7 = vcmask 523264
    %8 = vst.msk [vmem:[#allocation0] sm:$0x1] %vm7, %v6
    %s9 = scalar_lea.vmem [#allocation1], 1
    %v10 = vld [vmem:[%s9] sm:$0x1]
    %11 = vrot.lane.b32.xlu0 %v10, 64
    %v12 = vpop.permute.xlu0 %11
    %vm13 = vcmask 1048064
    %14 = vst.msk [vmem:[#allocation0] sm:$0x1] %vm13, %v12
    %s16 = sshllo.u32 0, 1
    %v18 = vld [vmem:[#allocation0] sm:%s16]
    %s19 = sshllo.u32 0, 1
    %20 = vst [vmem:[%s1] sm:%s19] %v18

// kernel: generative_encoder_fwd.7
$region0: #{generative_encoder_fwd.7}
  #allocation0 [shape = 'u32[]', space=smem, size = 0x4, offset = 0x4, fixed_abs, tag = 'smem constant byte address 0x4 - core index']
  #allocation1 [shape = 'u32[144,128]{1,0:T(1,128)}', space=vmem, size = 0x12000, scoped, tag = 'internal scratch']
  #allocation2 [shape = 'f32[8,128]{1,0:T(8,128)}', space=vmem, size = 0x1000, scoped, tag = 'scratch operand']
  #allocation3 [shape = 'f32[8,128]{1,0:T(8,128)}', space=vmem, size = 0x1000, scoped, tag = 'scratch operand']
  %s0 = inlined_call_operand.vmem [shape: f32[8,128], index: 0, kind: input, shape index: {}]
  %s1 = inlined_call_operand.vmem [shape: f32[3,128,256], index: 1, kind: input, shape index: {}]
  %s2 = inlined_call_operand.vmem [shape: f32[3,128,128], index: 2, kind: input, shape index: {}]
  %s3 = inlined_call_operand.vmem [shape: f32[1,128], index: 3, kind: input, shape index: {}]
  %s4 = inlined_call_operand.vmem [shape: f32[6,128], index: 4, kind: input, shape index: {}]
  %s5 = inlined_call_operand.vmem [shape: f32[4,128], index: 5, kind: output, shape index: {}]
  %s6 = sld [smem:[#allocation0]]
  $region30: #{generative_encoder_fwd.7} parent=0
    _
  %s8 = ssub.s32 1, %s6
  %s9 = scalar_select 0, %s8, %s6
  // Predicated region
  $region2: #{generative_encoder_fwd.7} parent=0 // pred_check
    _
  $region3: #{generative_encoder_fwd.7} parent=0 // pred_check_branch
    %11 = sbr.rel (0) target = $region5
  $region4: #{generative_encoder_fwd.7} parent=0 // pred_region
    _
  $region5: #{generative_encoder_fwd.7} parent=0 // pred_fallthru
    _
  // Predicated region
  $region6: #{generative_encoder_fwd.7} parent=0 // pred_check
    _
  $region7: #{generative_encoder_fwd.7} parent=0 // pred_check_branch
    %13 = sbr.rel (0) target = $region9
  $region8: #{generative_encoder_fwd.7} parent=0 // pred_region
    _
  $region9: #{generative_encoder_fwd.7} parent=0 // pred_fallthru
    _
  // Predicated region
  $region10: #{generative_encoder_fwd.7} parent=0 // pred_check
    _
  $region11: #{generative_encoder_fwd.7} parent=0 // pred_check_branch
    %15 = sbr.rel (0) target = $region13
  $region12: #{generative_encoder_fwd.7} parent=0 // pred_region
    _
  $region13: #{generative_encoder_fwd.7} parent=0 // pred_fallthru
    _
  // Predicated region
  $region14: #{generative_encoder_fwd.7} parent=0 // pred_check
    _
  $region15: #{generative_encoder_fwd.7} parent=0 // pred_check_branch
    %17 = sbr.rel (0) target = $region17
  $region16: #{generative_encoder_fwd.7} parent=0 // pred_region
    _
  $region17: #{generative_encoder_fwd.7} parent=0 // pred_fallthru
    _
  // Predicated region
  $region18: #{generative_encoder_fwd.7} parent=0 // pred_check
    _
  $region19: #{generative_encoder_fwd.7} parent=0 // pred_check_branch
    %19 = sbr.rel (0) target = $region21
  $region20: #{generative_encoder_fwd.7} parent=0 // pred_region
    _
  $region21: #{generative_encoder_fwd.7} parent=0 // pred_fallthru
    _
  %v20 = vld [vmem:[%s0] ss:$2 sm:$0xf]
  %s21 = scalar_lea.vmem %s0, 1
  %v22 = vld [vmem:[%s21] ss:$2 sm:$0xf]
  %v23 = vmax.f32 %v20, %v22
  %25 = vrot.lane.b32.xlu0 %v23, 96
  %v26 = vpop.permute.xlu0 %25
  %v28 = vmax.f32 %v23, %v26
  %29 = vst [vmem:[#allocation2] sm:$0x1] 0.0
  %30 = vst [vmem:[#allocation2 + $0x3] sm:$0x1] 0.0
  %31 = vst [vmem:[#allocation3] sm:$0x1] 0.0
  %32 = vst [vmem:[#allocation3 + $0x3] sm:$0x1] 0.0
  %33 = vst [vmem:[#allocation2 + $0x1] sm:$0x3] %v28
  %34 = vst [vmem:[#allocation2 + $0x4] sm:$0x1] 0.0
  %35 = vst [vmem:[#allocation2 + $0x7] sm:$0x1] 0.0
  %36 = vst [vmem:[#allocation3 + $0x4] sm:$0x1] 0.0
  %37 = vst [vmem:[#allocation3 + $0x7] sm:$0x1] 0.0
  %38 = vst [vmem:[#allocation2 + $0x3] sm:$0xc] %v28
  %v39 = vld [vmem:[#allocation2] sm:$0x3f]
  %v40 = vld [vmem:[%s1] sm:$0xff]
  %v41 = vld [vmem:[%s1 + $0x8] sm:$0xff]
  %v42 = vld [vmem:[%s1 + $0x10] sm:$0xff]
  %v43 = vld [vmem:[%s1 + $0x18] sm:$0xff]
  %v44 = vld [vmem:[%s1 + $0x20] sm:$0xff]
  %v45 = vld [vmem:[%s1 + $0x28] sm:$0xff]
  %v46 = vld [vmem:[%s1 + $0x30] sm:$0xff]
  %v47 = vld [vmem:[%s1 + $0x38] sm:$0xff]
  %v48 = vld [vmem:[%s1 + $0x40] sm:$0xff]
  %v49 = vld [vmem:[%s1 + $0x48] sm:$0xff]
  %v50 = vld [vmem:[%s1 + $0x50] sm:$0xff]
  %v51 = vld [vmem:[%s1 + $0x58] sm:$0xff]
  %v52 = vld [vmem:[%s1 + $0x60] sm:$0xff]
  %v53 = vld [vmem:[%s1 + $0x68] sm:$0xff]
  %v54 = vld [vmem:[%s1 + $0x70] sm:$0xff]
  %v55 = vld [vmem:[%s1 + $0x78] sm:$0xff]
  %v56 = vld [vmem:[%s1 + $0x80] sm:$0xff]
  %v57 = vld [vmem:[%s1 + $0x88] sm:$0xff]
  %v58 = vld [vmem:[%s1 + $0x90] sm:$0xff]
  %v59 = vld [vmem:[%s1 + $0x98] sm:$0xff]
  %v60 = vld [vmem:[%s1 + $0xa0] sm:$0xff]
  %v61 = vld [vmem:[%s1 + $0xa8] sm:$0xff]
  %v62 = vld [vmem:[%s1 + $0xb0] sm:$0xff]
  %v63 = vld [vmem:[%s1 + $0xb8] sm:$0xff]
  %v64 = vld [vmem:[%s1 + $0xc0] sm:$0xff]
  %v65 = vld [vmem:[%s1 + $0xc8] sm:$0xff]
  %v66 = vld [vmem:[%s1 + $0xd0] sm:$0xff]
  %v67 = vld [vmem:[%s1 + $0xd8] sm:$0xff]
  %v68 = vld [vmem:[%s1 + $0xe0] sm:$0xff]
  %v69 = vld [vmem:[%s1 + $0xe8] sm:$0xff]
  %v70 = vld [vmem:[%s1 + $0xf0] sm:$0xff]
  %v71 = vld [vmem:[%s1 + $0xf8] sm:$0xff]
  %v72 = vld [vmem:[#allocation2 + $0x1] sm:$0x3f]
  %s73 = scalar_lea.vmem %s1, 256
  %v74 = vld [vmem:[%s73] sm:$0xff]
  %v75 = vld [vmem:[%s73 + $0x8] sm:$0xff]
  %v76 = vld [vmem:[%s73 + $0x10] sm:$0xff]
  %v77 = vld [vmem:[%s73 + $0x18] sm:$0xff]
  %v78 = vld [vmem:[%s73 + $0x20] sm:$0xff]
  %v79 = vld [vmem:[%s73 + $0x28] sm:$0xff]
  %v80 = vld [vmem:[%s73 + $0x30] sm:$0xff]
  %v81 = vld [vmem:[%s73 + $0x38] sm:$0xff]
  %v82 = vld [vmem:[%s73 + $0x40] sm:$0xff]
  %v83 = vld [vmem:[%s73 + $0x48] sm:$0xff]
  %v84 = vld [vmem:[%s73 + $0x50] sm:$0xff]
  %v85 = vld [vmem:[%s73 + $0x58] sm:$0xff]
  %v86 = vld [vmem:[%s73 + $0x60] sm:$0xff]
  %v87 = vld [vmem:[%s73 + $0x68] sm:$0xff]
  %v88 = vld [vmem:[%s73 + $0x70] sm:$0xff]
  %v89 = vld [vmem:[%s73 + $0x78] sm:$0xff]
  %v90 = vld [vmem:[%s73 + $0x80] sm:$0xff]
  %v91 = vld [vmem:[%s73 + $0x88] sm:$0xff]
  %v92 = vld [vmem:[%s73 + $0x90] sm:$0xff]
  %v93 = vld [vmem:[%s73 + $0x98] sm:$0xff]
  %v94 = vld [vmem:[%s73 + $0xa0] sm:$0xff]
  %v95 = vld [vmem:[%s73 + $0xa8] sm:$0xff]
  %v96 = vld [vmem:[%s73 + $0xb0] sm:$0xff]
  %v97 = vld [vmem:[%s73 + $0xb8] sm:$0xff]
  %v98 = vld [vmem:[%s73 + $0xc0] sm:$0xff]
  %v99 = vld [vmem:[%s73 + $0xc8] sm:$0xff]
  %v100 = vld [vmem:[%s73 + $0xd0] sm:$0xff]
  %v101 = vld [vmem:[%s73 + $0xd8] sm:$0xff]
  %v102 = vld [vmem:[%s73 + $0xe0] sm:$0xff]
  %v103 = vld [vmem:[%s73 + $0xe8] sm:$0xff]
  %v104 = vld [vmem:[%s73 + $0xf0] sm:$0xff]
  %v105 = vld [vmem:[%s73 + $0xf8] sm:$0xff]
  %106 = vmatprep.subr.mxu0 %v75
  %107 = vmatpush1.msra.mxu0 %v74
  %108 = vmatprep.subr.mxu0 %v77
  %109 = vmatpush1.msra.mxu0 %v76
  %110 = vmatprep.subr.mxu0 %v79
  %111 = vmatpush1.msra.mxu0 %v78
  %112 = vmatprep.subr.mxu0 %v81
  %113 = vmatpush1.msra.mxu0 %v80
  %114 = vmatprep.subr.mxu0 %v83
  %115 = vmatpush1.msra.mxu0 %v82
  %116 = vmatprep.subr.mxu0 %v85
  %117 = vmatpush1.msra.mxu0 %v84
  %118 = vmatprep.subr.mxu0 %v87
  %119 = vmatpush1.msra.mxu0 %v86
  %120 = vmatprep.subr.mxu0 %v89
  %121 = vmatpush1.msra.mxu0 %v88
  %122 = vmatprep.subr.mxu0 %v91
  %123 = vmatpush1.msra.mxu0 %v90
  %124 = vmatprep.subr.mxu0 %v93
  %125 = vmatpush1.msra.mxu0 %v92
  %126 = vmatprep.subr.mxu0 %v95
  %127 = vmatpush1.msra.mxu0 %v94
  %128 = vmatprep.subr.mxu0 %v97
  %129 = vmatpush1.msra.mxu0 %v96
  %130 = vmatprep.subr.mxu0 %v99
  %131 = vmatpush1.msra.mxu0 %v98
  %132 = vmatprep.subr.mxu0 %v101
  %133 = vmatpush1.msra.mxu0 %v100
  %134 = vmatprep.subr.mxu0 %v103
  %135 = vmatpush1.msra.mxu0 %v102
  %136 = vmatprep.subr.mxu0 %v105
  %137 = vmatpush1.msra.mxu0 %v104
  %138 = vmatprep.subr.mxu0 0.0
  %139 = vmatpush1.msra.mxu0 0.0
  %140 = vmatprep.subr.mxu0 0.0
  %141 = vmatpush1.msra.mxu0 0.0
  %142 = vmatprep.subr.mxu0 0.0
  %143 = vmatpush1.msra.mxu0 0.0
  %144 = vmatprep.subr.mxu0 0.0
  %145 = vmatpush1.msra.mxu0 0.0
  %146 = vmatprep.subr.mxu0 0.0
  %147 = vmatpush1.msra.mxu0 0.0
  %148 = vmatprep.subr.mxu0 0.0
  %149 = vmatpush1.msra.mxu0 0.0
  %150 = vmatprep.subr.mxu0 0.0
  %151 = vmatpush1.msra.mxu0 0.0
  %152 = vmatprep.subr.mxu0 0.0
  %153 = vmatpush1.msra.mxu0 0.0
  %154 = vmatprep.subr.mxu0 0.0
  %155 = vmatpush1.msra.mxu0 0.0
  %156 = vmatprep.subr.mxu0 0.0
  %157 = vmatpush1.msra.mxu0 0.0
  %158 = vmatprep.subr.mxu0 0.0
  %159 = vmatpush1.msra.mxu0 0.0
  %160 = vmatprep.subr.mxu0 0.0
  %161 = vmatpush1.msra.mxu0 0.0
  %162 = vmatprep.subr.mxu0 0.0
  %163 = vmatpush1.msra.mxu0 0.0
  %164 = vmatprep.subr.mxu0 0.0
  %165 = vmatpush1.msra.mxu0 0.0
  %166 = vmatprep.subr.mxu0 0.0
  %167 = vmatpush1.msra.mxu0 0.0
  %168 = vmatprep.subr.mxu0 0.0
  %169 = vmatpush1.msra.mxu0 0.0
  %170 = vmatprep.mubr.f32.mxu0 0.0
  %171 = vmatmul.mubr.f32.gmra.mrb[0].mxu0 %v72
  %v172 = vpop.f32.mrb[0].mxu0
  %v173 = vadd.f32 0.0, %v172
  %v174 = vpop.f32.mrb[0].mxu0
  %v175 = vadd.f32 0.0, %v174
  %176 = vdwg.mxu0
  %177 = vmatprep.subr.mxu0 %v41
  %178 = vmatpush1.msra.mxu0 %v40
  %179 = vmatprep.subr.mxu0 %v43
  %180 = vmatpush1.msra.mxu0 %v42
  %181 = vmatprep.subr.mxu0 %v45
  %182 = vmatpush1.msra.mxu0 %v44
  %183 = vmatprep.subr.mxu0 %v47
  %184 = vmatpush1.msra.mxu0 %v46
  %185 = vmatprep.subr.mxu0 %v49
  %186 = vmatpush1.msra.mxu0 %v48
  %187 = vmatprep.subr.mxu0 %v51
  %188 = vmatpush1.msra.mxu0 %v50
  %189 = vmatprep.subr.mxu0 %v53
  %190 = vmatpush1.msra.mxu0 %v52
  %191 = vmatprep.subr.mxu0 %v55
  %192 = vmatpush1.msra.mxu0 %v54
  %193 = vmatprep.subr.mxu0 %v57
  %194 = vmatpush1.msra.mxu0 %v56
  %195 = vmatprep.subr.mxu0 %v59
  %196 = vmatpush1.msra.mxu0 %v58
  %197 = vmatprep.subr.mxu0 %v61
  %198 = vmatpush1.msra.mxu0 %v60
  %199 = vmatprep.subr.mxu0 %v63
  %200 = vmatpush1.msra.mxu0 %v62
  %201 = vmatprep.subr.mxu0 %v65
  %202 = vmatpush1.msra.mxu0 %v64
  %203 = vmatprep.subr.mxu0 %v67
  %204 = vmatpush1.msra.mxu0 %v66
  %205 = vmatprep.subr.mxu0 %v69
  %206 = vmatpush1.msra.mxu0 %v68
  %207 = vmatprep.subr.mxu0 %v71
  %208 = vmatpush1.msra.mxu0 %v70
  %209 = vmatprep.subr.mxu0 0.0
  %210 = vmatpush1.msra.mxu0 0.0
  %211 = vmatprep.subr.mxu0 0.0
  %212 = vmatpush1.msra.mxu0 0.0
  %213 = vmatprep.subr.mxu0 0.0
  %214 = vmatpush1.msra.mxu0 0.0
  %215 = vmatprep.subr.mxu0 0.0
  %216 = vmatpush1.msra.mxu0 0.0
  %217 = vmatprep.subr.mxu0 0.0
  %218 = vmatpush1.msra.mxu0 0.0
  %219 = vmatprep.subr.mxu0 0.0
  %220 = vmatpush1.msra.mxu0 0.0
  %221 = vmatprep.subr.mxu0 0.0
  %222 = vmatpush1.msra.mxu0 0.0
  %223 = vmatprep.subr.mxu0 0.0
  %224 = vmatpush1.msra.mxu0 0.0
  %225 = vmatprep.subr.mxu0 0.0
  %226 = vmatpush1.msra.mxu0 0.0
  %227 = vmatprep.subr.mxu0 0.0
  %228 = vmatpush1.msra.mxu0 0.0
  %229 = vmatprep.subr.mxu0 0.0
  %230 = vmatpush1.msra.mxu0 0.0
  %231 = vmatprep.subr.mxu0 0.0
  %232 = vmatpush1.msra.mxu0 0.0
  %233 = vmatprep.subr.mxu0 0.0
  %234 = vmatpush1.msra.mxu0 0.0
  %235 = vmatprep.subr.mxu0 0.0
  %236 = vmatpush1.msra.mxu0 0.0
  %237 = vmatprep.subr.mxu0 0.0
  %238 = vmatpush1.msra.mxu0 0.0
  %239 = vmatprep.subr.mxu0 0.0
  %240 = vmatpush1.msra.mxu0 0.0
  %241 = vmatprep.mubr.f32.mxu0 0.0
  %242 = vmatmul.mubr.f32.gmra.mrb[0].mxu0 %v39
  %v243 = vpop.f32.mrb[0].mxu0
  %v244 = vadd.f32 %v173, %v243
  %v245 = vpop.f32.mrb[0].mxu0
  %v246 = vadd.f32 %v175, %v245
  %247 = vdwg.mxu0
  %v248 = vld [vmem:[#allocation2 + $0x2] sm:$0x3f]
  %s249 = scalar_lea.vmem %s1, 512
  %v250 = vld [vmem:[%s249] sm:$0xff]
  %v251 = vld [vmem:[%s249 + $0x8] sm:$0xff]
  %v252 = vld [vmem:[%s249 + $0x10] sm:$0xff]
  %v253 = vld [vmem:[%s249 + $0x18] sm:$0xff]
  %v254 = vld [vmem:[%s249 + $0x20] sm:$0xff]
  %v255 = vld [vmem:[%s249 + $0x28] sm:$0xff]
  %v256 = vld [vmem:[%s249 + $0x30] sm:$0xff]
  %v257 = vld [vmem:[%s249 + $0x38] sm:$0xff]
  %v258 = vld [vmem:[%s249 + $0x40] sm:$0xff]
  %v259 = vld [vmem:[%s249 + $0x48] sm:$0xff]
  %v260 = vld [vmem:[%s249 + $0x50] sm:$0xff]
  %v261 = vld [vmem:[%s249 + $0x58] sm:$0xff]
  %v262 = vld [vmem:[%s249 + $0x60] sm:$0xff]
  %v263 = vld [vmem:[%s249 + $0x68] sm:$0xff]
  %v264 = vld [vmem:[%s249 + $0x70] sm:$0xff]
  %v265 = vld [vmem:[%s249 + $0x78] sm:$0xff]
  %v266 = vld [vmem:[%s249 + $0x80] sm:$0xff]
  %v267 = vld [vmem:[%s249 + $0x88] sm:$0xff]
  %v268 = vld [vmem:[%s249 + $0x90] sm:$0xff]
  %v269 = vld [vmem:[%s249 + $0x98] sm:$0xff]
  %v270 = vld [vmem:[%s249 + $0xa0] sm:$0xff]
  %v271 = vld [vmem:[%s249 + $0xa8] sm:$0xff]
  %v272 = vld [vmem:[%s249 + $0xb0] sm:$0xff]
  %v273 = vld [vmem:[%s249 + $0xb8] sm:$0xff]
  %v274 = vld [vmem:[%s249 + $0xc0] sm:$0xff]
  %v275 = vld [vmem:[%s249 + $0xc8] sm:$0xff]
  %v276 = vld [vmem:[%s249 + $0xd0] sm:$0xff]
  %v277 = vld [vmem:[%s249 + $0xd8] sm:$0xff]
  %v278 = vld [vmem:[%s249 + $0xe0] sm:$0xff]
  %v279 = vld [vmem:[%s249 + $0xe8] sm:$0xff]
  %v280 = vld [vmem:[%s249 + $0xf0] sm:$0xff]
  %v281 = vld [vmem:[%s249 + $0xf8] sm:$0xff]
  %282 = vmatprep.subr.mxu0 %v251
  %283 = vmatpush1.msra.mxu0 %v250
  %284 = vmatprep.subr.mxu0 %v253
  %285 = vmatpush1.msra.mxu0 %v252
  %286 = vmatprep.subr.mxu0 %v255
  %287 = vmatpush1.msra.mxu0 %v254
  %288 = vmatprep.subr.mxu0 %v257
  %289 = vmatpush1.msra.mxu0 %v256
  %290 = vmatprep.subr.mxu0 %v259
  %291 = vmatpush1.msra.mxu0 %v258
  %292 = vmatprep.subr.mxu0 %v261
  %293 = vmatpush1.msra.mxu0 %v260
  %294 = vmatprep.subr.mxu0 %v263
  %295 = vmatpush1.msra.mxu0 %v262
  %296 = vmatprep.subr.mxu0 %v265
  %297 = vmatpush1.msra.mxu0 %v264
  %298 = vmatprep.subr.mxu0 %v267
  %299 = vmatpush1.msra.mxu0 %v266
  %300 = vmatprep.subr.mxu0 %v269
  %301 = vmatpush1.msra.mxu0 %v268
  %302 = vmatprep.subr.mxu0 %v271
  %303 = vmatpush1.msra.mxu0 %v270
  %304 = vmatprep.subr.mxu0 %v273
  %305 = vmatpush1.msra.mxu0 %v272
  %306 = vmatprep.subr.mxu0 %v275
  %307 = vmatpush1.msra.mxu0 %v274
  %308 = vmatprep.subr.mxu0 %v277
  %309 = vmatpush1.msra.mxu0 %v276
  %310 = vmatprep.subr.mxu0 %v279
  %311 = vmatpush1.msra.mxu0 %v278
  %312 = vmatprep.subr.mxu0 %v281
  %313 = vmatpush1.msra.mxu0 %v280
  %314 = vmatprep.subr.mxu0 0.0
  %315 = vmatpush1.msra.mxu0 0.0
  %316 = vmatprep.subr.mxu0 0.0
  %317 = vmatpush1.msra.mxu0 0.0
  %318 = vmatprep.subr.mxu0 0.0
  %319 = vmatpush1.msra.mxu0 0.0
  %320 = vmatprep.subr.mxu0 0.0
  %321 = vmatpush1.msra.mxu0 0.0
  %322 = vmatprep.subr.mxu0 0.0
  %323 = vmatpush1.msra.mxu0 0.0
  %324 = vmatprep.subr.mxu0 0.0
  %325 = vmatpush1.msra.mxu0 0.0
  %326 = vmatprep.subr.mxu0 0.0
  %327 = vmatpush1.msra.mxu0 0.0
  %328 = vmatprep.subr.mxu0 0.0
  %329 = vmatpush1.msra.mxu0 0.0
  %330 = vmatprep.subr.mxu0 0.0
  %331 = vmatpush1.msra.mxu0 0.0
  %332 = vmatprep.subr.mxu0 0.0
  %333 = vmatpush1.msra.mxu0 0.0
  %334 = vmatprep.subr.mxu0 0.0
  %335 = vmatpush1.msra.mxu0 0.0
  %336 = vmatprep.subr.mxu0 0.0
  %337 = vmatpush1.msra.mxu0 0.0
  %338 = vmatprep.subr.mxu0 0.0
  %339 = vmatpush1.msra.mxu0 0.0
  %340 = vmatprep.subr.mxu0 0.0
  %341 = vmatpush1.msra.mxu0 0.0
  %342 = vmatprep.subr.mxu0 0.0
  %343 = vmatpush1.msra.mxu0 0.0
  %344 = vmatprep.subr.mxu0 0.0
  %345 = vmatpush1.msra.mxu0 0.0
  %346 = vmatprep.mubr.f32.mxu0 0.0
  %347 = vmatmul.mubr.f32.gmra.mrb[0].mxu0 %v248
  %v348 = vpop.f32.mrb[0].mxu0
  %v349 = vadd.f32 0.0, %v348
  %v350 = vpop.f32.mrb[0].mxu0
  %v351 = vadd.f32 0.0, %v350
  %352 = vdwg.mxu0
  %v353 = vadd.f32 %v244, %v349
  %v354 = vadd.f32 %v246, %v351
  %v355 = vld [vmem:[%s3] sm:$0x1]
  %v357 = vlaneseq
  %v358 = vshrl.u32 %v357, 7
  %v359 = vsub.s32 0, %v358
  %v360 = vrot.slane %v355, %v359
  %v362 = vadd.f32 %v353, %v360
  %v363 = vmax.f32 %v362, 0.0
  %364 = vst [vmem:[#allocation3 + $0x1] sm:$0x3] %v363
  %365 = vst [vmem:[#allocation3 + $0x1] sm:$0x30] %v363
  %v366 = vld [vmem:[#allocation3] sm:$0x3f]
  %v367 = vld [vmem:[%s2] sm:$0xff]
  %v368 = vld [vmem:[%s2 + $0x8] sm:$0xff]
  %v369 = vld [vmem:[%s2 + $0x10] sm:$0xff]
  %v370 = vld [vmem:[%s2 + $0x18] sm:$0xff]
  %v371 = vld [vmem:[%s2 + $0x20] sm:$0xff]
  %v372 = vld [vmem:[%s2 + $0x28] sm:$0xff]
  %v373 = vld [vmem:[%s2 + $0x30] sm:$0xff]
  %v374 = vld [vmem:[%s2 + $0x38] sm:$0xff]
  %v375 = vld [vmem:[%s2 + $0x40] sm:$0xff]
  %v376 = vld [vmem:[%s2 + $0x48] sm:$0xff]
  %v377 = vld [vmem:[%s2 + $0x50] sm:$0xff]
  %v378 = vld [vmem:[%s2 + $0x58] sm:$0xff]
  %v379 = vld [vmem:[%s2 + $0x60] sm:$0xff]
  %v380 = vld [vmem:[%s2 + $0x68] sm:$0xff]
  %v381 = vld [vmem:[%s2 + $0x70] sm:$0xff]
  %v382 = vld [vmem:[%s2 + $0x78] sm:$0xff]
  %v383 = vld [vmem:[#allocation3 + $0x1] sm:$0x3f]
  %s384 = scalar_lea.vmem %s2, 128
  %v385 = vld [vmem:[%s384] sm:$0xff]
  %v386 = vld [vmem:[%s384 + $0x8] sm:$0xff]
  %v387 = vld [vmem:[%s384 + $0x10] sm:$0xff]
  %v388 = vld [vmem:[%s384 + $0x18] sm:$0xff]
  %v389 = vld [vmem:[%s384 + $0x20] sm:$0xff]
  %v390 = vld [vmem:[%s384 + $0x28] sm:$0xff]
  %v391 = vld [vmem:[%s384 + $0x30] sm:$0xff]
  %v392 = vld [vmem:[%s384 + $0x38] sm:$0xff]
  %v393 = vld [vmem:[%s384 + $0x40] sm:$0xff]
  %v394 = vld [vmem:[%s384 + $0x48] sm:$0xff]
  %v395 = vld [vmem:[%s384 + $0x50] sm:$0xff]
  %v396 = vld [vmem:[%s384 + $0x58] sm:$0xff]
  %v397 = vld [vmem:[%s384 + $0x60] sm:$0xff]
  %v398 = vld [vmem:[%s384 + $0x68] sm:$0xff]
  %v399 = vld [vmem:[%s384 + $0x70] sm:$0xff]
  %v400 = vld [vmem:[%s384 + $0x78] sm:$0xff]
  %401 = vmatprep.subr.mxu0 0.0
  %402 = vmatpush1.msra.mxu0 %v385
  %403 = vmatprep.subr.mxu0 0.0
  %404 = vmatpush1.msra.mxu0 %v386
  %405 = vmatprep.subr.mxu0 0.0
  %406 = vmatpush1.msra.mxu0 %v387
  %407 = vmatprep.subr.mxu0 0.0
  %408 = vmatpush1.msra.mxu0 %v388
  %409 = vmatprep.subr.mxu0 0.0
  %410 = vmatpush1.msra.mxu0 %v389
  %411 = vmatprep.subr.mxu0 0.0
  %412 = vmatpush1.msra.mxu0 %v390
  %413 = vmatprep.subr.mxu0 0.0
  %414 = vmatpush1.msra.mxu0 %v391
  %415 = vmatprep.subr.mxu0 0.0
  %416 = vmatpush1.msra.mxu0 %v392
  %417 = vmatprep.subr.mxu0 0.0
  %418 = vmatpush1.msra.mxu0 %v393
  %419 = vmatprep.subr.mxu0 0.0
  %420 = vmatpush1.msra.mxu0 %v394
  %421 = vmatprep.subr.mxu0 0.0
  %422 = vmatpush1.msra.mxu0 %v395
  %423 = vmatprep.subr.mxu0 0.0
  %424 = vmatpush1.msra.mxu0 %v396
  %425 = vmatprep.subr.mxu0 0.0
  %426 = vmatpush1.msra.mxu0 %v397
  %427 = vmatprep.subr.mxu0 0.0
  %428 = vmatpush1.msra.mxu0 %v398
  %429 = vmatprep.subr.mxu0 0.0
  %430 = vmatpush1.msra.mxu0 %v399
  %431 = vmatprep.subr.mxu0 0.0
  %432 = vmatpush1.msra.mxu0 %v400
  %433 = vmatprep.subr.mxu0 0.0
  %434 = vmatpush1.msra.mxu0 0.0
  %435 = vmatprep.subr.mxu0 0.0
  %436 = vmatpush1.msra.mxu0 0.0
  %437 = vmatprep.subr.mxu0 0.0
  %438 = vmatpush1.msra.mxu0 0.0
  %439 = vmatprep.subr.mxu0 0.0
  %440 = vmatpush1.msra.mxu0 0.0
  %441 = vmatprep.subr.mxu0 0.0
  %442 = vmatpush1.msra.mxu0 0.0
  %443 = vmatprep.subr.mxu0 0.0
  %444 = vmatpush1.msra.mxu0 0.0
  %445 = vmatprep.subr.mxu0 0.0
  %446 = vmatpush1.msra.mxu0 0.0
  %447 = vmatprep.subr.mxu0 0.0
  %448 = vmatpush1.msra.mxu0 0.0
  %449 = vmatprep.subr.mxu0 0.0
  %450 = vmatpush1.msra.mxu0 0.0
  %451 = vmatprep.subr.mxu0 0.0
  %452 = vmatpush1.msra.mxu0 0.0
  %453 = vmatprep.subr.mxu0 0.0
  %454 = vmatpush1.msra.mxu0 0.0
  %455 = vmatprep.subr.mxu0 0.0
  %456 = vmatpush1.msra.mxu0 0.0
  %457 = vmatprep.subr.mxu0 0.0
  %458 = vmatpush1.msra.mxu0 0.0
  %459 = vmatprep.subr.mxu0 0.0
  %460 = vmatpush1.msra.mxu0 0.0
  %461 = vmatprep.subr.mxu0 0.0
  %462 = vmatpush1.msra.mxu0 0.0
  %463 = vmatprep.subr.mxu0 0.0
  %464 = vmatpush1.msra.mxu0 0.0
  %465 = vmatprep.mubr.f32.mxu0 0.0
  %466 = vmatmul.mubr.f32.gmra.mrb[0].mxu0 %v383
  %v467 = vpop.f32.mrb[0].mxu0
  %v468 = vadd.f32 0.0, %v467
  %v469 = vpop.f32.mrb[0].mxu0
  %470 = vdwg.mxu0
  %471 = vmatprep.subr.mxu0 0.0
  %472 = vmatpush1.msra.mxu0 %v367
  %473 = vmatprep.subr.mxu0 0.0
  %474 = vmatpush1.msra.mxu0 %v368
  %475 = vmatprep.subr.mxu0 0.0
  %476 = vmatpush1.msra.mxu0 %v369
  %477 = vmatprep.subr.mxu0 0.0
  %478 = vmatpush1.msra.mxu0 %v370
  %479 = vmatprep.subr.mxu0 0.0
  %480 = vmatpush1.msra.mxu0 %v371
  %481 = vmatprep.subr.mxu0 0.0
  %482 = vmatpush1.msra.mxu0 %v372
  %483 = vmatprep.subr.mxu0 0.0
  %484 = vmatpush1.msra.mxu0 %v373
  %485 = vmatprep.subr.mxu0 0.0
  %486 = vmatpush1.msra.mxu0 %v374
  %487 = vmatprep.subr.mxu0 0.0
  %488 = vmatpush1.msra.mxu0 %v375
  %489 = vmatprep.subr.mxu0 0.0
  %490 = vmatpush1.msra.mxu0 %v376
  %491 = vmatprep.subr.mxu0 0.0
  %492 = vmatpush1.msra.mxu0 %v377
  %493 = vmatprep.subr.mxu0 0.0
  %494 = vmatpush1.msra.mxu0 %v378
  %495 = vmatprep.subr.mxu0 0.0
  %496 = vmatpush1.msra.mxu0 %v379
  %497 = vmatprep.subr.mxu0 0.0
  %498 = vmatpush1.msra.mxu0 %v380
  %499 = vmatprep.subr.mxu0 0.0
  %500 = vmatpush1.msra.mxu0 %v381
  %501 = vmatprep.subr.mxu0 0.0
  %502 = vmatpush1.msra.mxu0 %v382
  %503 = vmatprep.subr.mxu0 0.0
  %504 = vmatpush1.msra.mxu0 0.0
  %505 = vmatprep.subr.mxu0 0.0
  %506 = vmatpush1.msra.mxu0 0.0
  %507 = vmatprep.subr.mxu0 0.0
  %508 = vmatpush1.msra.mxu0 0.0
  %509 = vmatprep.subr.mxu0 0.0
  %510 = vmatpush1.msra.mxu0 0.0
  %511 = vmatprep.subr.mxu0 0.0
  %512 = vmatpush1.msra.mxu0 0.0
  %513 = vmatprep.subr.mxu0 0.0
  %514 = vmatpush1.msra.mxu0 0.0
  %515 = vmatprep.subr.mxu0 0.0
  %516 = vmatpush1.msra.mxu0 0.0
  %517 = vmatprep.subr.mxu0 0.0
  %518 = vmatpush1.msra.mxu0 0.0
  %519 = vmatprep.subr.mxu0 0.0
  %520 = vmatpush1.msra.mxu0 0.0
  %521 = vmatprep.subr.mxu0 0.0
  %522 = vmatpush1.msra.mxu0 0.0
  %523 = vmatprep.subr.mxu0 0.0
  %524 = vmatpush1.msra.mxu0 0.0
  %525 = vmatprep.subr.mxu0 0.0
  %526 = vmatpush1.msra.mxu0 0.0
  %527 = vmatprep.subr.mxu0 0.0
  %528 = vmatpush1.msra.mxu0 0.0
  %529 = vmatprep.subr.mxu0 0.0
  %530 = vmatpush1.msra.mxu0 0.0
  %531 = vmatprep.subr.mxu0 0.0
  %532 = vmatpush1.msra.mxu0 0.0
  %533 = vmatprep.subr.mxu0 0.0
  %534 = vmatpush1.msra.mxu0 0.0
  %535 = vmatprep.mubr.f32.mxu0 0.0
  %536 = vmatmul.mubr.f32.gmra.mrb[0].mxu0 %v366
  %v537 = vpop.f32.mrb[0].mxu0
  %v538 = vadd.f32 %v468, %v537
  %v539 = vpop.f32.mrb[0].mxu0
  %540 = vdwg.mxu0
  %v541 = vld [vmem:[#allocation3 + $0x2] sm:$0x3f]
  %s542 = scalar_lea.vmem %s2, 256
  %v543 = vld [vmem:[%s542] sm:$0xff]
  %v544 = vld [vmem:[%s542 + $0x8] sm:$0xff]
  %v545 = vld [vmem:[%s542 + $0x10] sm:$0xff]
  %v546 = vld [vmem:[%s542 + $0x18] sm:$0xff]
  %v547 = vld [vmem:[%s542 + $0x20] sm:$0xff]
  %v548 = vld [vmem:[%s542 + $0x28] sm:$0xff]
  %v549 = vld [vmem:[%s542 + $0x30] sm:$0xff]
  %v550 = vld [vmem:[%s542 + $0x38] sm:$0xff]
  %v551 = vld [vmem:[%s542 + $0x40] sm:$0xff]
  %v552 = vld [vmem:[%s542 + $0x48] sm:$0xff]
  %v553 = vld [vmem:[%s542 + $0x50] sm:$0xff]
  %v554 = vld [vmem:[%s542 + $0x58] sm:$0xff]
  %v555 = vld [vmem:[%s542 + $0x60] sm:$0xff]
  %v556 = vld [vmem:[%s542 + $0x68] sm:$0xff]
  %v557 = vld [vmem:[%s542 + $0x70] sm:$0xff]
  %v558 = vld [vmem:[%s542 + $0x78] sm:$0xff]
  %559 = vmatprep.subr.mxu0 0.0
  %560 = vmatpush1.msra.mxu0 %v543
  %561 = vmatprep.subr.mxu0 0.0
  %562 = vmatpush1.msra.mxu0 %v544
  %563 = vmatprep.subr.mxu0 0.0
  %564 = vmatpush1.msra.mxu0 %v545
  %565 = vmatprep.subr.mxu0 0.0
  %566 = vmatpush1.msra.mxu0 %v546
  %567 = vmatprep.subr.mxu0 0.0
  %568 = vmatpush1.msra.mxu0 %v547
  %569 = vmatprep.subr.mxu0 0.0
  %570 = vmatpush1.msra.mxu0 %v548
  %571 = vmatprep.subr.mxu0 0.0
  %572 = vmatpush1.msra.mxu0 %v549
  %573 = vmatprep.subr.mxu0 0.0
  %574 = vmatpush1.msra.mxu0 %v550
  %575 = vmatprep.subr.mxu0 0.0
  %576 = vmatpush1.msra.mxu0 %v551
  %577 = vmatprep.subr.mxu0 0.0
  %578 = vmatpush1.msra.mxu0 %v552
  %579 = vmatprep.subr.mxu0 0.0
  %580 = vmatpush1.msra.mxu0 %v553
  %581 = vmatprep.subr.mxu0 0.0
  %582 = vmatpush1.msra.mxu0 %v554
  %583 = vmatprep.subr.mxu0 0.0
  %584 = vmatpush1.msra.mxu0 %v555
  %585 = vmatprep.subr.mxu0 0.0
  %586 = vmatpush1.msra.mxu0 %v556
  %587 = vmatprep.subr.mxu0 0.0
  %588 = vmatpush1.msra.mxu0 %v557
  %589 = vmatprep.subr.mxu0 0.0
  %590 = vmatpush1.msra.mxu0 %v558
  %591 = vmatprep.subr.mxu0 0.0
  %592 = vmatpush1.msra.mxu0 0.0
  %593 = vmatprep.subr.mxu0 0.0
  %594 = vmatpush1.msra.mxu0 0.0
  %595 = vmatprep.subr.mxu0 0.0
  %596 = vmatpush1.msra.mxu0 0.0
  %597 = vmatprep.subr.mxu0 0.0
  %598 = vmatpush1.msra.mxu0 0.0
  %599 = vmatprep.subr.mxu0 0.0
  %600 = vmatpush1.msra.mxu0 0.0
  %601 = vmatprep.subr.mxu0 0.0
  %602 = vmatpush1.msra.mxu0 0.0
  %603 = vmatprep.subr.mxu0 0.0
  %604 = vmatpush1.msra.mxu0 0.0
  %605 = vmatprep.subr.mxu0 0.0
  %606 = vmatpush1.msra.mxu0 0.0
  %607 = vmatprep.subr.mxu0 0.0
  %608 = vmatpush1.msra.mxu0 0.0
  %609 = vmatprep.subr.mxu0 0.0
  %610 = vmatpush1.msra.mxu0 0.0
  %611 = vmatprep.subr.mxu0 0.0
  %612 = vmatpush1.msra.mxu0 0.0
  %613 = vmatprep.subr.mxu0 0.0
  %614 = vmatpush1.msra.mxu0 0.0
  %615 = vmatprep.subr.mxu0 0.0
  %616 = vmatpush1.msra.mxu0 0.0
  %617 = vmatprep.subr.mxu0 0.0
  %618 = vmatpush1.msra.mxu0 0.0
  %619 = vmatprep.subr.mxu0 0.0
  %620 = vmatpush1.msra.mxu0 0.0
  %621 = vmatprep.subr.mxu0 0.0
  %622 = vmatpush1.msra.mxu0 0.0
  %623 = vmatprep.mubr.f32.mxu0 0.0
  %624 = vmatmul.mubr.f32.gmra.mrb[0].mxu0 %v541
  %v625 = vpop.f32.mrb[0].mxu0
  %v626 = vadd.f32 0.0, %v625
  %v627 = vpop.f32.mrb[0].mxu0
  %628 = vdwg.mxu0
  %v629 = vadd.f32 %v538, %v626
  %v630 = vadd.f32 %v629, %v354
  %v631 = vld [vmem:[%s4] sm:$0x3f]
  %v632 = vadd.f32 %v630, %v631
  %633 = vst [vmem:[%s5] sm:$0x3] %v632
  %634 = vst [vmem:[%s5 - $0x2] sm:$0x30] %v632
  // Predicated region
  $region22: #{generative_encoder_fwd.7} parent=0 // pred_check
    _
  $region23: #{generative_encoder_fwd.7} parent=0 // pred_check_branch
    %636 = sbr.rel (0) target = $region25
  $region24: #{generative_encoder_fwd.7} parent=0 // pred_region
    _
  $region25: #{generative_encoder_fwd.7} parent=0 // pred_fallthru
    _
  // Predicated region
  $region26: #{generative_encoder_fwd.7} parent=0 // pred_check
    _
  $region27: #{generative_encoder_fwd.7} parent=0 // pred_check_branch
    %638 = sbr.rel (0) target = $region29
  $region28: #{generative_encoder_fwd.7} parent=0 // pred_region
    _
  $region29: #{generative_encoder_fwd.7} parent=0 // pred_fallthru
    _

</llo_original>
